<compile_context>
chip_gen: v6e
topology: v6e:2x2x1
jax: 0.10.0
libtpu: 0.0.40
codegen_flags: <defaults>
</compile_context>

<pallas_src>
import functools
import math

import jax
import jax.numpy as jnp
from jax.experimental import pallas as pl
from jax.experimental.pallas import tpu as pltpu

# ----------------------------- model config ---------------------------------
CONTEXT_LENGTH = 8
PREDICTION_LENGTH = 4
NUM_FEAT_DYNAMIC_REAL = 2
NUM_FEAT_STATIC_REAL = 1
NUM_FEAT_STATIC_CAT = 1
CARDINALITY = [5]
EMBEDDING_DIM = [3]
NUM_LAYERS = 2                     # kernels below hard-code 2 layers
HIDDEN_SIZE = 32
LAGS_SEQ = [1, 2, 4]
NUM_PARALLEL_SAMPLES = 4
BATCH = 2

PAST_LENGTH = CONTEXT_LENGTH + max(LAGS_SEQ)          # 12
NUM_FEATURES = sum(EMBEDDING_DIM) + NUM_FEAT_DYNAMIC_REAL + NUM_FEAT_STATIC_REAL + 1
RNN_INPUT_SIZE = len(LAGS_SEQ) + NUM_FEATURES          # 10
NUM_DISTR_ARGS = 3                                      # StudentT: (df, loc, scale)

# TODO(synk): nn.LSTM dropout (0.1) only applies in training mode; forward()
# here is inference-time sampling, so dropout is a no-op and is omitted.


# ----------------------------- shared helpers --------------------------------
def _full_spec(shape):
    """Full-array VMEM-resident block (grid=(1,))."""
    n = len(shape)
    return pl.BlockSpec(shape, lambda i, _n=n: (0,) * _n)


def _lstm_gates(gates, c_prev, H):
    # PyTorch gate order: i, f, g, o
    i = jax.nn.sigmoid(gates[:, 0 * H:1 * H])
    f = jax.nn.sigmoid(gates[:, 1 * H:2 * H])
    g = jnp.tanh(gates[:, 2 * H:3 * H])
    o = jax.nn.sigmoid(gates[:, 3 * H:4 * H])
    c_new = f * c_prev + i * g
    h_new = o * jnp.tanh(c_new)
    return h_new, c_new


def _softplus(x):
    # numerically-stable softplus built from exp/log only (safe Mosaic lowering)
    return jnp.maximum(x, 0.0) + jnp.log(1.0 + jnp.exp(-jnp.abs(x)))


def _studentt_base_sample(raw, log_u1, cos_u2):
    """StudentT(df, loc, scale) draw via Bailey's polar method.

    raw: (N, 3) pre-domain-map columns [df, loc, scale].
    log_u1 / cos_u2: precomputed log(U1), cos(2*pi*U2) for U1,U2 ~ Uniform(0,1).
    t = sqrt(df * (U1**(-2/df) - 1)) * cos(2*pi*U2)  ~  StudentT(df)
    """
    df = 2.0 + _softplus(raw[:, 0:1])
    loc = raw[:, 1:2]
    sp = _softplus(raw[:, 2:3])
    r = jnp.sqrt(df * (jnp.exp((-2.0 / df) * log_u1) - 1.0))
    return loc + sp * r * cos_u2


# ----------------------------- encode kernel ---------------------------------
def _encode_kernel(x2d_ref, wih0_ref, whh0_ref, b0_ref, w1c_ref, b1_ref,
                   wp_ref, bp_ref,
                   raw_ref, h0_ref, c0_ref, h1_ref, c1_ref,
                   *, batch, context_length):
    B, T = batch, context_length
    H = h0_ref.shape[-1]

    # Layer-0 input projection hoisted out of the recurrence: one matmul for all T.
    pre0 = (jnp.dot(x2d_ref[...], wih0_ref[...], preferred_element_type=jnp.float32)
            + b0_ref[...])                                   # (T*B, 4H)
    whh0 = whh0_ref[...]
    w1c = w1c_ref[...]                                       # fused [wih1; whh1]
    b1 = b1_ref[...]

    zeros = jnp.zeros((B, H), jnp.float32)
    h0, c0, h1, c1 = zeros, zeros, zeros, zeros
    for t in range(T):                                       # static unroll, state in vregs
        g0 = pre0[t * B:(t + 1) * B, :] + jnp.dot(
            h0, whh0, preferred_element_type=jnp.float32)
        h0, c0 = _lstm_gates(g0, c0, H)
        g1 = jnp.dot(jnp.concatenate([h0, h1], axis=1), w1c,
                     preferred_element_type=jnp.float32) + b1
        h1, c1 = _lstm_gates(g1, c1, H)

    # forward() only consumes the trailing-step distribution params + final state.
    raw_ref[...] = (jnp.dot(h1, wp_ref[...], preferred_element_type=jnp.float32)
                    + bp_ref[...])
    h0_ref[...] = h0
    c0_ref[...] = c0
    h1_ref[...] = h1
    c1_ref[...] = c1


def lstm2_encode(x2d, batch, context_length, lp):
    """x2d: (T*B, D) time-major-flattened rnn input."""
    TB, D = x2d.shape
    H, H4 = HIDDEN_SIZE, 4 * HIDDEN_SIZE
    kernel = functools.partial(_encode_kernel, batch=batch,
                               context_length=context_length)
    out_shape = (
        jax.ShapeDtypeStruct((batch, NUM_DISTR_ARGS), jnp.float32),
        jax.ShapeDtypeStruct((batch, H), jnp.float32),
        jax.ShapeDtypeStruct((batch, H), jnp.float32),
        jax.ShapeDtypeStruct((batch, H), jnp.float32),
        jax.ShapeDtypeStruct((batch, H), jnp.float32),
    )
    in_specs = [
        _full_spec((TB, D)),
        _full_spec((D, H4)), _full_spec((H, H4)), _full_spec((1, H4)),
        _full_spec((2 * H, H4)), _full_spec((1, H4)),
        _full_spec((H, NUM_DISTR_ARGS)), _full_spec((1, NUM_DISTR_ARGS)),
    ]
    out_specs = [
        _full_spec((batch, NUM_DISTR_ARGS)),
        _full_spec((batch, H)), _full_spec((batch, H)),
        _full_spec((batch, H)), _full_spec((batch, H)),
    ]
    return pl.pallas_call(
        kernel,
        out_shape=out_shape,
        grid_spec=pltpu.PrefetchScalarGridSpec(
            num_scalar_prefetch=0, grid=(1,),
            in_specs=in_specs, out_specs=out_specs),
        compiler_params=pltpu.CompilerParams(dimension_semantics=("arbitrary",)),
    )(x2d, lp["wih0"], lp["whh0"], lp["b0"], lp["w1c"], lp["b1"],
      lp["wp"], lp["bp"])


# ----------------------------- decode kernel ---------------------------------
def _decode_kernel(h0_ref, c0_ref, h1_ref, c1_ref, enc_raw_ref,
                   past_ref, static_ref, tf_ref, scale_ref, lu1_ref, cu2_ref,
                   wih0_ref, whh0_ref, b0_ref, w1c_ref, b1_ref, wp_ref, bp_ref,
                   samples_ref, *, prediction_length, lags_seq):
    H = h0_ref.shape[-1]
    past_len = past_ref.shape[-1]
    P = prediction_length

    h0 = h0_ref[...]
    c0 = c0_ref[...]
    h1 = h1_ref[...]
    c1 = c1_ref[...]
    wih0 = wih0_ref[...]
    whh0 = whh0_ref[...]
    b0 = b0_ref[...]
    w1c = w1c_ref[...]
    b1 = b1_ref[...]
    wp = wp_ref[...]
    bp = bp_ref[...]
    scale = scale_ref[...]          # (BS, 1) AffineTransformed scale
    static_feat = static_ref[...]   # (BS, F_static)

    # First sample uses the encode trailing-step params (torch: trailing_n=1).
    base = _studentt_base_sample(enc_raw_ref[...], lu1_ref[:, 0:1], cu2_ref[:, 0:1])
    bases = [base]                  # scaled-space samples (RNN feedback)
    outs = [base * scale]           # original-space samples (model output)

    for k in range(1, P):           # static unroll of the autoregressive loop
        lag_vals = []
        for lag in lags_seq:
            pos = k - lag - 1       # index into the generated-sample history
            if pos >= 0:
                lag_vals.append(bases[pos])
            else:
                idx = past_len + pos
                lag_vals.append(past_ref[:, idx:idx + 1])
        x = jnp.concatenate(lag_vals + [static_feat, tf_ref[k]], axis=1)  # (BS, D)

        g0 = (jnp.dot(x, wih0, preferred_element_type=jnp.float32)
              + jnp.dot(h0, whh0, preferred_element_type=jnp.float32) + b0)
        h0, c0 = _lstm_gates(g0, c0, H)
        g1 = jnp.dot(jnp.concatenate([h0, h1], axis=1), w1c,
                     preferred_element_type=jnp.float32) + b1
        h1, c1 = _lstm_gates(g1, c1, H)

        raw = jnp.dot(h1, wp, preferred_element_type=jnp.float32) + bp
        base = _studentt_base_sample(raw, lu1_ref[:, k:k + 1], cu2_ref[:, k:k + 1])
        bases.append(base)
        outs.append(base * scale)

    samples_ref[...] = jnp.concatenate(outs, axis=1)          # (BS, P), single store


def lstm2_decode(state, enc_raw, past_scaled, static_feat, time_feat_pbsf,
                 scale, log_u1, cos_u2, lp):
    h0, c0, h1, c1 = state
    BS, H = h0.shape
    H4 = 4 * H
    P, _, F_dyn = time_feat_pbsf.shape
    F_static = static_feat.shape[1]
    past_len = past_scaled.shape[1]
    D = RNN_INPUT_SIZE

    kernel = functools.partial(_decode_kernel, prediction_length=P,
                               lags_seq=tuple(LAGS_SEQ))
    in_specs = [
        _full_spec((BS, H)), _full_spec((BS, H)),
        _full_spec((BS, H)), _full_spec((BS, H)),
        _full_spec((BS, NUM_DISTR_ARGS)),
        _full_spec((BS, past_len)),
        _full_spec((BS, F_static)),
        _full_spec((P, BS, F_dyn)),
        _full_spec((BS, 1)),
        _full_spec((BS, P)),
        _full_spec((BS, P)),
        _full_spec((D, H4)), _full_spec((H, H4)), _full_spec((1, H4)),
        _full_spec((2 * H, H4)), _full_spec((1, H4)),
        _full_spec((H, NUM_DISTR_ARGS)), _full_spec((1, NUM_DISTR_ARGS)),
    ]
    return pl.pallas_call(
        kernel,
        out_shape=jax.ShapeDtypeStruct((BS, P), jnp.float32),
        grid_spec=pltpu.PrefetchScalarGridSpec(
            num_scalar_prefetch=0, grid=(1,),
            in_specs=in_specs, out_specs=_full_spec((BS, P))),
        compiler_params=pltpu.CompilerParams(dimension_semantics=("arbitrary",)),
    )(h0, c0, h1, c1, enc_raw, past_scaled, static_feat, time_feat_pbsf, scale,
      log_u1, cos_u2,
      lp["wih0"], lp["whh0"], lp["b0"], lp["w1c"], lp["b1"], lp["wp"], lp["bp"])


# ------------------------------ JAX glue -------------------------------------
def mean_scaler(data, weights, minimum_scale=1e-10):
    """GluonTS MeanScaler(dim=1, keepdim=True) semantics."""
    total_weight = weights.sum(axis=1)                       # (B,)
    weighted_sum = (jnp.abs(data) * weights).sum(axis=1)     # (B,)
    total_observed = total_weight.sum(axis=0)
    default_scale = weighted_sum.sum(axis=0) / jnp.maximum(total_observed, 1.0)
    scale = weighted_sum / jnp.maximum(total_weight, 1.0)
    scale = jnp.maximum(minimum_scale,
                        jnp.where(weighted_sum > 0, scale, default_scale))
    return data / scale[:, None], scale[:, None]             # keepdim -> (B, 1)


def lagged_sequence_values(indices, prior_sequence, sequence):
    full_seq = jnp.concatenate([prior_sequence, sequence], axis=1)
    T = sequence.shape[1]
    L = full_seq.shape[1]
    vals = []
    for lag in indices:
        vals.append(full_seq[:, L - lag - T:L - lag])
    return jnp.stack(vals, axis=-1)                          # (B, T, len(indices))


def unroll_lagged_rnn(params, feat_static_cat, feat_static_real, past_time_feat,
                      past_target, past_observed_values, future_time_feat=None):
    """Encode path.  Returns (trailing raw distr params, scale, static_feat, state)."""
    B = past_target.shape[0]
    context = past_target[:, -CONTEXT_LENGTH:]
    observed_context = past_observed_values[:, -CONTEXT_LENGTH:]
    _, scale = mean_scaler(context, observed_context)
    prior_input = past_target[:, :-CONTEXT_LENGTH] / scale
    inp = context / scale

    embedded_cat = params["emb"][feat_static_cat[:, 0]]      # (B, emb_dim)
    static_feat = jnp.concatenate(
        [embedded_cat, feat_static_real, jnp.log(scale)], axis=1)  # (B, F_static)
    expanded_static = jnp.broadcast_to(
        static_feat[:, None, :], (B, inp.shape[1], static_feat.shape[-1]))

    if future_time_feat is not None:
        time_feat = jnp.concatenate(
            [past_time_feat[:, -CONTEXT_LENGTH + 1:], future_time_feat], axis=1)
    else:
        time_feat = past_time_feat[:, -CONTEXT_LENGTH + 1:]

    features = jnp.concatenate([expanded_static, time_feat], axis=-1)
    lags = lagged_sequence_values(LAGS_SEQ, prior_input, inp)
    rnn_input = jnp.concatenate([lags, features], axis=-1)   # (B, T, D)

    T = rnn_input.shape[1]
    x2d = jnp.transpose(rnn_input, (1, 0, 2)).reshape(T * B, -1).astype(jnp.float32)
    raw_last, h0, c0, h1, c1 = lstm2_encode(x2d, B, T, params["lstm"])
    return raw_last, scale, static_feat, (h0, c0, h1, c1)


@functools.partial(jax.jit, static_argnames=("num_parallel_samples",))
def deepar_forward(params, feat_static_cat, feat_static_real, past_time_feat,
                   past_target, past_observed_values, future_time_feat, key,
                   num_parallel_samples=NUM_PARALLEL_SAMPLES):
    raw_last, scale, static_feat, state = unroll_lagged_rnn(
        params, feat_static_cat, feat_static_real, past_time_feat, past_target,
        past_observed_values, future_time_feat[:, :1])

    S = num_parallel_samples
    rep = lambda x: jnp.repeat(x, S, axis=0)                 # repeat_interleave dim=0
    repeated_scale = rep(scale)                              # (B*S, 1)
    repeated_static_feat = rep(static_feat)                  # (B*S, F_static)
    repeated_past_scaled = rep(past_target) / repeated_scale  # (B*S, past_len)
    repeated_time_feat = jnp.transpose(rep(future_time_feat), (1, 0, 2))  # (P,B*S,F)
    repeated_state = tuple(rep(s) for s in state)            # each (B*S, H)
    repeated_raw = rep(raw_last)                             # (B*S, 3)

    BS = repeated_scale.shape[0]
    P = PREDICTION_LENGTH
    k1, k2 = jax.random.split(key)
    u1 = jax.random.uniform(k1, (BS, P), jnp.float32, minval=1e-7, maxval=1.0)
    u2 = jax.random.uniform(k2, (BS, P), jnp.float32)
    log_u1 = jnp.log(u1)                                     # transcendentals hoisted
    cos_u2 = jnp.cos(2.0 * math.pi * u2)

    samples = lstm2_decode(repeated_state, repeated_raw, repeated_past_scaled,
                           repeated_static_feat, repeated_time_feat,
                           repeated_scale, log_u1, cos_u2, params["lstm"])
    return samples.reshape(-1, S, P)


# ------------------------------ parameters -----------------------------------
def init_params(key):
    H, D, H4 = HIDDEN_SIZE, RNN_INPUT_SIZE, 4 * HIDDEN_SIZE
    keys = jax.random.split(key, 10)
    s = 0.1
    wih1 = s * jax.random.normal(keys[3], (H, H4), jnp.float32)
    whh1 = s * jax.random.normal(keys[4], (H, H4), jnp.float32)
    lstm = {
        "wih0": s * jax.random.normal(keys[0], (D, H4), jnp.float32),
        "whh0": s * jax.random.normal(keys[1], (H, H4), jnp.float32),
        "b0":   s * jax.random.normal(keys[2], (1, H4), jnp.float32),
        # layer-1 input/recurrent weights fused: gates1 = [h0, h1] @ w1c + b1
        "w1c":  jnp.concatenate([wih1, whh1], axis=0),
        "b1":   s * jax.random.normal(keys[5], (1, H4), jnp.float32),
        "wp":   s * jax.random.normal(keys[6], (H, NUM_DISTR_ARGS), jnp.float32),
        "bp":   s * jax.random.normal(keys[7], (1, NUM_DISTR_ARGS), jnp.float32),
    }
    emb = s * jax.random.normal(keys[8], (CARDINALITY[0], EMBEDDING_DIM[0]), jnp.float32)
    return {"lstm": lstm, "emb": emb}


# --------------------------------- main ---------------------------------------
if __name__ == "__main__":
    key = jax.random.PRNGKey(0)
    pkey, dkey, skey = jax.random.split(key, 3)
    params = init_params(pkey)

    dks = jax.random.split(dkey, 6)
    feat_static_cat = jax.random.randint(dks[0], (BATCH, NUM_FEAT_STATIC_CAT), 0,
                                         CARDINALITY[0], dtype=jnp.int32)
    feat_static_real = jax.random.normal(dks[1], (BATCH, NUM_FEAT_STATIC_REAL),
                                         jnp.float32)
    past_time_feat = jax.random.normal(dks[2], (BATCH, PAST_LENGTH,
                                                NUM_FEAT_DYNAMIC_REAL), jnp.float32)
    past_target = jnp.abs(jax.random.normal(dks[3], (BATCH, PAST_LENGTH),
                                            jnp.float32)) + 0.5
    past_observed_values = jnp.ones((BATCH, PAST_LENGTH), jnp.float32)
    future_time_feat = jax.random.normal(dks[4], (BATCH, PREDICTION_LENGTH,
                                                  NUM_FEAT_DYNAMIC_REAL), jnp.float32)

    out = deepar_forward(params, feat_static_cat, feat_static_real, past_time_feat,
                         past_target, past_observed_values, future_time_feat, skey)
    out = jax.block_until_ready(out)
    assert out.shape == (BATCH, NUM_PARALLEL_SAMPLES, PREDICTION_LENGTH), out.shape
    assert bool(jnp.all(jnp.isfinite(out)))
    print("KERNEL_OK")
</pallas_src>

<mosaic_0001>
module attributes {stable_mosaic.version = 11 : i64} {
  func.func @_encode_kernel(%arg0: i32, %arg1: memref<16x10xf32, #tpu.memory_space<vmem>>, %arg2: memref<10x128xf32, #tpu.memory_space<vmem>>, %arg3: memref<32x128xf32, #tpu.memory_space<vmem>>, %arg4: memref<1x128xf32, #tpu.memory_space<vmem>>, %arg5: memref<64x128xf32, #tpu.memory_space<vmem>>, %arg6: memref<1x128xf32, #tpu.memory_space<vmem>>, %arg7: memref<32x3xf32, #tpu.memory_space<vmem>>, %arg8: memref<1x3xf32, #tpu.memory_space<vmem>>, %arg9: memref<2x3xf32, #tpu.memory_space<vmem>>, %arg10: memref<2x32xf32, #tpu.memory_space<vmem>>, %arg11: memref<2x32xf32, #tpu.memory_space<vmem>>, %arg12: memref<2x32xf32, #tpu.memory_space<vmem>>, %arg13: memref<2x32xf32, #tpu.memory_space<vmem>>) attributes {dimension_semantics = [#tpu.dimension_semantics<arbitrary>], iteration_bounds = array<i64: 1>, scalar_prefetch = 0 : i64, scratch_operands = 0 : i64, tpu.core_type = #tpu.core_type<tc>, window_params = [{pipeline_mode = #tpu.pipeline_mode<synchronous>, transform_indices = @transform_0, window_bounds = array<i64: 16, 10>}, {pipeline_mode = #tpu.pipeline_mode<synchronous>, transform_indices = @transform_1, window_bounds = array<i64: 10, 128>}, {pipeline_mode = #tpu.pipeline_mode<synchronous>, transform_indices = @transform_2, window_bounds = array<i64: 32, 128>}, {pipeline_mode = #tpu.pipeline_mode<synchronous>, transform_indices = @transform_3, window_bounds = array<i64: 1, 128>}, {pipeline_mode = #tpu.pipeline_mode<synchronous>, transform_indices = @transform_4, window_bounds = array<i64: 64, 128>}, {pipeline_mode = #tpu.pipeline_mode<synchronous>, transform_indices = @transform_5, window_bounds = array<i64: 1, 128>}, {pipeline_mode = #tpu.pipeline_mode<synchronous>, transform_indices = @transform_6, window_bounds = array<i64: 32, 3>}, {pipeline_mode = #tpu.pipeline_mode<synchronous>, transform_indices = @transform_7, window_bounds = array<i64: 1, 3>}, {pipeline_mode = #tpu.pipeline_mode<synchronous>, transform_indices = @transform_8, window_bounds = array<i64: 2, 3>}, {pipeline_mode = #tpu.pipeline_mode<synchronous>, transform_indices = @transform_9, window_bounds = array<i64: 2, 32>}, {pipeline_mode = #tpu.pipeline_mode<synchronous>, transform_indices = @transform_10, window_bounds = array<i64: 2, 32>}, {pipeline_mode = #tpu.pipeline_mode<synchronous>, transform_indices = @transform_11, window_bounds = array<i64: 2, 32>}, {pipeline_mode = #tpu.pipeline_mode<synchronous>, transform_indices = @transform_12, window_bounds = array<i64: 2, 32>}]} {
    %c0 = arith.constant 0 : index
    %c0_0 = arith.constant 0 : index
    %0 = vector.load %arg1[%c0, %c0_0] : memref<16x10xf32, #tpu.memory_space<vmem>>, vector<16x10xf32>
    %c0_1 = arith.constant 0 : index
    %c0_2 = arith.constant 0 : index
    %1 = vector.load %arg2[%c0_1, %c0_2] : memref<10x128xf32, #tpu.memory_space<vmem>>, vector<10x128xf32>
    %cst = arith.constant dense<0.000000e+00> : vector<16x128xf32>
    %2 = tpu.matmul %0, %1, %cst {dimension_numbers = #tpu.dot_dimension_numbers<[1], [0], [0], [1], [0, 0, 1, 1], [], []>} : vector<16x10xf32>, vector<10x128xf32>, vector<16x128xf32> -> vector<16x128xf32>
    %c0_3 = arith.constant 0 : index
    %c0_4 = arith.constant 0 : index
    %3 = vector.load %arg4[%c0_3, %c0_4] : memref<1x128xf32, #tpu.memory_space<vmem>>, vector<1x128xf32>
    %4 = vector.broadcast %3 : vector<1x128xf32> to vector<16x128xf32>
    %5 = arith.addf %2, %4 : vector<16x128xf32>
    %c0_5 = arith.constant 0 : index
    %c0_6 = arith.constant 0 : index
    %6 = vector.load %arg3[%c0_5, %c0_6] : memref<32x128xf32, #tpu.memory_space<vmem>>, vector<32x128xf32>
    %c0_7 = arith.constant 0 : index
    %c0_8 = arith.constant 0 : index
    %7 = vector.load %arg5[%c0_7, %c0_8] : memref<64x128xf32, #tpu.memory_space<vmem>>, vector<64x128xf32>
    %c0_9 = arith.constant 0 : index
    %c0_10 = arith.constant 0 : index
    %8 = vector.load %arg6[%c0_9, %c0_10] : memref<1x128xf32, #tpu.memory_space<vmem>>, vector<1x128xf32>
    %cst_11 = arith.constant 0.000000e+00 : f32
    %9 = vector.broadcast %cst_11 : f32 to vector<2x32xf32>
    %10 = vector.extract_strided_slice %5 {offsets = [0, 0], sizes = [2, 128], strides = [1, 1]} : vector<16x128xf32> to vector<2x128xf32>
    %cst_12 = arith.constant dense<0.000000e+00> : vector<2x128xf32>
    %11 = tpu.matmul %9, %6, %cst_12 {dimension_numbers = #tpu.dot_dimension_numbers<[1], [0], [0], [1], [0, 0, 1, 1], [], []>} : vector<2x32xf32>, vector<32x128xf32>, vector<2x128xf32> -> vector<2x128xf32>
    %12 = arith.addf %10, %11 : vector<2x128xf32>
    %13 = vector.extract_strided_slice %12 {offsets = [0, 0], sizes = [2, 32], strides = [1, 1]} : vector<2x128xf32> to vector<2x32xf32>
    %14 = arith.negf %13 : vector<2x32xf32>
    %15 = math.exp %14 : vector<2x32xf32>
    %cst_13 = arith.constant 1.000000e+00 : f32
    %16 = vector.broadcast %cst_13 : f32 to vector<2x32xf32>
    %17 = arith.addf %16, %15 : vector<2x32xf32>
    %18 = arith.divf %16, %17 : vector<2x32xf32>
    %19 = vector.extract_strided_slice %12 {offsets = [0, 32], sizes = [2, 32], strides = [1, 1]} : vector<2x128xf32> to vector<2x32xf32>
    %20 = arith.negf %19 : vector<2x32xf32>
    %21 = math.exp %20 : vector<2x32xf32>
    %cst_14 = arith.constant 1.000000e+00 : f32
    %22 = vector.broadcast %cst_14 : f32 to vector<2x32xf32>
    %23 = arith.addf %22, %21 : vector<2x32xf32>
    %24 = arith.divf %22, %23 : vector<2x32xf32>
    %25 = vector.extract_strided_slice %12 {offsets = [0, 64], sizes = [2, 32], strides = [1, 1]} : vector<2x128xf32> to vector<2x32xf32>
    %26 = math.tanh %25 : vector<2x32xf32>
    %27 = vector.extract_strided_slice %12 {offsets = [0, 96], sizes = [2, 32], strides = [1, 1]} : vector<2x128xf32> to vector<2x32xf32>
    %28 = arith.negf %27 : vector<2x32xf32>
    %29 = math.exp %28 : vector<2x32xf32>
    %cst_15 = arith.constant 1.000000e+00 : f32
    %30 = vector.broadcast %cst_15 : f32 to vector<2x32xf32>
    %31 = arith.addf %30, %29 : vector<2x32xf32>
    %32 = arith.divf %30, %31 : vector<2x32xf32>
    %33 = arith.mulf %24, %9 : vector<2x32xf32>
    %34 = arith.mulf %18, %26 : vector<2x32xf32>
    %35 = arith.addf %33, %34 : vector<2x32xf32>
    %36 = math.tanh %35 : vector<2x32xf32>
    %37 = arith.mulf %32, %36 : vector<2x32xf32>
    %38 = tpu.concatenate %37, %9 in 1 : vector<2x32xf32>, vector<2x32xf32> -> vector<2x64xf32>
    %cst_16 = arith.constant dense<0.000000e+00> : vector<2x128xf32>
    %39 = tpu.matmul %38, %7, %cst_16 {dimension_numbers = #tpu.dot_dimension_numbers<[1], [0], [0], [1], [0, 0, 1, 1], [], []>} : vector<2x64xf32>, vector<64x128xf32>, vector<2x128xf32> -> vector<2x128xf32>
    %40 = vector.broadcast %8 : vector<1x128xf32> to vector<2x128xf32>
    %41 = arith.addf %39, %40 : vector<2x128xf32>
    %42 = vector.extract_strided_slice %41 {offsets = [0, 0], sizes = [2, 32], strides = [1, 1]} : vector<2x128xf32> to vector<2x32xf32>
    %43 = arith.negf %42 : vector<2x32xf32>
    %44 = math.exp %43 : vector<2x32xf32>
    %cst_17 = arith.constant 1.000000e+00 : f32
    %45 = vector.broadcast %cst_17 : f32 to vector<2x32xf32>
    %46 = arith.addf %45, %44 : vector<2x32xf32>
    %47 = arith.divf %45, %46 : vector<2x32xf32>
    %48 = vector.extract_strided_slice %41 {offsets = [0, 32], sizes = [2, 32], strides = [1, 1]} : vector<2x128xf32> to vector<2x32xf32>
    %49 = arith.negf %48 : vector<2x32xf32>
    %50 = math.exp %49 : vector<2x32xf32>
    %cst_18 = arith.constant 1.000000e+00 : f32
    %51 = vector.broadcast %cst_18 : f32 to vector<2x32xf32>
    %52 = arith.addf %51, %50 : vector<2x32xf32>
    %53 = arith.divf %51, %52 : vector<2x32xf32>
    %54 = vector.extract_strided_slice %41 {offsets = [0, 64], sizes = [2, 32], strides = [1, 1]} : vector<2x128xf32> to vector<2x32xf32>
    %55 = math.tanh %54 : vector<2x32xf32>
    %56 = vector.extract_strided_slice %41 {offsets = [0, 96], sizes = [2, 32], strides = [1, 1]} : vector<2x128xf32> to vector<2x32xf32>
    %57 = arith.negf %56 : vector<2x32xf32>
    %58 = math.exp %57 : vector<2x32xf32>
    %cst_19 = arith.constant 1.000000e+00 : f32
    %59 = vector.broadcast %cst_19 : f32 to vector<2x32xf32>
    %60 = arith.addf %59, %58 : vector<2x32xf32>
    %61 = arith.divf %59, %60 : vector<2x32xf32>
    %62 = arith.mulf %53, %9 : vector<2x32xf32>
    %63 = arith.mulf %47, %55 : vector<2x32xf32>
    %64 = arith.addf %62, %63 : vector<2x32xf32>
    %65 = math.tanh %64 : vector<2x32xf32>
    %66 = arith.mulf %61, %65 : vector<2x32xf32>
    %67 = vector.extract_strided_slice %5 {offsets = [2, 0], sizes = [2, 128], strides = [1, 1]} : vector<16x128xf32> to vector<2x128xf32>
    %cst_20 = arith.constant dense<0.000000e+00> : vector<2x128xf32>
    %68 = tpu.matmul %37, %6, %cst_20 {dimension_numbers = #tpu.dot_dimension_numbers<[1], [0], [0], [1], [0, 0, 1, 1], [], []>} : vector<2x32xf32>, vector<32x128xf32>, vector<2x128xf32> -> vector<2x128xf32>
    %69 = arith.addf %67, %68 : vector<2x128xf32>
    %70 = vector.extract_strided_slice %69 {offsets = [0, 0], sizes = [2, 32], strides = [1, 1]} : vector<2x128xf32> to vector<2x32xf32>
    %71 = arith.negf %70 : vector<2x32xf32>
    %72 = math.exp %71 : vector<2x32xf32>
    %cst_21 = arith.constant 1.000000e+00 : f32
    %73 = vector.broadcast %cst_21 : f32 to vector<2x32xf32>
    %74 = arith.addf %73, %72 : vector<2x32xf32>
    %75 = arith.divf %73, %74 : vector<2x32xf32>
    %76 = vector.extract_strided_slice %69 {offsets = [0, 32], sizes = [2, 32], strides = [1, 1]} : vector<2x128xf32> to vector<2x32xf32>
    %77 = arith.negf %76 : vector<2x32xf32>
    %78 = math.exp %77 : vector<2x32xf32>
    %cst_22 = arith.constant 1.000000e+00 : f32
    %79 = vector.broadcast %cst_22 : f32 to vector<2x32xf32>
    %80 = arith.addf %79, %78 : vector<2x32xf32>
    %81 = arith.divf %79, %80 : vector<2x32xf32>
    %82 = vector.extract_strided_slice %69 {offsets = [0, 64], sizes = [2, 32], strides = [1, 1]} : vector<2x128xf32> to vector<2x32xf32>
    %83 = math.tanh %82 : vector<2x32xf32>
    %84 = vector.extract_strided_slice %69 {offsets = [0, 96], sizes = [2, 32], strides = [1, 1]} : vector<2x128xf32> to vector<2x32xf32>
    %85 = arith.negf %84 : vector<2x32xf32>
    %86 = math.exp %85 : vector<2x32xf32>
    %cst_23 = arith.constant 1.000000e+00 : f32
    %87 = vector.broadcast %cst_23 : f32 to vector<2x32xf32>
    %88 = arith.addf %87, %86 : vector<2x32xf32>
    %89 = arith.divf %87, %88 : vector<2x32xf32>
    %90 = arith.mulf %81, %35 : vector<2x32xf32>
    %91 = arith.mulf %75, %83 : vector<2x32xf32>
    %92 = arith.addf %90, %91 : vector<2x32xf32>
    %93 = math.tanh %92 : vector<2x32xf32>
    %94 = arith.mulf %89, %93 : vector<2x32xf32>
    %95 = tpu.concatenate %94, %66 in 1 : vector<2x32xf32>, vector<2x32xf32> -> vector<2x64xf32>
    %cst_24 = arith.constant dense<0.000000e+00> : vector<2x128xf32>
    %96 = tpu.matmul %95, %7, %cst_24 {dimension_numbers = #tpu.dot_dimension_numbers<[1], [0], [0], [1], [0, 0, 1, 1], [], []>} : vector<2x64xf32>, vector<64x128xf32>, vector<2x128xf32> -> vector<2x128xf32>
    %97 = vector.broadcast %8 : vector<1x128xf32> to vector<2x128xf32>
    %98 = arith.addf %96, %97 : vector<2x128xf32>
    %99 = vector.extract_strided_slice %98 {offsets = [0, 0], sizes = [2, 32], strides = [1, 1]} : vector<2x128xf32> to vector<2x32xf32>
    %100 = arith.negf %99 : vector<2x32xf32>
    %101 = math.exp %100 : vector<2x32xf32>
    %cst_25 = arith.constant 1.000000e+00 : f32
    %102 = vector.broadcast %cst_25 : f32 to vector<2x32xf32>
    %103 = arith.addf %102, %101 : vector<2x32xf32>
    %104 = arith.divf %102, %103 : vector<2x32xf32>
    %105 = vector.extract_strided_slice %98 {offsets = [0, 32], sizes = [2, 32], strides = [1, 1]} : vector<2x128xf32> to vector<2x32xf32>
    %106 = arith.negf %105 : vector<2x32xf32>
    %107 = math.exp %106 : vector<2x32xf32>
    %cst_26 = arith.constant 1.000000e+00 : f32
    %108 = vector.broadcast %cst_26 : f32 to vector<2x32xf32>
    %109 = arith.addf %108, %107 : vector<2x32xf32>
    %110 = arith.divf %108, %109 : vector<2x32xf32>
    %111 = vector.extract_strided_slice %98 {offsets = [0, 64], sizes = [2, 32], strides = [1, 1]} : vector<2x128xf32> to vector<2x32xf32>
    %112 = math.tanh %111 : vector<2x32xf32>
    %113 = vector.extract_strided_slice %98 {offsets = [0, 96], sizes = [2, 32], strides = [1, 1]} : vector<2x128xf32> to vector<2x32xf32>
    %114 = arith.negf %113 : vector<2x32xf32>
    %115 = math.exp %114 : vector<2x32xf32>
    %cst_27 = arith.constant 1.000000e+00 : f32
    %116 = vector.broadcast %cst_27 : f32 to vector<2x32xf32>
    %117 = arith.addf %116, %115 : vector<2x32xf32>
    %118 = arith.divf %116, %117 : vector<2x32xf32>
    %119 = arith.mulf %110, %64 : vector<2x32xf32>
    %120 = arith.mulf %104, %112 : vector<2x32xf32>
    %121 = arith.addf %119, %120 : vector<2x32xf32>
    %122 = math.tanh %121 : vector<2x32xf32>
    %123 = arith.mulf %118, %122 : vector<2x32xf32>
    %124 = vector.extract_strided_slice %5 {offsets = [4, 0], sizes = [2, 128], strides = [1, 1]} : vector<16x128xf32> to vector<2x128xf32>
    %cst_28 = arith.constant dense<0.000000e+00> : vector<2x128xf32>
    %125 = tpu.matmul %94, %6, %cst_28 {dimension_numbers = #tpu.dot_dimension_numbers<[1], [0], [0], [1], [0, 0, 1, 1], [], []>} : vector<2x32xf32>, vector<32x128xf32>, vector<2x128xf32> -> vector<2x128xf32>
    %126 = arith.addf %124, %125 : vector<2x128xf32>
    %127 = vector.extract_strided_slice %126 {offsets = [0, 0], sizes = [2, 32], strides = [1, 1]} : vector<2x128xf32> to vector<2x32xf32>
    %128 = arith.negf %127 : vector<2x32xf32>
    %129 = math.exp %128 : vector<2x32xf32>
    %cst_29 = arith.constant 1.000000e+00 : f32
    %130 = vector.broadcast %cst_29 : f32 to vector<2x32xf32>
    %131 = arith.addf %130, %129 : vector<2x32xf32>
    %132 = arith.divf %130, %131 : vector<2x32xf32>
    %133 = vector.extract_strided_slice %126 {offsets = [0, 32], sizes = [2, 32], strides = [1, 1]} : vector<2x128xf32> to vector<2x32xf32>
    %134 = arith.negf %133 : vector<2x32xf32>
    %135 = math.exp %134 : vector<2x32xf32>
    %cst_30 = arith.constant 1.000000e+00 : f32
    %136 = vector.broadcast %cst_30 : f32 to vector<2x32xf32>
    %137 = arith.addf %136, %135 : vector<2x32xf32>
    %138 = arith.divf %136, %137 : vector<2x32xf32>
    %139 = vector.extract_strided_slice %126 {offsets = [0, 64], sizes = [2, 32], strides = [1, 1]} : vector<2x128xf32> to vector<2x32xf32>
    %140 = math.tanh %139 : vector<2x32xf32>
    %141 = vector.extract_strided_slice %126 {offsets = [0, 96], sizes = [2, 32], strides = [1, 1]} : vector<2x128xf32> to vector<2x32xf32>
    %142 = arith.negf %141 : vector<2x32xf32>
    %143 = math.exp %142 : vector<2x32xf32>
    %cst_31 = arith.constant 1.000000e+00 : f32
    %144 = vector.broadcast %cst_31 : f32 to vector<2x32xf32>
    %145 = arith.addf %144, %143 : vector<2x32xf32>
    %146 = arith.divf %144, %145 : vector<2x32xf32>
    %147 = arith.mulf %138, %92 : vector<2x32xf32>
    %148 = arith.mulf %132, %140 : vector<2x32xf32>
    %149 = arith.addf %147, %148 : vector<2x32xf32>
    %150 = math.tanh %149 : vector<2x32xf32>
    %151 = arith.mulf %146, %150 : vector<2x32xf32>
    %152 = tpu.concatenate %151, %123 in 1 : vector<2x32xf32>, vector<2x32xf32> -> vector<2x64xf32>
    %cst_32 = arith.constant dense<0.000000e+00> : vector<2x128xf32>
    %153 = tpu.matmul %152, %7, %cst_32 {dimension_numbers = #tpu.dot_dimension_numbers<[1], [0], [0], [1], [0, 0, 1, 1], [], []>} : vector<2x64xf32>, vector<64x128xf32>, vector<2x128xf32> -> vector<2x128xf32>
    %154 = vector.broadcast %8 : vector<1x128xf32> to vector<2x128xf32>
    %155 = arith.addf %153, %154 : vector<2x128xf32>
    %156 = vector.extract_strided_slice %155 {offsets = [0, 0], sizes = [2, 32], strides = [1, 1]} : vector<2x128xf32> to vector<2x32xf32>
    %157 = arith.negf %156 : vector<2x32xf32>
    %158 = math.exp %157 : vector<2x32xf32>
    %cst_33 = arith.constant 1.000000e+00 : f32
    %159 = vector.broadcast %cst_33 : f32 to vector<2x32xf32>
    %160 = arith.addf %159, %158 : vector<2x32xf32>
    %161 = arith.divf %159, %160 : vector<2x32xf32>
    %162 = vector.extract_strided_slice %155 {offsets = [0, 32], sizes = [2, 32], strides = [1, 1]} : vector<2x128xf32> to vector<2x32xf32>
    %163 = arith.negf %162 : vector<2x32xf32>
    %164 = math.exp %163 : vector<2x32xf32>
    %cst_34 = arith.constant 1.000000e+00 : f32
    %165 = vector.broadcast %cst_34 : f32 to vector<2x32xf32>
    %166 = arith.addf %165, %164 : vector<2x32xf32>
    %167 = arith.divf %165, %166 : vector<2x32xf32>
    %168 = vector.extract_strided_slice %155 {offsets = [0, 64], sizes = [2, 32], strides = [1, 1]} : vector<2x128xf32> to vector<2x32xf32>
    %169 = math.tanh %168 : vector<2x32xf32>
    %170 = vector.extract_strided_slice %155 {offsets = [0, 96], sizes = [2, 32], strides = [1, 1]} : vector<2x128xf32> to vector<2x32xf32>
    %171 = arith.negf %170 : vector<2x32xf32>
    %172 = math.exp %171 : vector<2x32xf32>
    %cst_35 = arith.constant 1.000000e+00 : f32
    %173 = vector.broadcast %cst_35 : f32 to vector<2x32xf32>
    %174 = arith.addf %173, %172 : vector<2x32xf32>
    %175 = arith.divf %173, %174 : vector<2x32xf32>
    %176 = arith.mulf %167, %121 : vector<2x32xf32>
    %177 = arith.mulf %161, %169 : vector<2x32xf32>
    %178 = arith.addf %176, %177 : vector<2x32xf32>
    %179 = math.tanh %178 : vector<2x32xf32>
    %180 = arith.mulf %175, %179 : vector<2x32xf32>
    %181 = vector.extract_strided_slice %5 {offsets = [6, 0], sizes = [2, 128], strides = [1, 1]} : vector<16x128xf32> to vector<2x128xf32>
    %cst_36 = arith.constant dense<0.000000e+00> : vector<2x128xf32>
    %182 = tpu.matmul %151, %6, %cst_36 {dimension_numbers = #tpu.dot_dimension_numbers<[1], [0], [0], [1], [0, 0, 1, 1], [], []>} : vector<2x32xf32>, vector<32x128xf32>, vector<2x128xf32> -> vector<2x128xf32>
    %183 = arith.addf %181, %182 : vector<2x128xf32>
    %184 = vector.extract_strided_slice %183 {offsets = [0, 0], sizes = [2, 32], strides = [1, 1]} : vector<2x128xf32> to vector<2x32xf32>
    %185 = arith.negf %184 : vector<2x32xf32>
    %186 = math.exp %185 : vector<2x32xf32>
    %cst_37 = arith.constant 1.000000e+00 : f32
    %187 = vector.broadcast %cst_37 : f32 to vector<2x32xf32>
    %188 = arith.addf %187, %186 : vector<2x32xf32>
    %189 = arith.divf %187, %188 : vector<2x32xf32>
    %190 = vector.extract_strided_slice %183 {offsets = [0, 32], sizes = [2, 32], strides = [1, 1]} : vector<2x128xf32> to vector<2x32xf32>
    %191 = arith.negf %190 : vector<2x32xf32>
    %192 = math.exp %191 : vector<2x32xf32>
    %cst_38 = arith.constant 1.000000e+00 : f32
    %193 = vector.broadcast %cst_38 : f32 to vector<2x32xf32>
    %194 = arith.addf %193, %192 : vector<2x32xf32>
    %195 = arith.divf %193, %194 : vector<2x32xf32>
    %196 = vector.extract_strided_slice %183 {offsets = [0, 64], sizes = [2, 32], strides = [1, 1]} : vector<2x128xf32> to vector<2x32xf32>
    %197 = math.tanh %196 : vector<2x32xf32>
    %198 = vector.extract_strided_slice %183 {offsets = [0, 96], sizes = [2, 32], strides = [1, 1]} : vector<2x128xf32> to vector<2x32xf32>
    %199 = arith.negf %198 : vector<2x32xf32>
    %200 = math.exp %199 : vector<2x32xf32>
    %cst_39 = arith.constant 1.000000e+00 : f32
    %201 = vector.broadcast %cst_39 : f32 to vector<2x32xf32>
    %202 = arith.addf %201, %200 : vector<2x32xf32>
    %203 = arith.divf %201, %202 : vector<2x32xf32>
    %204 = arith.mulf %195, %149 : vector<2x32xf32>
    %205 = arith.mulf %189, %197 : vector<2x32xf32>
    %206 = arith.addf %204, %205 : vector<2x32xf32>
    %207 = math.tanh %206 : vector<2x32xf32>
    %208 = arith.mulf %203, %207 : vector<2x32xf32>
    %209 = tpu.concatenate %208, %180 in 1 : vector<2x32xf32>, vector<2x32xf32> -> vector<2x64xf32>
    %cst_40 = arith.constant dense<0.000000e+00> : vector<2x128xf32>
    %210 = tpu.matmul %209, %7, %cst_40 {dimension_numbers = #tpu.dot_dimension_numbers<[1], [0], [0], [1], [0, 0, 1, 1], [], []>} : vector<2x64xf32>, vector<64x128xf32>, vector<2x128xf32> -> vector<2x128xf32>
    %211 = vector.broadcast %8 : vector<1x128xf32> to vector<2x128xf32>
    %212 = arith.addf %210, %211 : vector<2x128xf32>
    %213 = vector.extract_strided_slice %212 {offsets = [0, 0], sizes = [2, 32], strides = [1, 1]} : vector<2x128xf32> to vector<2x32xf32>
    %214 = arith.negf %213 : vector<2x32xf32>
    %215 = math.exp %214 : vector<2x32xf32>
    %cst_41 = arith.constant 1.000000e+00 : f32
    %216 = vector.broadcast %cst_41 : f32 to vector<2x32xf32>
    %217 = arith.addf %216, %215 : vector<2x32xf32>
    %218 = arith.divf %216, %217 : vector<2x32xf32>
    %219 = vector.extract_strided_slice %212 {offsets = [0, 32], sizes = [2, 32], strides = [1, 1]} : vector<2x128xf32> to vector<2x32xf32>
    %220 = arith.negf %219 : vector<2x32xf32>
    %221 = math.exp %220 : vector<2x32xf32>
    %cst_42 = arith.constant 1.000000e+00 : f32
    %222 = vector.broadcast %cst_42 : f32 to vector<2x32xf32>
    %223 = arith.addf %222, %221 : vector<2x32xf32>
    %224 = arith.divf %222, %223 : vector<2x32xf32>
    %225 = vector.extract_strided_slice %212 {offsets = [0, 64], sizes = [2, 32], strides = [1, 1]} : vector<2x128xf32> to vector<2x32xf32>
    %226 = math.tanh %225 : vector<2x32xf32>
    %227 = vector.extract_strided_slice %212 {offsets = [0, 96], sizes = [2, 32], strides = [1, 1]} : vector<2x128xf32> to vector<2x32xf32>
    %228 = arith.negf %227 : vector<2x32xf32>
    %229 = math.exp %228 : vector<2x32xf32>
    %cst_43 = arith.constant 1.000000e+00 : f32
    %230 = vector.broadcast %cst_43 : f32 to vector<2x32xf32>
    %231 = arith.addf %230, %229 : vector<2x32xf32>
    %232 = arith.divf %230, %231 : vector<2x32xf32>
    %233 = arith.mulf %224, %178 : vector<2x32xf32>
    %234 = arith.mulf %218, %226 : vector<2x32xf32>
    %235 = arith.addf %233, %234 : vector<2x32xf32>
    %236 = math.tanh %235 : vector<2x32xf32>
    %237 = arith.mulf %232, %236 : vector<2x32xf32>
    %238 = vector.extract_strided_slice %5 {offsets = [8, 0], sizes = [2, 128], strides = [1, 1]} : vector<16x128xf32> to vector<2x128xf32>
    %cst_44 = arith.constant dense<0.000000e+00> : vector<2x128xf32>
    %239 = tpu.matmul %208, %6, %cst_44 {dimension_numbers = #tpu.dot_dimension_numbers<[1], [0], [0], [1], [0, 0, 1, 1], [], []>} : vector<2x32xf32>, vector<32x128xf32>, vector<2x128xf32> -> vector<2x128xf32>
    %240 = arith.addf %238, %239 : vector<2x128xf32>
    %241 = vector.extract_strided_slice %240 {offsets = [0, 0], sizes = [2, 32], strides = [1, 1]} : vector<2x128xf32> to vector<2x32xf32>
    %242 = arith.negf %241 : vector<2x32xf32>
    %243 = math.exp %242 : vector<2x32xf32>
    %cst_45 = arith.constant 1.000000e+00 : f32
    %244 = vector.broadcast %cst_45 : f32 to vector<2x32xf32>
    %245 = arith.addf %244, %243 : vector<2x32xf32>
    %246 = arith.divf %244, %245 : vector<2x32xf32>
    %247 = vector.extract_strided_slice %240 {offsets = [0, 32], sizes = [2, 32], strides = [1, 1]} : vector<2x128xf32> to vector<2x32xf32>
    %248 = arith.negf %247 : vector<2x32xf32>
    %249 = math.exp %248 : vector<2x32xf32>
    %cst_46 = arith.constant 1.000000e+00 : f32
    %250 = vector.broadcast %cst_46 : f32 to vector<2x32xf32>
    %251 = arith.addf %250, %249 : vector<2x32xf32>
    %252 = arith.divf %250, %251 : vector<2x32xf32>
    %253 = vector.extract_strided_slice %240 {offsets = [0, 64], sizes = [2, 32], strides = [1, 1]} : vector<2x128xf32> to vector<2x32xf32>
    %254 = math.tanh %253 : vector<2x32xf32>
    %255 = vector.extract_strided_slice %240 {offsets = [0, 96], sizes = [2, 32], strides = [1, 1]} : vector<2x128xf32> to vector<2x32xf32>
    %256 = arith.negf %255 : vector<2x32xf32>
    %257 = math.exp %256 : vector<2x32xf32>
    %cst_47 = arith.constant 1.000000e+00 : f32
    %258 = vector.broadcast %cst_47 : f32 to vector<2x32xf32>
    %259 = arith.addf %258, %257 : vector<2x32xf32>
    %260 = arith.divf %258, %259 : vector<2x32xf32>
    %261 = arith.mulf %252, %206 : vector<2x32xf32>
    %262 = arith.mulf %246, %254 : vector<2x32xf32>
    %263 = arith.addf %261, %262 : vector<2x32xf32>
    %264 = math.tanh %263 : vector<2x32xf32>
    %265 = arith.mulf %260, %264 : vector<2x32xf32>
    %266 = tpu.concatenate %265, %237 in 1 : vector<2x32xf32>, vector<2x32xf32> -> vector<2x64xf32>
    %cst_48 = arith.constant dense<0.000000e+00> : vector<2x128xf32>
    %267 = tpu.matmul %266, %7, %cst_48 {dimension_numbers = #tpu.dot_dimension_numbers<[1], [0], [0], [1], [0, 0, 1, 1], [], []>} : vector<2x64xf32>, vector<64x128xf32>, vector<2x128xf32> -> vector<2x128xf32>
    %268 = vector.broadcast %8 : vector<1x128xf32> to vector<2x128xf32>
    %269 = arith.addf %267, %268 : vector<2x128xf32>
    %270 = vector.extract_strided_slice %269 {offsets = [0, 0], sizes = [2, 32], strides = [1, 1]} : vector<2x128xf32> to vector<2x32xf32>
    %271 = arith.negf %270 : vector<2x32xf32>
    %272 = math.exp %271 : vector<2x32xf32>
    %cst_49 = arith.constant 1.000000e+00 : f32
    %273 = vector.broadcast %cst_49 : f32 to vector<2x32xf32>
    %274 = arith.addf %273, %272 : vector<2x32xf32>
    %275 = arith.divf %273, %274 : vector<2x32xf32>
    %276 = vector.extract_strided_slice %269 {offsets = [0, 32], sizes = [2, 32], strides = [1, 1]} : vector<2x128xf32> to vector<2x32xf32>
    %277 = arith.negf %276 : vector<2x32xf32>
    %278 = math.exp %277 : vector<2x32xf32>
    %cst_50 = arith.constant 1.000000e+00 : f32
    %279 = vector.broadcast %cst_50 : f32 to vector<2x32xf32>
    %280 = arith.addf %279, %278 : vector<2x32xf32>
    %281 = arith.divf %279, %280 : vector<2x32xf32>
    %282 = vector.extract_strided_slice %269 {offsets = [0, 64], sizes = [2, 32], strides = [1, 1]} : vector<2x128xf32> to vector<2x32xf32>
    %283 = math.tanh %282 : vector<2x32xf32>
    %284 = vector.extract_strided_slice %269 {offsets = [0, 96], sizes = [2, 32], strides = [1, 1]} : vector<2x128xf32> to vector<2x32xf32>
    %285 = arith.negf %284 : vector<2x32xf32>
    %286 = math.exp %285 : vector<2x32xf32>
    %cst_51 = arith.constant 1.000000e+00 : f32
    %287 = vector.broadcast %cst_51 : f32 to vector<2x32xf32>
    %288 = arith.addf %287, %286 : vector<2x32xf32>
    %289 = arith.divf %287, %288 : vector<2x32xf32>
    %290 = arith.mulf %281, %235 : vector<2x32xf32>
    %291 = arith.mulf %275, %283 : vector<2x32xf32>
    %292 = arith.addf %290, %291 : vector<2x32xf32>
    %293 = math.tanh %292 : vector<2x32xf32>
    %294 = arith.mulf %289, %293 : vector<2x32xf32>
    %295 = vector.extract_strided_slice %5 {offsets = [10, 0], sizes = [2, 128], strides = [1, 1]} : vector<16x128xf32> to vector<2x128xf32>
    %cst_52 = arith.constant dense<0.000000e+00> : vector<2x128xf32>
    %296 = tpu.matmul %265, %6, %cst_52 {dimension_numbers = #tpu.dot_dimension_numbers<[1], [0], [0], [1], [0, 0, 1, 1], [], []>} : vector<2x32xf32>, vector<32x128xf32>, vector<2x128xf32> -> vector<2x128xf32>
    %297 = arith.addf %295, %296 : vector<2x128xf32>
    %298 = vector.extract_strided_slice %297 {offsets = [0, 0], sizes = [2, 32], strides = [1, 1]} : vector<2x128xf32> to vector<2x32xf32>
    %299 = arith.negf %298 : vector<2x32xf32>
    %300 = math.exp %299 : vector<2x32xf32>
    %cst_53 = arith.constant 1.000000e+00 : f32
    %301 = vector.broadcast %cst_53 : f32 to vector<2x32xf32>
    %302 = arith.addf %301, %300 : vector<2x32xf32>
    %303 = arith.divf %301, %302 : vector<2x32xf32>
    %304 = vector.extract_strided_slice %297 {offsets = [0, 32], sizes = [2, 32], strides = [1, 1]} : vector<2x128xf32> to vector<2x32xf32>
    %305 = arith.negf %304 : vector<2x32xf32>
    %306 = math.exp %305 : vector<2x32xf32>
    %cst_54 = arith.constant 1.000000e+00 : f32
    %307 = vector.broadcast %cst_54 : f32 to vector<2x32xf32>
    %308 = arith.addf %307, %306 : vector<2x32xf32>
    %309 = arith.divf %307, %308 : vector<2x32xf32>
    %310 = vector.extract_strided_slice %297 {offsets = [0, 64], sizes = [2, 32], strides = [1, 1]} : vector<2x128xf32> to vector<2x32xf32>
    %311 = math.tanh %310 : vector<2x32xf32>
    %312 = vector.extract_strided_slice %297 {offsets = [0, 96], sizes = [2, 32], strides = [1, 1]} : vector<2x128xf32> to vector<2x32xf32>
    %313 = arith.negf %312 : vector<2x32xf32>
    %314 = math.exp %313 : vector<2x32xf32>
    %cst_55 = arith.constant 1.000000e+00 : f32
    %315 = vector.broadcast %cst_55 : f32 to vector<2x32xf32>
    %316 = arith.addf %315, %314 : vector<2x32xf32>
    %317 = arith.divf %315, %316 : vector<2x32xf32>
    %318 = arith.mulf %309, %263 : vector<2x32xf32>
    %319 = arith.mulf %303, %311 : vector<2x32xf32>
    %320 = arith.addf %318, %319 : vector<2x32xf32>
    %321 = math.tanh %320 : vector<2x32xf32>
    %322 = arith.mulf %317, %321 : vector<2x32xf32>
    %323 = tpu.concatenate %322, %294 in 1 : vector<2x32xf32>, vector<2x32xf32> -> vector<2x64xf32>
    %cst_56 = arith.constant dense<0.000000e+00> : vector<2x128xf32>
    %324 = tpu.matmul %323, %7, %cst_56 {dimension_numbers = #tpu.dot_dimension_numbers<[1], [0], [0], [1], [0, 0, 1, 1], [], []>} : vector<2x64xf32>, vector<64x128xf32>, vector<2x128xf32> -> vector<2x128xf32>
    %325 = vector.broadcast %8 : vector<1x128xf32> to vector<2x128xf32>
    %326 = arith.addf %324, %325 : vector<2x128xf32>
    %327 = vector.extract_strided_slice %326 {offsets = [0, 0], sizes = [2, 32], strides = [1, 1]} : vector<2x128xf32> to vector<2x32xf32>
    %328 = arith.negf %327 : vector<2x32xf32>
    %329 = math.exp %328 : vector<2x32xf32>
    %cst_57 = arith.constant 1.000000e+00 : f32
    %330 = vector.broadcast %cst_57 : f32 to vector<2x32xf32>
    %331 = arith.addf %330, %329 : vector<2x32xf32>
    %332 = arith.divf %330, %331 : vector<2x32xf32>
    %333 = vector.extract_strided_slice %326 {offsets = [0, 32], sizes = [2, 32], strides = [1, 1]} : vector<2x128xf32> to vector<2x32xf32>
    %334 = arith.negf %333 : vector<2x32xf32>
    %335 = math.exp %334 : vector<2x32xf32>
    %cst_58 = arith.constant 1.000000e+00 : f32
    %336 = vector.broadcast %cst_58 : f32 to vector<2x32xf32>
    %337 = arith.addf %336, %335 : vector<2x32xf32>
    %338 = arith.divf %336, %337 : vector<2x32xf32>
    %339 = vector.extract_strided_slice %326 {offsets = [0, 64], sizes = [2, 32], strides = [1, 1]} : vector<2x128xf32> to vector<2x32xf32>
    %340 = math.tanh %339 : vector<2x32xf32>
    %341 = vector.extract_strided_slice %326 {offsets = [0, 96], sizes = [2, 32], strides = [1, 1]} : vector<2x128xf32> to vector<2x32xf32>
    %342 = arith.negf %341 : vector<2x32xf32>
    %343 = math.exp %342 : vector<2x32xf32>
    %cst_59 = arith.constant 1.000000e+00 : f32
    %344 = vector.broadcast %cst_59 : f32 to vector<2x32xf32>
    %345 = arith.addf %344, %343 : vector<2x32xf32>
    %346 = arith.divf %344, %345 : vector<2x32xf32>
    %347 = arith.mulf %338, %292 : vector<2x32xf32>
    %348 = arith.mulf %332, %340 : vector<2x32xf32>
    %349 = arith.addf %347, %348 : vector<2x32xf32>
    %350 = math.tanh %349 : vector<2x32xf32>
    %351 = arith.mulf %346, %350 : vector<2x32xf32>
    %352 = vector.extract_strided_slice %5 {offsets = [12, 0], sizes = [2, 128], strides = [1, 1]} : vector<16x128xf32> to vector<2x128xf32>
    %cst_60 = arith.constant dense<0.000000e+00> : vector<2x128xf32>
    %353 = tpu.matmul %322, %6, %cst_60 {dimension_numbers = #tpu.dot_dimension_numbers<[1], [0], [0], [1], [0, 0, 1, 1], [], []>} : vector<2x32xf32>, vector<32x128xf32>, vector<2x128xf32> -> vector<2x128xf32>
    %354 = arith.addf %352, %353 : vector<2x128xf32>
    %355 = vector.extract_strided_slice %354 {offsets = [0, 0], sizes = [2, 32], strides = [1, 1]} : vector<2x128xf32> to vector<2x32xf32>
    %356 = arith.negf %355 : vector<2x32xf32>
    %357 = math.exp %356 : vector<2x32xf32>
    %cst_61 = arith.constant 1.000000e+00 : f32
    %358 = vector.broadcast %cst_61 : f32 to vector<2x32xf32>
    %359 = arith.addf %358, %357 : vector<2x32xf32>
    %360 = arith.divf %358, %359 : vector<2x32xf32>
    %361 = vector.extract_strided_slice %354 {offsets = [0, 32], sizes = [2, 32], strides = [1, 1]} : vector<2x128xf32> to vector<2x32xf32>
    %362 = arith.negf %361 : vector<2x32xf32>
    %363 = math.exp %362 : vector<2x32xf32>
    %cst_62 = arith.constant 1.000000e+00 : f32
    %364 = vector.broadcast %cst_62 : f32 to vector<2x32xf32>
    %365 = arith.addf %364, %363 : vector<2x32xf32>
    %366 = arith.divf %364, %365 : vector<2x32xf32>
    %367 = vector.extract_strided_slice %354 {offsets = [0, 64], sizes = [2, 32], strides = [1, 1]} : vector<2x128xf32> to vector<2x32xf32>
    %368 = math.tanh %367 : vector<2x32xf32>
    %369 = vector.extract_strided_slice %354 {offsets = [0, 96], sizes = [2, 32], strides = [1, 1]} : vector<2x128xf32> to vector<2x32xf32>
    %370 = arith.negf %369 : vector<2x32xf32>
    %371 = math.exp %370 : vector<2x32xf32>
    %cst_63 = arith.constant 1.000000e+00 : f32
    %372 = vector.broadcast %cst_63 : f32 to vector<2x32xf32>
    %373 = arith.addf %372, %371 : vector<2x32xf32>
    %374 = arith.divf %372, %373 : vector<2x32xf32>
    %375 = arith.mulf %366, %320 : vector<2x32xf32>
    %376 = arith.mulf %360, %368 : vector<2x32xf32>
    %377 = arith.addf %375, %376 : vector<2x32xf32>
    %378 = math.tanh %377 : vector<2x32xf32>
    %379 = arith.mulf %374, %378 : vector<2x32xf32>
    %380 = tpu.concatenate %379, %351 in 1 : vector<2x32xf32>, vector<2x32xf32> -> vector<2x64xf32>
    %cst_64 = arith.constant dense<0.000000e+00> : vector<2x128xf32>
    %381 = tpu.matmul %380, %7, %cst_64 {dimension_numbers = #tpu.dot_dimension_numbers<[1], [0], [0], [1], [0, 0, 1, 1], [], []>} : vector<2x64xf32>, vector<64x128xf32>, vector<2x128xf32> -> vector<2x128xf32>
    %382 = vector.broadcast %8 : vector<1x128xf32> to vector<2x128xf32>
    %383 = arith.addf %381, %382 : vector<2x128xf32>
    %384 = vector.extract_strided_slice %383 {offsets = [0, 0], sizes = [2, 32], strides = [1, 1]} : vector<2x128xf32> to vector<2x32xf32>
    %385 = arith.negf %384 : vector<2x32xf32>
    %386 = math.exp %385 : vector<2x32xf32>
    %cst_65 = arith.constant 1.000000e+00 : f32
    %387 = vector.broadcast %cst_65 : f32 to vector<2x32xf32>
    %388 = arith.addf %387, %386 : vector<2x32xf32>
    %389 = arith.divf %387, %388 : vector<2x32xf32>
    %390 = vector.extract_strided_slice %383 {offsets = [0, 32], sizes = [2, 32], strides = [1, 1]} : vector<2x128xf32> to vector<2x32xf32>
    %391 = arith.negf %390 : vector<2x32xf32>
    %392 = math.exp %391 : vector<2x32xf32>
    %cst_66 = arith.constant 1.000000e+00 : f32
    %393 = vector.broadcast %cst_66 : f32 to vector<2x32xf32>
    %394 = arith.addf %393, %392 : vector<2x32xf32>
    %395 = arith.divf %393, %394 : vector<2x32xf32>
    %396 = vector.extract_strided_slice %383 {offsets = [0, 64], sizes = [2, 32], strides = [1, 1]} : vector<2x128xf32> to vector<2x32xf32>
    %397 = math.tanh %396 : vector<2x32xf32>
    %398 = vector.extract_strided_slice %383 {offsets = [0, 96], sizes = [2, 32], strides = [1, 1]} : vector<2x128xf32> to vector<2x32xf32>
    %399 = arith.negf %398 : vector<2x32xf32>
    %400 = math.exp %399 : vector<2x32xf32>
    %cst_67 = arith.constant 1.000000e+00 : f32
    %401 = vector.broadcast %cst_67 : f32 to vector<2x32xf32>
    %402 = arith.addf %401, %400 : vector<2x32xf32>
    %403 = arith.divf %401, %402 : vector<2x32xf32>
    %404 = arith.mulf %395, %349 : vector<2x32xf32>
    %405 = arith.mulf %389, %397 : vector<2x32xf32>
    %406 = arith.addf %404, %405 : vector<2x32xf32>
    %407 = math.tanh %406 : vector<2x32xf32>
    %408 = arith.mulf %403, %407 : vector<2x32xf32>
    %409 = vector.extract_strided_slice %5 {offsets = [14, 0], sizes = [2, 128], strides = [1, 1]} : vector<16x128xf32> to vector<2x128xf32>
    %cst_68 = arith.constant dense<0.000000e+00> : vector<2x128xf32>
    %410 = tpu.matmul %379, %6, %cst_68 {dimension_numbers = #tpu.dot_dimension_numbers<[1], [0], [0], [1], [0, 0, 1, 1], [], []>} : vector<2x32xf32>, vector<32x128xf32>, vector<2x128xf32> -> vector<2x128xf32>
    %411 = arith.addf %409, %410 : vector<2x128xf32>
    %412 = vector.extract_strided_slice %411 {offsets = [0, 0], sizes = [2, 32], strides = [1, 1]} : vector<2x128xf32> to vector<2x32xf32>
    %413 = arith.negf %412 : vector<2x32xf32>
    %414 = math.exp %413 : vector<2x32xf32>
    %cst_69 = arith.constant 1.000000e+00 : f32
    %415 = vector.broadcast %cst_69 : f32 to vector<2x32xf32>
    %416 = arith.addf %415, %414 : vector<2x32xf32>
    %417 = arith.divf %415, %416 : vector<2x32xf32>
    %418 = vector.extract_strided_slice %411 {offsets = [0, 32], sizes = [2, 32], strides = [1, 1]} : vector<2x128xf32> to vector<2x32xf32>
    %419 = arith.negf %418 : vector<2x32xf32>
    %420 = math.exp %419 : vector<2x32xf32>
    %cst_70 = arith.constant 1.000000e+00 : f32
    %421 = vector.broadcast %cst_70 : f32 to vector<2x32xf32>
    %422 = arith.addf %421, %420 : vector<2x32xf32>
    %423 = arith.divf %421, %422 : vector<2x32xf32>
    %424 = vector.extract_strided_slice %411 {offsets = [0, 64], sizes = [2, 32], strides = [1, 1]} : vector<2x128xf32> to vector<2x32xf32>
    %425 = math.tanh %424 : vector<2x32xf32>
    %426 = vector.extract_strided_slice %411 {offsets = [0, 96], sizes = [2, 32], strides = [1, 1]} : vector<2x128xf32> to vector<2x32xf32>
    %427 = arith.negf %426 : vector<2x32xf32>
    %428 = math.exp %427 : vector<2x32xf32>
    %cst_71 = arith.constant 1.000000e+00 : f32
    %429 = vector.broadcast %cst_71 : f32 to vector<2x32xf32>
    %430 = arith.addf %429, %428 : vector<2x32xf32>
    %431 = arith.divf %429, %430 : vector<2x32xf32>
    %432 = arith.mulf %423, %377 : vector<2x32xf32>
    %433 = arith.mulf %417, %425 : vector<2x32xf32>
    %434 = arith.addf %432, %433 : vector<2x32xf32>
    %435 = math.tanh %434 : vector<2x32xf32>
    %436 = arith.mulf %431, %435 : vector<2x32xf32>
    %437 = tpu.concatenate %436, %408 in 1 : vector<2x32xf32>, vector<2x32xf32> -> vector<2x64xf32>
    %cst_72 = arith.constant dense<0.000000e+00> : vector<2x128xf32>
    %438 = tpu.matmul %437, %7, %cst_72 {dimension_numbers = #tpu.dot_dimension_numbers<[1], [0], [0], [1], [0, 0, 1, 1], [], []>} : vector<2x64xf32>, vector<64x128xf32>, vector<2x128xf32> -> vector<2x128xf32>
    %439 = vector.broadcast %8 : vector<1x128xf32> to vector<2x128xf32>
    %440 = arith.addf %438, %439 : vector<2x128xf32>
    %441 = vector.extract_strided_slice %440 {offsets = [0, 0], sizes = [2, 32], strides = [1, 1]} : vector<2x128xf32> to vector<2x32xf32>
    %442 = arith.negf %441 : vector<2x32xf32>
    %443 = math.exp %442 : vector<2x32xf32>
    %cst_73 = arith.constant 1.000000e+00 : f32
    %444 = vector.broadcast %cst_73 : f32 to vector<2x32xf32>
    %445 = arith.addf %444, %443 : vector<2x32xf32>
    %446 = arith.divf %444, %445 : vector<2x32xf32>
    %447 = vector.extract_strided_slice %440 {offsets = [0, 32], sizes = [2, 32], strides = [1, 1]} : vector<2x128xf32> to vector<2x32xf32>
    %448 = arith.negf %447 : vector<2x32xf32>
    %449 = math.exp %448 : vector<2x32xf32>
    %cst_74 = arith.constant 1.000000e+00 : f32
    %450 = vector.broadcast %cst_74 : f32 to vector<2x32xf32>
    %451 = arith.addf %450, %449 : vector<2x32xf32>
    %452 = arith.divf %450, %451 : vector<2x32xf32>
    %453 = vector.extract_strided_slice %440 {offsets = [0, 64], sizes = [2, 32], strides = [1, 1]} : vector<2x128xf32> to vector<2x32xf32>
    %454 = math.tanh %453 : vector<2x32xf32>
    %455 = vector.extract_strided_slice %440 {offsets = [0, 96], sizes = [2, 32], strides = [1, 1]} : vector<2x128xf32> to vector<2x32xf32>
    %456 = arith.negf %455 : vector<2x32xf32>
    %457 = math.exp %456 : vector<2x32xf32>
    %cst_75 = arith.constant 1.000000e+00 : f32
    %458 = vector.broadcast %cst_75 : f32 to vector<2x32xf32>
    %459 = arith.addf %458, %457 : vector<2x32xf32>
    %460 = arith.divf %458, %459 : vector<2x32xf32>
    %461 = arith.mulf %452, %406 : vector<2x32xf32>
    %462 = arith.mulf %446, %454 : vector<2x32xf32>
    %463 = arith.addf %461, %462 : vector<2x32xf32>
    %464 = math.tanh %463 : vector<2x32xf32>
    %465 = arith.mulf %460, %464 : vector<2x32xf32>
    %c0_76 = arith.constant 0 : index
    %c0_77 = arith.constant 0 : index
    %466 = vector.load %arg7[%c0_76, %c0_77] : memref<32x3xf32, #tpu.memory_space<vmem>>, vector<32x3xf32>
    %cst_78 = arith.constant dense<0.000000e+00> : vector<2x3xf32>
    %467 = tpu.matmul %465, %466, %cst_78 {dimension_numbers = #tpu.dot_dimension_numbers<[1], [0], [0], [1], [0, 0, 1, 1], [], []>} : vector<2x32xf32>, vector<32x3xf32>, vector<2x3xf32> -> vector<2x3xf32>
    %c0_79 = arith.constant 0 : index
    %c0_80 = arith.constant 0 : index
    %468 = vector.load %arg8[%c0_79, %c0_80] : memref<1x3xf32, #tpu.memory_space<vmem>>, vector<1x3xf32>
    %469 = vector.broadcast %468 : vector<1x3xf32> to vector<2x3xf32>
    %470 = arith.addf %467, %469 : vector<2x3xf32>
    %c0_81 = arith.constant 0 : index
    %c0_82 = arith.constant 0 : index
    %471 = vector.load %arg9[%c0_81, %c0_82] : memref<2x3xf32, #tpu.memory_space<vmem>>, vector<2x3xf32>
    tpu.vector_store %arg9[%c0_81, %c0_82], %470 {strides = array<i32>} : memref<2x3xf32, #tpu.memory_space<vmem>>, vector<2x3xf32>,
    %c0_83 = arith.constant 0 : index
    %c0_84 = arith.constant 0 : index
    %472 = vector.load %arg10[%c0_83, %c0_84] : memref<2x32xf32, #tpu.memory_space<vmem>>, vector<2x32xf32>
    tpu.vector_store %arg10[%c0_83, %c0_84], %436 {strides = array<i32>} : memref<2x32xf32, #tpu.memory_space<vmem>>, vector<2x32xf32>,
    %c0_85 = arith.constant 0 : index
    %c0_86 = arith.constant 0 : index
    %473 = vector.load %arg11[%c0_85, %c0_86] : memref<2x32xf32, #tpu.memory_space<vmem>>, vector<2x32xf32>
    tpu.vector_store %arg11[%c0_85, %c0_86], %434 {strides = array<i32>} : memref<2x32xf32, #tpu.memory_space<vmem>>, vector<2x32xf32>,
    %c0_87 = arith.constant 0 : index
    %c0_88 = arith.constant 0 : index
    %474 = vector.load %arg12[%c0_87, %c0_88] : memref<2x32xf32, #tpu.memory_space<vmem>>, vector<2x32xf32>
    tpu.vector_store %arg12[%c0_87, %c0_88], %465 {strides = array<i32>} : memref<2x32xf32, #tpu.memory_space<vmem>>, vector<2x32xf32>,
    %c0_89 = arith.constant 0 : index
    %c0_90 = arith.constant 0 : index
    %475 = vector.load %arg13[%c0_89, %c0_90] : memref<2x32xf32, #tpu.memory_space<vmem>>, vector<2x32xf32>
    tpu.vector_store %arg13[%c0_89, %c0_90], %463 {strides = array<i32>} : memref<2x32xf32, #tpu.memory_space<vmem>>, vector<2x32xf32>,
    return
  }
  func.func @transform_0(%arg0: i32) -> (i32, i32) {
    %c0_i32 = arith.constant 0 : i32
    %c0_i32_0 = arith.constant 0 : i32
    %c0_i32_1 = arith.constant 0 : i32
    return %c0_i32, %c0_i32_0 : i32, i32
  }
  func.func @transform_1(%arg0: i32) -> (i32, i32) {
    %c0_i32 = arith.constant 0 : i32
    %c0_i32_0 = arith.constant 0 : i32
    %c0_i32_1 = arith.constant 0 : i32
    return %c0_i32, %c0_i32_0 : i32, i32
  }
  func.func @transform_2(%arg0: i32) -> (i32, i32) {
    %c0_i32 = arith.constant 0 : i32
    %c0_i32_0 = arith.constant 0 : i32
    %c0_i32_1 = arith.constant 0 : i32
    return %c0_i32, %c0_i32_0 : i32, i32
  }
  func.func @transform_3(%arg0: i32) -> (i32, i32) {
    %c0_i32 = arith.constant 0 : i32
    %c0_i32_0 = arith.constant 0 : i32
    %c0_i32_1 = arith.constant 0 : i32
    return %c0_i32, %c0_i32_0 : i32, i32
  }
  func.func @transform_4(%arg0: i32) -> (i32, i32) {
    %c0_i32 = arith.constant 0 : i32
    %c0_i32_0 = arith.constant 0 : i32
    %c0_i32_1 = arith.constant 0 : i32
    return %c0_i32, %c0_i32_0 : i32, i32
  }
  func.func @transform_5(%arg0: i32) -> (i32, i32) {
    %c0_i32 = arith.constant 0 : i32
    %c0_i32_0 = arith.constant 0 : i32
    %c0_i32_1 = arith.constant 0 : i32
    return %c0_i32, %c0_i32_0 : i32, i32
  }
  func.func @transform_6(%arg0: i32) -> (i32, i32) {
    %c0_i32 = arith.constant 0 : i32
    %c0_i32_0 = arith.constant 0 : i32
    %c0_i32_1 = arith.constant 0 : i32
    return %c0_i32, %c0_i32_0 : i32, i32
  }
  func.func @transform_7(%arg0: i32) -> (i32, i32) {
    %c0_i32 = arith.constant 0 : i32
    %c0_i32_0 = arith.constant 0 : i32
    %c0_i32_1 = arith.constant 0 : i32
    return %c0_i32, %c0_i32_0 : i32, i32
  }
  func.func @transform_8(%arg0: i32) -> (i32, i32) {
    %c0_i32 = arith.constant 0 : i32
    %c0_i32_0 = arith.constant 0 : i32
    %c0_i32_1 = arith.constant 0 : i32
    return %c0_i32, %c0_i32_0 : i32, i32
  }
  func.func @transform_9(%arg0: i32) -> (i32, i32) {
    %c0_i32 = arith.constant 0 : i32
    %c0_i32_0 = arith.constant 0 : i32
    %c0_i32_1 = arith.constant 0 : i32
    return %c0_i32, %c0_i32_0 : i32, i32
  }
  func.func @transform_10(%arg0: i32) -> (i32, i32) {
    %c0_i32 = arith.constant 0 : i32
    %c0_i32_0 = arith.constant 0 : i32
    %c0_i32_1 = arith.constant 0 : i32
    return %c0_i32, %c0_i32_0 : i32, i32
  }
  func.func @transform_11(%arg0: i32) -> (i32, i32) {
    %c0_i32 = arith.constant 0 : i32
    %c0_i32_0 = arith.constant 0 : i32
    %c0_i32_1 = arith.constant 0 : i32
    return %c0_i32, %c0_i32_0 : i32, i32
  }
  func.func @transform_12(%arg0: i32) -> (i32, i32) {
    %c0_i32 = arith.constant 0 : i32
    %c0_i32_0 = arith.constant 0 : i32
    %c0_i32_1 = arith.constant 0 : i32
    return %c0_i32, %c0_i32_0 : i32, i32
  }
}

module attributes {stable_mosaic.version = 11 : i64} {
  func.func @_decode_kernel(%arg0: i32, %arg1: memref<8x32xf32, #tpu.memory_space<vmem>>, %arg2: memref<8x32xf32, #tpu.memory_space<vmem>>, %arg3: memref<8x32xf32, #tpu.memory_space<vmem>>, %arg4: memref<8x32xf32, #tpu.memory_space<vmem>>, %arg5: memref<8x3xf32, #tpu.memory_space<vmem>>, %arg6: memref<8x12xf32, #tpu.memory_space<vmem>>, %arg7: memref<8x5xf32, #tpu.memory_space<vmem>>, %arg8: memref<4x8x2xf32, #tpu.memory_space<vmem>>, %arg9: memref<8x1xf32, #tpu.memory_space<vmem>>, %arg10: memref<8x4xf32, #tpu.memory_space<vmem>>, %arg11: memref<8x4xf32, #tpu.memory_space<vmem>>, %arg12: memref<10x128xf32, #tpu.memory_space<vmem>>, %arg13: memref<32x128xf32, #tpu.memory_space<vmem>>, %arg14: memref<1x128xf32, #tpu.memory_space<vmem>>, %arg15: memref<64x128xf32, #tpu.memory_space<vmem>>, %arg16: memref<1x128xf32, #tpu.memory_space<vmem>>, %arg17: memref<32x3xf32, #tpu.memory_space<vmem>>, %arg18: memref<1x3xf32, #tpu.memory_space<vmem>>, %arg19: memref<8x4xf32, #tpu.memory_space<vmem>>) attributes {dimension_semantics = [#tpu.dimension_semantics<arbitrary>], iteration_bounds = array<i64: 1>, scalar_prefetch = 0 : i64, scratch_operands = 0 : i64, tpu.core_type = #tpu.core_type<tc>, window_params = [{pipeline_mode = #tpu.pipeline_mode<synchronous>, transform_indices = @transform_0, window_bounds = array<i64: 8, 32>}, {pipeline_mode = #tpu.pipeline_mode<synchronous>, transform_indices = @transform_1, window_bounds = array<i64: 8, 32>}, {pipeline_mode = #tpu.pipeline_mode<synchronous>, transform_indices = @transform_2, window_bounds = array<i64: 8, 32>}, {pipeline_mode = #tpu.pipeline_mode<synchronous>, transform_indices = @transform_3, window_bounds = array<i64: 8, 32>}, {pipeline_mode = #tpu.pipeline_mode<synchronous>, transform_indices = @transform_4, window_bounds = array<i64: 8, 3>}, {pipeline_mode = #tpu.pipeline_mode<synchronous>, transform_indices = @transform_5, window_bounds = array<i64: 8, 12>}, {pipeline_mode = #tpu.pipeline_mode<synchronous>, transform_indices = @transform_6, window_bounds = array<i64: 8, 5>}, {pipeline_mode = #tpu.pipeline_mode<synchronous>, transform_indices = @transform_7, window_bounds = array<i64: 4, 8, 2>}, {pipeline_mode = #tpu.pipeline_mode<synchronous>, transform_indices = @transform_8, window_bounds = array<i64: 8, 1>}, {pipeline_mode = #tpu.pipeline_mode<synchronous>, transform_indices = @transform_9, window_bounds = array<i64: 8, 4>}, {pipeline_mode = #tpu.pipeline_mode<synchronous>, transform_indices = @transform_10, window_bounds = array<i64: 8, 4>}, {pipeline_mode = #tpu.pipeline_mode<synchronous>, transform_indices = @transform_11, window_bounds = array<i64: 10, 128>}, {pipeline_mode = #tpu.pipeline_mode<synchronous>, transform_indices = @transform_12, window_bounds = array<i64: 32, 128>}, {pipeline_mode = #tpu.pipeline_mode<synchronous>, transform_indices = @transform_13, window_bounds = array<i64: 1, 128>}, {pipeline_mode = #tpu.pipeline_mode<synchronous>, transform_indices = @transform_14, window_bounds = array<i64: 64, 128>}, {pipeline_mode = #tpu.pipeline_mode<synchronous>, transform_indices = @transform_15, window_bounds = array<i64: 1, 128>}, {pipeline_mode = #tpu.pipeline_mode<synchronous>, transform_indices = @transform_16, window_bounds = array<i64: 32, 3>}, {pipeline_mode = #tpu.pipeline_mode<synchronous>, transform_indices = @transform_17, window_bounds = array<i64: 1, 3>}, {pipeline_mode = #tpu.pipeline_mode<synchronous>, transform_indices = @transform_18, window_bounds = array<i64: 8, 4>}]} {
    %c0 = arith.constant 0 : index
    %c0_0 = arith.constant 0 : index
    %0 = vector.load %arg1[%c0, %c0_0] : memref<8x32xf32, #tpu.memory_space<vmem>>, vector<8x32xf32>
    %c0_1 = arith.constant 0 : index
    %c0_2 = arith.constant 0 : index
    %1 = vector.load %arg2[%c0_1, %c0_2] : memref<8x32xf32, #tpu.memory_space<vmem>>, vector<8x32xf32>
    %c0_3 = arith.constant 0 : index
    %c0_4 = arith.constant 0 : index
    %2 = vector.load %arg3[%c0_3, %c0_4] : memref<8x32xf32, #tpu.memory_space<vmem>>, vector<8x32xf32>
    %c0_5 = arith.constant 0 : index
    %c0_6 = arith.constant 0 : index
    %3 = vector.load %arg4[%c0_5, %c0_6] : memref<8x32xf32, #tpu.memory_space<vmem>>, vector<8x32xf32>
    %c0_7 = arith.constant 0 : index
    %c0_8 = arith.constant 0 : index
    %4 = vector.load %arg12[%c0_7, %c0_8] : memref<10x128xf32, #tpu.memory_space<vmem>>, vector<10x128xf32>
    %c0_9 = arith.constant 0 : index
    %c0_10 = arith.constant 0 : index
    %5 = vector.load %arg13[%c0_9, %c0_10] : memref<32x128xf32, #tpu.memory_space<vmem>>, vector<32x128xf32>
    %c0_11 = arith.constant 0 : index
    %c0_12 = arith.constant 0 : index
    %6 = vector.load %arg14[%c0_11, %c0_12] : memref<1x128xf32, #tpu.memory_space<vmem>>, vector<1x128xf32>
    %c0_13 = arith.constant 0 : index
    %c0_14 = arith.constant 0 : index
    %7 = vector.load %arg15[%c0_13, %c0_14] : memref<64x128xf32, #tpu.memory_space<vmem>>, vector<64x128xf32>
    %c0_15 = arith.constant 0 : index
    %c0_16 = arith.constant 0 : index
    %8 = vector.load %arg16[%c0_15, %c0_16] : memref<1x128xf32, #tpu.memory_space<vmem>>, vector<1x128xf32>
    %c0_17 = arith.constant 0 : index
    %c0_18 = arith.constant 0 : index
    %9 = vector.load %arg17[%c0_17, %c0_18] : memref<32x3xf32, #tpu.memory_space<vmem>>, vector<32x3xf32>
    %c0_19 = arith.constant 0 : index
    %c0_20 = arith.constant 0 : index
    %10 = vector.load %arg18[%c0_19, %c0_20] : memref<1x3xf32, #tpu.memory_space<vmem>>, vector<1x3xf32>
    %c0_21 = arith.constant 0 : index
    %c0_22 = arith.constant 0 : index
    %11 = vector.load %arg9[%c0_21, %c0_22] : memref<8x1xf32, #tpu.memory_space<vmem>>, vector<8x1xf32>
    %c0_23 = arith.constant 0 : index
    %c0_24 = arith.constant 0 : index
    %12 = vector.load %arg7[%c0_23, %c0_24] : memref<8x5xf32, #tpu.memory_space<vmem>>, vector<8x5xf32>
    %c0_25 = arith.constant 0 : index
    %c0_26 = arith.constant 0 : index
    %13 = vector.load %arg5[%c0_25, %c0_26] : memref<8x3xf32, #tpu.memory_space<vmem>>, vector<8x3xf32>
    %c0_27 = arith.constant 0 : index
    %c0_28 = arith.constant 0 : index
    %14 = vector.load %arg10[%c0_27, %c0_28] : memref<8x4xf32, #tpu.memory_space<vmem>>, vector<8x1xf32>
    %c0_29 = arith.constant 0 : index
    %c0_30 = arith.constant 0 : index
    %15 = vector.load %arg11[%c0_29, %c0_30] : memref<8x4xf32, #tpu.memory_space<vmem>>, vector<8x1xf32>
    %16 = vector.extract_strided_slice %13 {offsets = [0, 0], sizes = [8, 1], strides = [1, 1]} : vector<8x3xf32> to vector<8x1xf32>
    %cst = arith.constant 0.000000e+00 : f32
    %17 = vector.broadcast %cst : f32 to vector<8x1xf32>
    %18 = arith.maximumf %16, %17 : vector<8x1xf32>
    %19 = math.absf %16 : vector<8x1xf32>
    %cst_31 = arith.constant 0.000000e+00 : f32
    %20 = vector.broadcast %cst_31 : f32 to vector<8x1xf32>
    %21 = arith.subf %20, %19 : vector<8x1xf32>
    %22 = math.exp %21 : vector<8x1xf32>
    %cst_32 = arith.constant 1.000000e+00 : f32
    %23 = vector.broadcast %cst_32 : f32 to vector<8x1xf32>
    %24 = arith.addf %23, %22 : vector<8x1xf32>
    %25 = math.log %24 : vector<8x1xf32>
    %26 = arith.addf %18, %25 : vector<8x1xf32>
    %cst_33 = arith.constant 2.000000e+00 : f32
    %27 = vector.broadcast %cst_33 : f32 to vector<8x1xf32>
    %28 = arith.addf %27, %26 : vector<8x1xf32>
    %29 = vector.extract_strided_slice %13 {offsets = [0, 1], sizes = [8, 1], strides = [1, 1]} : vector<8x3xf32> to vector<8x1xf32>
    %30 = vector.extract_strided_slice %13 {offsets = [0, 2], sizes = [8, 1], strides = [1, 1]} : vector<8x3xf32> to vector<8x1xf32>
    %cst_34 = arith.constant 0.000000e+00 : f32
    %31 = vector.broadcast %cst_34 : f32 to vector<8x1xf32>
    %32 = arith.maximumf %30, %31 : vector<8x1xf32>
    %33 = math.absf %30 : vector<8x1xf32>
    %cst_35 = arith.constant 0.000000e+00 : f32
    %34 = vector.broadcast %cst_35 : f32 to vector<8x1xf32>
    %35 = arith.subf %34, %33 : vector<8x1xf32>
    %36 = math.exp %35 : vector<8x1xf32>
    %cst_36 = arith.constant 1.000000e+00 : f32
    %37 = vector.broadcast %cst_36 : f32 to vector<8x1xf32>
    %38 = arith.addf %37, %36 : vector<8x1xf32>
    %39 = math.log %38 : vector<8x1xf32>
    %40 = arith.addf %32, %39 : vector<8x1xf32>
    %cst_37 = arith.constant -2.000000e+00 : f32
    %41 = vector.broadcast %cst_37 : f32 to vector<8x1xf32>
    %42 = arith.divf %41, %28 : vector<8x1xf32>
    %43 = arith.mulf %42, %14 : vector<8x1xf32>
    %44 = math.exp %43 : vector<8x1xf32>
    %cst_38 = arith.constant 1.000000e+00 : f32
    %45 = vector.broadcast %cst_38 : f32 to vector<8x1xf32>
    %46 = arith.subf %44, %45 : vector<8x1xf32>
    %47 = arith.mulf %28, %46 : vector<8x1xf32>
    %48 = math.sqrt %47 : vector<8x1xf32>
    %49 = arith.mulf %40, %48 : vector<8x1xf32>
    %50 = arith.mulf %49, %15 : vector<8x1xf32>
    %51 = arith.addf %29, %50 : vector<8x1xf32>
    %52 = arith.mulf %51, %11 : vector<8x1xf32>
    %c0_39 = arith.constant 0 : index
    %c11 = arith.constant 11 : index
    %53 = vector.load %arg6[%c0_39, %c11] : memref<8x12xf32, #tpu.memory_space<vmem>>, vector<8x1xf32>
    %c0_40 = arith.constant 0 : index
    %c10 = arith.constant 10 : index
    %54 = vector.load %arg6[%c0_40, %c10] : memref<8x12xf32, #tpu.memory_space<vmem>>, vector<8x1xf32>
    %c0_41 = arith.constant 0 : index
    %c8 = arith.constant 8 : index
    %55 = vector.load %arg6[%c0_41, %c8] : memref<8x12xf32, #tpu.memory_space<vmem>>, vector<8x1xf32>
    %c1 = arith.constant 1 : index
    %c0_42 = arith.constant 0 : index
    %c0_43 = arith.constant 0 : index
    %56 = vector.load %arg8[%c1, %c0_42, %c0_43] : memref<4x8x2xf32, #tpu.memory_space<vmem>>, vector<1x8x2xf32>
    %57 = vector.shape_cast %56 : vector<1x8x2xf32> to vector<8x2xf32>
    %58 = tpu.concatenate %53, %54, %55, %12, %57 in 1 : vector<8x1xf32>, vector<8x1xf32>, vector<8x1xf32>, vector<8x5xf32>, vector<8x2xf32> -> vector<8x10xf32>
    %cst_44 = arith.constant dense<0.000000e+00> : vector<8x128xf32>
    %59 = tpu.matmul %58, %4, %cst_44 {dimension_numbers = #tpu.dot_dimension_numbers<[1], [0], [0], [1], [0, 0, 1, 1], [], []>} : vector<8x10xf32>, vector<10x128xf32>, vector<8x128xf32> -> vector<8x128xf32>
    %cst_45 = arith.constant dense<0.000000e+00> : vector<8x128xf32>
    %60 = tpu.matmul %0, %5, %cst_45 {dimension_numbers = #tpu.dot_dimension_numbers<[1], [0], [0], [1], [0, 0, 1, 1], [], []>} : vector<8x32xf32>, vector<32x128xf32>, vector<8x128xf32> -> vector<8x128xf32>
    %61 = arith.addf %59, %60 : vector<8x128xf32>
    %62 = vector.broadcast %6 : vector<1x128xf32> to vector<8x128xf32>
    %63 = arith.addf %61, %62 : vector<8x128xf32>
    %64 = vector.extract_strided_slice %63 {offsets = [0, 0], sizes = [8, 32], strides = [1, 1]} : vector<8x128xf32> to vector<8x32xf32>
    %65 = arith.negf %64 : vector<8x32xf32>
    %66 = math.exp %65 : vector<8x32xf32>
    %cst_46 = arith.constant 1.000000e+00 : f32
    %67 = vector.broadcast %cst_46 : f32 to vector<8x32xf32>
    %68 = arith.addf %67, %66 : vector<8x32xf32>
    %69 = arith.divf %67, %68 : vector<8x32xf32>
    %70 = vector.extract_strided_slice %63 {offsets = [0, 32], sizes = [8, 32], strides = [1, 1]} : vector<8x128xf32> to vector<8x32xf32>
    %71 = arith.negf %70 : vector<8x32xf32>
    %72 = math.exp %71 : vector<8x32xf32>
    %cst_47 = arith.constant 1.000000e+00 : f32
    %73 = vector.broadcast %cst_47 : f32 to vector<8x32xf32>
    %74 = arith.addf %73, %72 : vector<8x32xf32>
    %75 = arith.divf %73, %74 : vector<8x32xf32>
    %76 = vector.extract_strided_slice %63 {offsets = [0, 64], sizes = [8, 32], strides = [1, 1]} : vector<8x128xf32> to vector<8x32xf32>
    %77 = math.tanh %76 : vector<8x32xf32>
    %78 = vector.extract_strided_slice %63 {offsets = [0, 96], sizes = [8, 32], strides = [1, 1]} : vector<8x128xf32> to vector<8x32xf32>
    %79 = arith.negf %78 : vector<8x32xf32>
    %80 = math.exp %79 : vector<8x32xf32>
    %cst_48 = arith.constant 1.000000e+00 : f32
    %81 = vector.broadcast %cst_48 : f32 to vector<8x32xf32>
    %82 = arith.addf %81, %80 : vector<8x32xf32>
    %83 = arith.divf %81, %82 : vector<8x32xf32>
    %84 = arith.mulf %75, %1 : vector<8x32xf32>
    %85 = arith.mulf %69, %77 : vector<8x32xf32>
    %86 = arith.addf %84, %85 : vector<8x32xf32>
    %87 = math.tanh %86 : vector<8x32xf32>
    %88 = arith.mulf %83, %87 : vector<8x32xf32>
    %89 = tpu.concatenate %88, %2 in 1 : vector<8x32xf32>, vector<8x32xf32> -> vector<8x64xf32>
    %cst_49 = arith.constant dense<0.000000e+00> : vector<8x128xf32>
    %90 = tpu.matmul %89, %7, %cst_49 {dimension_numbers = #tpu.dot_dimension_numbers<[1], [0], [0], [1], [0, 0, 1, 1], [], []>} : vector<8x64xf32>, vector<64x128xf32>, vector<8x128xf32> -> vector<8x128xf32>
    %91 = vector.broadcast %8 : vector<1x128xf32> to vector<8x128xf32>
    %92 = arith.addf %90, %91 : vector<8x128xf32>
    %93 = vector.extract_strided_slice %92 {offsets = [0, 0], sizes = [8, 32], strides = [1, 1]} : vector<8x128xf32> to vector<8x32xf32>
    %94 = arith.negf %93 : vector<8x32xf32>
    %95 = math.exp %94 : vector<8x32xf32>
    %cst_50 = arith.constant 1.000000e+00 : f32
    %96 = vector.broadcast %cst_50 : f32 to vector<8x32xf32>
    %97 = arith.addf %96, %95 : vector<8x32xf32>
    %98 = arith.divf %96, %97 : vector<8x32xf32>
    %99 = vector.extract_strided_slice %92 {offsets = [0, 32], sizes = [8, 32], strides = [1, 1]} : vector<8x128xf32> to vector<8x32xf32>
    %100 = arith.negf %99 : vector<8x32xf32>
    %101 = math.exp %100 : vector<8x32xf32>
    %cst_51 = arith.constant 1.000000e+00 : f32
    %102 = vector.broadcast %cst_51 : f32 to vector<8x32xf32>
    %103 = arith.addf %102, %101 : vector<8x32xf32>
    %104 = arith.divf %102, %103 : vector<8x32xf32>
    %105 = vector.extract_strided_slice %92 {offsets = [0, 64], sizes = [8, 32], strides = [1, 1]} : vector<8x128xf32> to vector<8x32xf32>
    %106 = math.tanh %105 : vector<8x32xf32>
    %107 = vector.extract_strided_slice %92 {offsets = [0, 96], sizes = [8, 32], strides = [1, 1]} : vector<8x128xf32> to vector<8x32xf32>
    %108 = arith.negf %107 : vector<8x32xf32>
    %109 = math.exp %108 : vector<8x32xf32>
    %cst_52 = arith.constant 1.000000e+00 : f32
    %110 = vector.broadcast %cst_52 : f32 to vector<8x32xf32>
    %111 = arith.addf %110, %109 : vector<8x32xf32>
    %112 = arith.divf %110, %111 : vector<8x32xf32>
    %113 = arith.mulf %104, %3 : vector<8x32xf32>
    %114 = arith.mulf %98, %106 : vector<8x32xf32>
    %115 = arith.addf %113, %114 : vector<8x32xf32>
    %116 = math.tanh %115 : vector<8x32xf32>
    %117 = arith.mulf %112, %116 : vector<8x32xf32>
    %cst_53 = arith.constant dense<0.000000e+00> : vector<8x3xf32>
    %118 = tpu.matmul %117, %9, %cst_53 {dimension_numbers = #tpu.dot_dimension_numbers<[1], [0], [0], [1], [0, 0, 1, 1], [], []>} : vector<8x32xf32>, vector<32x3xf32>, vector<8x3xf32> -> vector<8x3xf32>
    %119 = vector.broadcast %10 : vector<1x3xf32> to vector<8x3xf32>
    %120 = arith.addf %118, %119 : vector<8x3xf32>
    %c0_54 = arith.constant 0 : index
    %c1_55 = arith.constant 1 : index
    %121 = vector.load %arg10[%c0_54, %c1_55] : memref<8x4xf32, #tpu.memory_space<vmem>>, vector<8x1xf32>
    %c0_56 = arith.constant 0 : index
    %c1_57 = arith.constant 1 : index
    %122 = vector.load %arg11[%c0_56, %c1_57] : memref<8x4xf32, #tpu.memory_space<vmem>>, vector<8x1xf32>
    %123 = vector.extract_strided_slice %120 {offsets = [0, 0], sizes = [8, 1], strides = [1, 1]} : vector<8x3xf32> to vector<8x1xf32>
    %cst_58 = arith.constant 0.000000e+00 : f32
    %124 = vector.broadcast %cst_58 : f32 to vector<8x1xf32>
    %125 = arith.maximumf %123, %124 : vector<8x1xf32>
    %126 = math.absf %123 : vector<8x1xf32>
    %cst_59 = arith.constant 0.000000e+00 : f32
    %127 = vector.broadcast %cst_59 : f32 to vector<8x1xf32>
    %128 = arith.subf %127, %126 : vector<8x1xf32>
    %129 = math.exp %128 : vector<8x1xf32>
    %cst_60 = arith.constant 1.000000e+00 : f32
    %130 = vector.broadcast %cst_60 : f32 to vector<8x1xf32>
    %131 = arith.addf %130, %129 : vector<8x1xf32>
    %132 = math.log %131 : vector<8x1xf32>
    %133 = arith.addf %125, %132 : vector<8x1xf32>
    %cst_61 = arith.constant 2.000000e+00 : f32
    %134 = vector.broadcast %cst_61 : f32 to vector<8x1xf32>
    %135 = arith.addf %134, %133 : vector<8x1xf32>
    %136 = vector.extract_strided_slice %120 {offsets = [0, 1], sizes = [8, 1], strides = [1, 1]} : vector<8x3xf32> to vector<8x1xf32>
    %137 = vector.extract_strided_slice %120 {offsets = [0, 2], sizes = [8, 1], strides = [1, 1]} : vector<8x3xf32> to vector<8x1xf32>
    %cst_62 = arith.constant 0.000000e+00 : f32
    %138 = vector.broadcast %cst_62 : f32 to vector<8x1xf32>
    %139 = arith.maximumf %137, %138 : vector<8x1xf32>
    %140 = math.absf %137 : vector<8x1xf32>
    %cst_63 = arith.constant 0.000000e+00 : f32
    %141 = vector.broadcast %cst_63 : f32 to vector<8x1xf32>
    %142 = arith.subf %141, %140 : vector<8x1xf32>
    %143 = math.exp %142 : vector<8x1xf32>
    %cst_64 = arith.constant 1.000000e+00 : f32
    %144 = vector.broadcast %cst_64 : f32 to vector<8x1xf32>
    %145 = arith.addf %144, %143 : vector<8x1xf32>
    %146 = math.log %145 : vector<8x1xf32>
    %147 = arith.addf %139, %146 : vector<8x1xf32>
    %cst_65 = arith.constant -2.000000e+00 : f32
    %148 = vector.broadcast %cst_65 : f32 to vector<8x1xf32>
    %149 = arith.divf %148, %135 : vector<8x1xf32>
    %150 = arith.mulf %149, %121 : vector<8x1xf32>
    %151 = math.exp %150 : vector<8x1xf32>
    %cst_66 = arith.constant 1.000000e+00 : f32
    %152 = vector.broadcast %cst_66 : f32 to vector<8x1xf32>
    %153 = arith.subf %151, %152 : vector<8x1xf32>
    %154 = arith.mulf %135, %153 : vector<8x1xf32>
    %155 = math.sqrt %154 : vector<8x1xf32>
    %156 = arith.mulf %147, %155 : vector<8x1xf32>
    %157 = arith.mulf %156, %122 : vector<8x1xf32>
    %158 = arith.addf %136, %157 : vector<8x1xf32>
    %159 = arith.mulf %158, %11 : vector<8x1xf32>
    %c0_67 = arith.constant 0 : index
    %c11_68 = arith.constant 11 : index
    %160 = vector.load %arg6[%c0_67, %c11_68] : memref<8x12xf32, #tpu.memory_space<vmem>>, vector<8x1xf32>
    %c0_69 = arith.constant 0 : index
    %c9 = arith.constant 9 : index
    %161 = vector.load %arg6[%c0_69, %c9] : memref<8x12xf32, #tpu.memory_space<vmem>>, vector<8x1xf32>
    %c2 = arith.constant 2 : index
    %c0_70 = arith.constant 0 : index
    %c0_71 = arith.constant 0 : index
    %162 = vector.load %arg8[%c2, %c0_70, %c0_71] : memref<4x8x2xf32, #tpu.memory_space<vmem>>, vector<1x8x2xf32>
    %163 = vector.shape_cast %162 : vector<1x8x2xf32> to vector<8x2xf32>
    %164 = tpu.concatenate %51, %160, %161, %12, %163 in 1 : vector<8x1xf32>, vector<8x1xf32>, vector<8x1xf32>, vector<8x5xf32>, vector<8x2xf32> -> vector<8x10xf32>
    %cst_72 = arith.constant dense<0.000000e+00> : vector<8x128xf32>
    %165 = tpu.matmul %164, %4, %cst_72 {dimension_numbers = #tpu.dot_dimension_numbers<[1], [0], [0], [1], [0, 0, 1, 1], [], []>} : vector<8x10xf32>, vector<10x128xf32>, vector<8x128xf32> -> vector<8x128xf32>
    %cst_73 = arith.constant dense<0.000000e+00> : vector<8x128xf32>
    %166 = tpu.matmul %88, %5, %cst_73 {dimension_numbers = #tpu.dot_dimension_numbers<[1], [0], [0], [1], [0, 0, 1, 1], [], []>} : vector<8x32xf32>, vector<32x128xf32>, vector<8x128xf32> -> vector<8x128xf32>
    %167 = arith.addf %165, %166 : vector<8x128xf32>
    %168 = vector.broadcast %6 : vector<1x128xf32> to vector<8x128xf32>
    %169 = arith.addf %167, %168 : vector<8x128xf32>
    %170 = vector.extract_strided_slice %169 {offsets = [0, 0], sizes = [8, 32], strides = [1, 1]} : vector<8x128xf32> to vector<8x32xf32>
    %171 = arith.negf %170 : vector<8x32xf32>
    %172 = math.exp %171 : vector<8x32xf32>
    %cst_74 = arith.constant 1.000000e+00 : f32
    %173 = vector.broadcast %cst_74 : f32 to vector<8x32xf32>
    %174 = arith.addf %173, %172 : vector<8x32xf32>
    %175 = arith.divf %173, %174 : vector<8x32xf32>
    %176 = vector.extract_strided_slice %169 {offsets = [0, 32], sizes = [8, 32], strides = [1, 1]} : vector<8x128xf32> to vector<8x32xf32>
    %177 = arith.negf %176 : vector<8x32xf32>
    %178 = math.exp %177 : vector<8x32xf32>
    %cst_75 = arith.constant 1.000000e+00 : f32
    %179 = vector.broadcast %cst_75 : f32 to vector<8x32xf32>
    %180 = arith.addf %179, %178 : vector<8x32xf32>
    %181 = arith.divf %179, %180 : vector<8x32xf32>
    %182 = vector.extract_strided_slice %169 {offsets = [0, 64], sizes = [8, 32], strides = [1, 1]} : vector<8x128xf32> to vector<8x32xf32>
    %183 = math.tanh %182 : vector<8x32xf32>
    %184 = vector.extract_strided_slice %169 {offsets = [0, 96], sizes = [8, 32], strides = [1, 1]} : vector<8x128xf32> to vector<8x32xf32>
    %185 = arith.negf %184 : vector<8x32xf32>
    %186 = math.exp %185 : vector<8x32xf32>
    %cst_76 = arith.constant 1.000000e+00 : f32
    %187 = vector.broadcast %cst_76 : f32 to vector<8x32xf32>
    %188 = arith.addf %187, %186 : vector<8x32xf32>
    %189 = arith.divf %187, %188 : vector<8x32xf32>
    %190 = arith.mulf %181, %86 : vector<8x32xf32>
    %191 = arith.mulf %175, %183 : vector<8x32xf32>
    %192 = arith.addf %190, %191 : vector<8x32xf32>
    %193 = math.tanh %192 : vector<8x32xf32>
    %194 = arith.mulf %189, %193 : vector<8x32xf32>
    %195 = tpu.concatenate %194, %117 in 1 : vector<8x32xf32>, vector<8x32xf32> -> vector<8x64xf32>
    %cst_77 = arith.constant dense<0.000000e+00> : vector<8x128xf32>
    %196 = tpu.matmul %195, %7, %cst_77 {dimension_numbers = #tpu.dot_dimension_numbers<[1], [0], [0], [1], [0, 0, 1, 1], [], []>} : vector<8x64xf32>, vector<64x128xf32>, vector<8x128xf32> -> vector<8x128xf32>
    %197 = vector.broadcast %8 : vector<1x128xf32> to vector<8x128xf32>
    %198 = arith.addf %196, %197 : vector<8x128xf32>
    %199 = vector.extract_strided_slice %198 {offsets = [0, 0], sizes = [8, 32], strides = [1, 1]} : vector<8x128xf32> to vector<8x32xf32>
    %200 = arith.negf %199 : vector<8x32xf32>
    %201 = math.exp %200 : vector<8x32xf32>
    %cst_78 = arith.constant 1.000000e+00 : f32
    %202 = vector.broadcast %cst_78 : f32 to vector<8x32xf32>
    %203 = arith.addf %202, %201 : vector<8x32xf32>
    %204 = arith.divf %202, %203 : vector<8x32xf32>
    %205 = vector.extract_strided_slice %198 {offsets = [0, 32], sizes = [8, 32], strides = [1, 1]} : vector<8x128xf32> to vector<8x32xf32>
    %206 = arith.negf %205 : vector<8x32xf32>
    %207 = math.exp %206 : vector<8x32xf32>
    %cst_79 = arith.constant 1.000000e+00 : f32
    %208 = vector.broadcast %cst_79 : f32 to vector<8x32xf32>
    %209 = arith.addf %208, %207 : vector<8x32xf32>
    %210 = arith.divf %208, %209 : vector<8x32xf32>
    %211 = vector.extract_strided_slice %198 {offsets = [0, 64], sizes = [8, 32], strides = [1, 1]} : vector<8x128xf32> to vector<8x32xf32>
    %212 = math.tanh %211 : vector<8x32xf32>
    %213 = vector.extract_strided_slice %198 {offsets = [0, 96], sizes = [8, 32], strides = [1, 1]} : vector<8x128xf32> to vector<8x32xf32>
    %214 = arith.negf %213 : vector<8x32xf32>
    %215 = math.exp %214 : vector<8x32xf32>
    %cst_80 = arith.constant 1.000000e+00 : f32
    %216 = vector.broadcast %cst_80 : f32 to vector<8x32xf32>
    %217 = arith.addf %216, %215 : vector<8x32xf32>
    %218 = arith.divf %216, %217 : vector<8x32xf32>
    %219 = arith.mulf %210, %115 : vector<8x32xf32>
    %220 = arith.mulf %204, %212 : vector<8x32xf32>
    %221 = arith.addf %219, %220 : vector<8x32xf32>
    %222 = math.tanh %221 : vector<8x32xf32>
    %223 = arith.mulf %218, %222 : vector<8x32xf32>
    %cst_81 = arith.constant dense<0.000000e+00> : vector<8x3xf32>
    %224 = tpu.matmul %223, %9, %cst_81 {dimension_numbers = #tpu.dot_dimension_numbers<[1], [0], [0], [1], [0, 0, 1, 1], [], []>} : vector<8x32xf32>, vector<32x3xf32>, vector<8x3xf32> -> vector<8x3xf32>
    %225 = vector.broadcast %10 : vector<1x3xf32> to vector<8x3xf32>
    %226 = arith.addf %224, %225 : vector<8x3xf32>
    %c0_82 = arith.constant 0 : index
    %c2_83 = arith.constant 2 : index
    %227 = vector.load %arg10[%c0_82, %c2_83] : memref<8x4xf32, #tpu.memory_space<vmem>>, vector<8x1xf32>
    %c0_84 = arith.constant 0 : index
    %c2_85 = arith.constant 2 : index
    %228 = vector.load %arg11[%c0_84, %c2_85] : memref<8x4xf32, #tpu.memory_space<vmem>>, vector<8x1xf32>
    %229 = vector.extract_strided_slice %226 {offsets = [0, 0], sizes = [8, 1], strides = [1, 1]} : vector<8x3xf32> to vector<8x1xf32>
    %cst_86 = arith.constant 0.000000e+00 : f32
    %230 = vector.broadcast %cst_86 : f32 to vector<8x1xf32>
    %231 = arith.maximumf %229, %230 : vector<8x1xf32>
    %232 = math.absf %229 : vector<8x1xf32>
    %cst_87 = arith.constant 0.000000e+00 : f32
    %233 = vector.broadcast %cst_87 : f32 to vector<8x1xf32>
    %234 = arith.subf %233, %232 : vector<8x1xf32>
    %235 = math.exp %234 : vector<8x1xf32>
    %cst_88 = arith.constant 1.000000e+00 : f32
    %236 = vector.broadcast %cst_88 : f32 to vector<8x1xf32>
    %237 = arith.addf %236, %235 : vector<8x1xf32>
    %238 = math.log %237 : vector<8x1xf32>
    %239 = arith.addf %231, %238 : vector<8x1xf32>
    %cst_89 = arith.constant 2.000000e+00 : f32
    %240 = vector.broadcast %cst_89 : f32 to vector<8x1xf32>
    %241 = arith.addf %240, %239 : vector<8x1xf32>
    %242 = vector.extract_strided_slice %226 {offsets = [0, 1], sizes = [8, 1], strides = [1, 1]} : vector<8x3xf32> to vector<8x1xf32>
    %243 = vector.extract_strided_slice %226 {offsets = [0, 2], sizes = [8, 1], strides = [1, 1]} : vector<8x3xf32> to vector<8x1xf32>
    %cst_90 = arith.constant 0.000000e+00 : f32
    %244 = vector.broadcast %cst_90 : f32 to vector<8x1xf32>
    %245 = arith.maximumf %243, %244 : vector<8x1xf32>
    %246 = math.absf %243 : vector<8x1xf32>
    %cst_91 = arith.constant 0.000000e+00 : f32
    %247 = vector.broadcast %cst_91 : f32 to vector<8x1xf32>
    %248 = arith.subf %247, %246 : vector<8x1xf32>
    %249 = math.exp %248 : vector<8x1xf32>
    %cst_92 = arith.constant 1.000000e+00 : f32
    %250 = vector.broadcast %cst_92 : f32 to vector<8x1xf32>
    %251 = arith.addf %250, %249 : vector<8x1xf32>
    %252 = math.log %251 : vector<8x1xf32>
    %253 = arith.addf %245, %252 : vector<8x1xf32>
    %cst_93 = arith.constant -2.000000e+00 : f32
    %254 = vector.broadcast %cst_93 : f32 to vector<8x1xf32>
    %255 = arith.divf %254, %241 : vector<8x1xf32>
    %256 = arith.mulf %255, %227 : vector<8x1xf32>
    %257 = math.exp %256 : vector<8x1xf32>
    %cst_94 = arith.constant 1.000000e+00 : f32
    %258 = vector.broadcast %cst_94 : f32 to vector<8x1xf32>
    %259 = arith.subf %257, %258 : vector<8x1xf32>
    %260 = arith.mulf %241, %259 : vector<8x1xf32>
    %261 = math.sqrt %260 : vector<8x1xf32>
    %262 = arith.mulf %253, %261 : vector<8x1xf32>
    %263 = arith.mulf %262, %228 : vector<8x1xf32>
    %264 = arith.addf %242, %263 : vector<8x1xf32>
    %265 = arith.mulf %264, %11 : vector<8x1xf32>
    %c0_95 = arith.constant 0 : index
    %c10_96 = arith.constant 10 : index
    %266 = vector.load %arg6[%c0_95, %c10_96] : memref<8x12xf32, #tpu.memory_space<vmem>>, vector<8x1xf32>
    %c3 = arith.constant 3 : index
    %c0_97 = arith.constant 0 : index
    %c0_98 = arith.constant 0 : index
    %267 = vector.load %arg8[%c3, %c0_97, %c0_98] : memref<4x8x2xf32, #tpu.memory_space<vmem>>, vector<1x8x2xf32>
    %268 = vector.shape_cast %267 : vector<1x8x2xf32> to vector<8x2xf32>
    %269 = tpu.concatenate %158, %51, %266, %12, %268 in 1 : vector<8x1xf32>, vector<8x1xf32>, vector<8x1xf32>, vector<8x5xf32>, vector<8x2xf32> -> vector<8x10xf32>
    %cst_99 = arith.constant dense<0.000000e+00> : vector<8x128xf32>
    %270 = tpu.matmul %269, %4, %cst_99 {dimension_numbers = #tpu.dot_dimension_numbers<[1], [0], [0], [1], [0, 0, 1, 1], [], []>} : vector<8x10xf32>, vector<10x128xf32>, vector<8x128xf32> -> vector<8x128xf32>
    %cst_100 = arith.constant dense<0.000000e+00> : vector<8x128xf32>
    %271 = tpu.matmul %194, %5, %cst_100 {dimension_numbers = #tpu.dot_dimension_numbers<[1], [0], [0], [1], [0, 0, 1, 1], [], []>} : vector<8x32xf32>, vector<32x128xf32>, vector<8x128xf32> -> vector<8x128xf32>
    %272 = arith.addf %270, %271 : vector<8x128xf32>
    %273 = vector.broadcast %6 : vector<1x128xf32> to vector<8x128xf32>
    %274 = arith.addf %272, %273 : vector<8x128xf32>
    %275 = vector.extract_strided_slice %274 {offsets = [0, 0], sizes = [8, 32], strides = [1, 1]} : vector<8x128xf32> to vector<8x32xf32>
    %276 = arith.negf %275 : vector<8x32xf32>
    %277 = math.exp %276 : vector<8x32xf32>
    %cst_101 = arith.constant 1.000000e+00 : f32
    %278 = vector.broadcast %cst_101 : f32 to vector<8x32xf32>
    %279 = arith.addf %278, %277 : vector<8x32xf32>
    %280 = arith.divf %278, %279 : vector<8x32xf32>
    %281 = vector.extract_strided_slice %274 {offsets = [0, 32], sizes = [8, 32], strides = [1, 1]} : vector<8x128xf32> to vector<8x32xf32>
    %282 = arith.negf %281 : vector<8x32xf32>
    %283 = math.exp %282 : vector<8x32xf32>
    %cst_102 = arith.constant 1.000000e+00 : f32
    %284 = vector.broadcast %cst_102 : f32 to vector<8x32xf32>
    %285 = arith.addf %284, %283 : vector<8x32xf32>
    %286 = arith.divf %284, %285 : vector<8x32xf32>
    %287 = vector.extract_strided_slice %274 {offsets = [0, 64], sizes = [8, 32], strides = [1, 1]} : vector<8x128xf32> to vector<8x32xf32>
    %288 = math.tanh %287 : vector<8x32xf32>
    %289 = vector.extract_strided_slice %274 {offsets = [0, 96], sizes = [8, 32], strides = [1, 1]} : vector<8x128xf32> to vector<8x32xf32>
    %290 = arith.negf %289 : vector<8x32xf32>
    %291 = math.exp %290 : vector<8x32xf32>
    %cst_103 = arith.constant 1.000000e+00 : f32
    %292 = vector.broadcast %cst_103 : f32 to vector<8x32xf32>
    %293 = arith.addf %292, %291 : vector<8x32xf32>
    %294 = arith.divf %292, %293 : vector<8x32xf32>
    %295 = arith.mulf %286, %192 : vector<8x32xf32>
    %296 = arith.mulf %280, %288 : vector<8x32xf32>
    %297 = arith.addf %295, %296 : vector<8x32xf32>
    %298 = math.tanh %297 : vector<8x32xf32>
    %299 = arith.mulf %294, %298 : vector<8x32xf32>
    %300 = tpu.concatenate %299, %223 in 1 : vector<8x32xf32>, vector<8x32xf32> -> vector<8x64xf32>
    %cst_104 = arith.constant dense<0.000000e+00> : vector<8x128xf32>
    %301 = tpu.matmul %300, %7, %cst_104 {dimension_numbers = #tpu.dot_dimension_numbers<[1], [0], [0], [1], [0, 0, 1, 1], [], []>} : vector<8x64xf32>, vector<64x128xf32>, vector<8x128xf32> -> vector<8x128xf32>
    %302 = vector.broadcast %8 : vector<1x128xf32> to vector<8x128xf32>
    %303 = arith.addf %301, %302 : vector<8x128xf32>
    %304 = vector.extract_strided_slice %303 {offsets = [0, 0], sizes = [8, 32], strides = [1, 1]} : vector<8x128xf32> to vector<8x32xf32>
    %305 = arith.negf %304 : vector<8x32xf32>
    %306 = math.exp %305 : vector<8x32xf32>
    %cst_105 = arith.constant 1.000000e+00 : f32
    %307 = vector.broadcast %cst_105 : f32 to vector<8x32xf32>
    %308 = arith.addf %307, %306 : vector<8x32xf32>
    %309 = arith.divf %307, %308 : vector<8x32xf32>
    %310 = vector.extract_strided_slice %303 {offsets = [0, 32], sizes = [8, 32], strides = [1, 1]} : vector<8x128xf32> to vector<8x32xf32>
    %311 = arith.negf %310 : vector<8x32xf32>
    %312 = math.exp %311 : vector<8x32xf32>
    %cst_106 = arith.constant 1.000000e+00 : f32
    %313 = vector.broadcast %cst_106 : f32 to vector<8x32xf32>
    %314 = arith.addf %313, %312 : vector<8x32xf32>
    %315 = arith.divf %313, %314 : vector<8x32xf32>
    %316 = vector.extract_strided_slice %303 {offsets = [0, 64], sizes = [8, 32], strides = [1, 1]} : vector<8x128xf32> to vector<8x32xf32>
    %317 = math.tanh %316 : vector<8x32xf32>
    %318 = vector.extract_strided_slice %303 {offsets = [0, 96], sizes = [8, 32], strides = [1, 1]} : vector<8x128xf32> to vector<8x32xf32>
    %319 = arith.negf %318 : vector<8x32xf32>
    %320 = math.exp %319 : vector<8x32xf32>
    %cst_107 = arith.constant 1.000000e+00 : f32
    %321 = vector.broadcast %cst_107 : f32 to vector<8x32xf32>
    %322 = arith.addf %321, %320 : vector<8x32xf32>
    %323 = arith.divf %321, %322 : vector<8x32xf32>
    %324 = arith.mulf %315, %221 : vector<8x32xf32>
    %325 = arith.mulf %309, %317 : vector<8x32xf32>
    %326 = arith.addf %324, %325 : vector<8x32xf32>
    %327 = math.tanh %326 : vector<8x32xf32>
    %328 = arith.mulf %323, %327 : vector<8x32xf32>
    %cst_108 = arith.constant dense<0.000000e+00> : vector<8x3xf32>
    %329 = tpu.matmul %328, %9, %cst_108 {dimension_numbers = #tpu.dot_dimension_numbers<[1], [0], [0], [1], [0, 0, 1, 1], [], []>} : vector<8x32xf32>, vector<32x3xf32>, vector<8x3xf32> -> vector<8x3xf32>
    %330 = vector.broadcast %10 : vector<1x3xf32> to vector<8x3xf32>
    %331 = arith.addf %329, %330 : vector<8x3xf32>
    %c0_109 = arith.constant 0 : index
    %c3_110 = arith.constant 3 : index
    %332 = vector.load %arg10[%c0_109, %c3_110] : memref<8x4xf32, #tpu.memory_space<vmem>>, vector<8x1xf32>
    %c0_111 = arith.constant 0 : index
    %c3_112 = arith.constant 3 : index
    %333 = vector.load %arg11[%c0_111, %c3_112] : memref<8x4xf32, #tpu.memory_space<vmem>>, vector<8x1xf32>
    %334 = vector.extract_strided_slice %331 {offsets = [0, 0], sizes = [8, 1], strides = [1, 1]} : vector<8x3xf32> to vector<8x1xf32>
    %cst_113 = arith.constant 0.000000e+00 : f32
    %335 = vector.broadcast %cst_113 : f32 to vector<8x1xf32>
    %336 = arith.maximumf %334, %335 : vector<8x1xf32>
    %337 = math.absf %334 : vector<8x1xf32>
    %cst_114 = arith.constant 0.000000e+00 : f32
    %338 = vector.broadcast %cst_114 : f32 to vector<8x1xf32>
    %339 = arith.subf %338, %337 : vector<8x1xf32>
    %340 = math.exp %339 : vector<8x1xf32>
    %cst_115 = arith.constant 1.000000e+00 : f32
    %341 = vector.broadcast %cst_115 : f32 to vector<8x1xf32>
    %342 = arith.addf %341, %340 : vector<8x1xf32>
    %343 = math.log %342 : vector<8x1xf32>
    %344 = arith.addf %336, %343 : vector<8x1xf32>
    %cst_116 = arith.constant 2.000000e+00 : f32
    %345 = vector.broadcast %cst_116 : f32 to vector<8x1xf32>
    %346 = arith.addf %345, %344 : vector<8x1xf32>
    %347 = vector.extract_strided_slice %331 {offsets = [0, 1], sizes = [8, 1], strides = [1, 1]} : vector<8x3xf32> to vector<8x1xf32>
    %348 = vector.extract_strided_slice %331 {offsets = [0, 2], sizes = [8, 1], strides = [1, 1]} : vector<8x3xf32> to vector<8x1xf32>
    %cst_117 = arith.constant 0.000000e+00 : f32
    %349 = vector.broadcast %cst_117 : f32 to vector<8x1xf32>
    %350 = arith.maximumf %348, %349 : vector<8x1xf32>
    %351 = math.absf %348 : vector<8x1xf32>
    %cst_118 = arith.constant 0.000000e+00 : f32
    %352 = vector.broadcast %cst_118 : f32 to vector<8x1xf32>
    %353 = arith.subf %352, %351 : vector<8x1xf32>
    %354 = math.exp %353 : vector<8x1xf32>
    %cst_119 = arith.constant 1.000000e+00 : f32
    %355 = vector.broadcast %cst_119 : f32 to vector<8x1xf32>
    %356 = arith.addf %355, %354 : vector<8x1xf32>
    %357 = math.log %356 : vector<8x1xf32>
    %358 = arith.addf %350, %357 : vector<8x1xf32>
    %cst_120 = arith.constant -2.000000e+00 : f32
    %359 = vector.broadcast %cst_120 : f32 to vector<8x1xf32>
    %360 = arith.divf %359, %346 : vector<8x1xf32>
    %361 = arith.mulf %360, %332 : vector<8x1xf32>
    %362 = math.exp %361 : vector<8x1xf32>
    %cst_121 = arith.constant 1.000000e+00 : f32
    %363 = vector.broadcast %cst_121 : f32 to vector<8x1xf32>
    %364 = arith.subf %362, %363 : vector<8x1xf32>
    %365 = arith.mulf %346, %364 : vector<8x1xf32>
    %366 = math.sqrt %365 : vector<8x1xf32>
    %367 = arith.mulf %358, %366 : vector<8x1xf32>
    %368 = arith.mulf %367, %333 : vector<8x1xf32>
    %369 = arith.addf %347, %368 : vector<8x1xf32>
    %370 = arith.mulf %369, %11 : vector<8x1xf32>
    %371 = tpu.concatenate %52, %159, %265, %370 in 1 : vector<8x1xf32>, vector<8x1xf32>, vector<8x1xf32>, vector<8x1xf32> -> vector<8x4xf32>
    %c0_122 = arith.constant 0 : index
    %c0_123 = arith.constant 0 : index
    %372 = vector.load %arg19[%c0_122, %c0_123] : memref<8x4xf32, #tpu.memory_space<vmem>>, vector<8x4xf32>
    tpu.vector_store %arg19[%c0_122, %c0_123], %371 {strides = array<i32>} : memref<8x4xf32, #tpu.memory_space<vmem>>, vector<8x4xf32>,
    return
  }
  func.func @transform_0(%arg0: i32) -> (i32, i32) {
    %c0_i32 = arith.constant 0 : i32
    %c0_i32_0 = arith.constant 0 : i32
    %c0_i32_1 = arith.constant 0 : i32
    return %c0_i32, %c0_i32_0 : i32, i32
  }
  func.func @transform_1(%arg0: i32) -> (i32, i32) {
    %c0_i32 = arith.constant 0 : i32
    %c0_i32_0 = arith.constant 0 : i32
    %c0_i32_1 = arith.constant 0 : i32
    return %c0_i32, %c0_i32_0 : i32, i32
  }
  func.func @transform_2(%arg0: i32) -> (i32, i32) {
    %c0_i32 = arith.constant 0 : i32
    %c0_i32_0 = arith.constant 0 : i32
    %c0_i32_1 = arith.constant 0 : i32
    return %c0_i32, %c0_i32_0 : i32, i32
  }
  func.func @transform_3(%arg0: i32) -> (i32, i32) {
    %c0_i32 = arith.constant 0 : i32
    %c0_i32_0 = arith.constant 0 : i32
    %c0_i32_1 = arith.constant 0 : i32
    return %c0_i32, %c0_i32_0 : i32, i32
  }
  func.func @transform_4(%arg0: i32) -> (i32, i32) {
    %c0_i32 = arith.constant 0 : i32
    %c0_i32_0 = arith.constant 0 : i32
    %c0_i32_1 = arith.constant 0 : i32
    return %c0_i32, %c0_i32_0 : i32, i32
  }
  func.func @transform_5(%arg0: i32) -> (i32, i32) {
    %c0_i32 = arith.constant 0 : i32
    %c0_i32_0 = arith.constant 0 : i32
    %c0_i32_1 = arith.constant 0 : i32
    return %c0_i32, %c0_i32_0 : i32, i32
  }
  func.func @transform_6(%arg0: i32) -> (i32, i32) {
    %c0_i32 = arith.constant 0 : i32
    %c0_i32_0 = arith.constant 0 : i32
    %c0_i32_1 = arith.constant 0 : i32
    return %c0_i32, %c0_i32_0 : i32, i32
  }
  func.func @transform_7(%arg0: i32) -> (i32, i32, i32) {
    %c0_i32 = arith.constant 0 : i32
    %c0_i32_0 = arith.constant 0 : i32
    %c0_i32_1 = arith.constant 0 : i32
    %c0_i32_2 = arith.constant 0 : i32
    return %c0_i32, %c0_i32_0, %c0_i32_1 : i32, i32, i32
  }
  func.func @transform_8(%arg0: i32) -> (i32, i32) {
    %c0_i32 = arith.constant 0 : i32
    %c0_i32_0 = arith.constant 0 : i32
    %c0_i32_1 = arith.constant 0 : i32
    return %c0_i32, %c0_i32_0 : i32, i32
  }
  func.func @transform_9(%arg0: i32) -> (i32, i32) {
    %c0_i32 = arith.constant 0 : i32
    %c0_i32_0 = arith.constant 0 : i32
    %c0_i32_1 = arith.constant 0 : i32
    return %c0_i32, %c0_i32_0 : i32, i32
  }
  func.func @transform_10(%arg0: i32) -> (i32, i32) {
    %c0_i32 = arith.constant 0 : i32
    %c0_i32_0 = arith.constant 0 : i32
    %c0_i32_1 = arith.constant 0 : i32
    return %c0_i32, %c0_i32_0 : i32, i32
  }
  func.func @transform_11(%arg0: i32) -> (i32, i32) {
    %c0_i32 = arith.constant 0 : i32
    %c0_i32_0 = arith.constant 0 : i32
    %c0_i32_1 = arith.constant 0 : i32
    return %c0_i32, %c0_i32_0 : i32, i32
  }
  func.func @transform_12(%arg0: i32) -> (i32, i32) {
    %c0_i32 = arith.constant 0 : i32
    %c0_i32_0 = arith.constant 0 : i32
    %c0_i32_1 = arith.constant 0 : i32
    return %c0_i32, %c0_i32_0 : i32, i32
  }
  func.func @transform_13(%arg0: i32) -> (i32, i32) {
    %c0_i32 = arith.constant 0 : i32
    %c0_i32_0 = arith.constant 0 : i32
    %c0_i32_1 = arith.constant 0 : i32
    return %c0_i32, %c0_i32_0 : i32, i32
  }
  func.func @transform_14(%arg0: i32) -> (i32, i32) {
    %c0_i32 = arith.constant 0 : i32
    %c0_i32_0 = arith.constant 0 : i32
    %c0_i32_1 = arith.constant 0 : i32
    return %c0_i32, %c0_i32_0 : i32, i32
  }
  func.func @transform_15(%arg0: i32) -> (i32, i32) {
    %c0_i32 = arith.constant 0 : i32
    %c0_i32_0 = arith.constant 0 : i32
    %c0_i32_1 = arith.constant 0 : i32
    return %c0_i32, %c0_i32_0 : i32, i32
  }
  func.func @transform_16(%arg0: i32) -> (i32, i32) {
    %c0_i32 = arith.constant 0 : i32
    %c0_i32_0 = arith.constant 0 : i32
    %c0_i32_1 = arith.constant 0 : i32
    return %c0_i32, %c0_i32_0 : i32, i32
  }
  func.func @transform_17(%arg0: i32) -> (i32, i32) {
    %c0_i32 = arith.constant 0 : i32
    %c0_i32_0 = arith.constant 0 : i32
    %c0_i32_1 = arith.constant 0 : i32
    return %c0_i32, %c0_i32_0 : i32, i32
  }
  func.func @transform_18(%arg0: i32) -> (i32, i32) {
    %c0_i32 = arith.constant 0 : i32
    %c0_i32_0 = arith.constant 0 : i32
    %c0_i32_1 = arith.constant 0 : i32
    return %c0_i32, %c0_i32_0 : i32, i32
  }
}

</mosaic_0001>

<llo_original>
// kernel: div.18
$region0: #{div.18}
  #allocation0 [shape = 's32[1]{0}', space=sflag, size = 0x4, scoped, tag = 'scoped memory for div.18']
  %s0 = inlined_call_operand.vmem [shape: f32[2], index: 0, kind: input, shape index: {}]
  %s1 = inlined_call_operand.vmem [shape: f32[2,4], index: 1, kind: output, shape index: {}]
  // Predicated region
  $region2: #{div.18} parent=0 // pred_check
    _
  $region3: #{div.18} parent=0 // pred_check_branch
    %3 = sbr.rel (0) target = $region5
  $region4: #{div.18} parent=0 // pred_region
    _
  $region5: #{div.18} parent=0 // pred_fallthru
    _
  %v4 = vld [vmem:[%s0] ss:$0 sm:$0xff]
  %6 = vbcast.lane.b32.xlu0 %v4, 256
  %v7 = vpop.permute.xlu0 %6
  %8 = vst [vmem:[%s1] sm:$0x3] %v7

// kernel: deepar_forward.3
$region0: #{deepar_forward.3}
  #allocation0 [shape = 'u32[]', space=smem, size = 0x4, offset = 0x4, fixed_abs, tag = 'smem constant byte address 0x4 - core index']
  #allocation1 [shape = 'u32[144,128]{1,0:T(1,128)}', space=vmem, size = 0x12000, scoped, tag = 'internal scratch']
  %s0 = inlined_call_operand.vmem [shape: f32[8,32], index: 0, kind: input, shape index: {}]
  %s1 = inlined_call_operand.vmem [shape: f32[8,32], index: 1, kind: input, shape index: {}]
  %s2 = inlined_call_operand.vmem [shape: f32[8,32], index: 2, kind: input, shape index: {}]
  %s3 = inlined_call_operand.vmem [shape: f32[8,32], index: 3, kind: input, shape index: {}]
  %s4 = inlined_call_operand.vmem [shape: f32[8,3], index: 4, kind: input, shape index: {}]
  %s5 = inlined_call_operand.vmem [shape: f32[8,12], index: 5, kind: input, shape index: {}]
  %s6 = inlined_call_operand.vmem [shape: f32[8,5], index: 6, kind: input, shape index: {}]
  %s7 = inlined_call_operand.vmem [shape: f32[4,8,2], index: 7, kind: input, shape index: {}]
  %s8 = inlined_call_operand.vmem [shape: f32[8,1], index: 8, kind: input, shape index: {}]
  %s9 = inlined_call_operand.vmem [shape: f32[8,4], index: 9, kind: input, shape index: {}]
  %s10 = inlined_call_operand.vmem [shape: f32[8,4], index: 10, kind: input, shape index: {}]
  %s11 = inlined_call_operand.vmem [shape: f32[10,128], index: 11, kind: input, shape index: {}]
  %s12 = inlined_call_operand.vmem [shape: f32[32,128], index: 12, kind: input, shape index: {}]
  %s13 = inlined_call_operand.vmem [shape: f32[1,128], index: 13, kind: input, shape index: {}]
  %s14 = inlined_call_operand.vmem [shape: f32[64,128], index: 14, kind: input, shape index: {}]
  %s15 = inlined_call_operand.vmem [shape: f32[1,128], index: 15, kind: input, shape index: {}]
  %s16 = inlined_call_operand.vmem [shape: f32[32,3], index: 16, kind: input, shape index: {}]
  %s17 = inlined_call_operand.vmem [shape: f32[1,3], index: 17, kind: input, shape index: {}]
  %s18 = inlined_call_operand.hbm [shape: f32[8,4], index: 18, kind: output, shape index: {}]
  %s19 = sld [smem:[#allocation0]]
  $region82: #{deepar_forward.3} parent=0
    _
  %s21 = ssub.s32 1, %s19
  %s22 = scalar_select 0, %s21, %s19
  $region1: #{deepar_forward.3} parent=0
    #allocation2 [shape = 'u8[4096]{0}', space=vmem, size = 0x1000, scoped, tag = 'output window, operand 0, single buffered']
    #allocation3 [shape = 's32[1]{0}', space=sflag, size = 0x4, scoped, tag = 'scoped memory for deepar_forward.3']
    %23 = vsyncpa [#allocation3], 0
    // Predicated region
    $region2: #{deepar_forward.3} parent=1 // pred_check
      _
    $region3: #{deepar_forward.3} parent=1 // pred_check_branch
      %25 = sbr.rel (0) target = $region5
    $region4: #{deepar_forward.3} parent=1 // pred_region
      _
    $region5: #{deepar_forward.3} parent=1 // pred_fallthru
      _
    // Predicated region
    $region6: #{deepar_forward.3} parent=1 // pred_check
      _
    $region7: #{deepar_forward.3} parent=1 // pred_check_branch
      %27 = sbr.rel (0) target = $region9
    $region8: #{deepar_forward.3} parent=1 // pred_region
      _
    $region9: #{deepar_forward.3} parent=1 // pred_fallthru
      _
    // Predicated region
    $region10: #{deepar_forward.3} parent=1 // pred_check
      _
    $region11: #{deepar_forward.3} parent=1 // pred_check_branch
      %29 = sbr.rel (0) target = $region13
    $region12: #{deepar_forward.3} parent=1 // pred_region
      _
    $region13: #{deepar_forward.3} parent=1 // pred_fallthru
      _
    // Predicated region
    $region14: #{deepar_forward.3} parent=1 // pred_check
      _
    $region15: #{deepar_forward.3} parent=1 // pred_check_branch
      %31 = sbr.rel (0) target = $region17
    $region16: #{deepar_forward.3} parent=1 // pred_region
      _
    $region17: #{deepar_forward.3} parent=1 // pred_fallthru
      _
    // Predicated region
    $region18: #{deepar_forward.3} parent=1 // pred_check
      _
    $region19: #{deepar_forward.3} parent=1 // pred_check_branch
      %33 = sbr.rel (0) target = $region21
    $region20: #{deepar_forward.3} parent=1 // pred_region
      _
    $region21: #{deepar_forward.3} parent=1 // pred_fallthru
      _
    // Predicated region
    $region22: #{deepar_forward.3} parent=1 // pred_check
      _
    $region23: #{deepar_forward.3} parent=1 // pred_check_branch
      %35 = sbr.rel (0) target = $region25
    $region24: #{deepar_forward.3} parent=1 // pred_region
      _
    $region25: #{deepar_forward.3} parent=1 // pred_fallthru
      _
    // Predicated region
    $region26: #{deepar_forward.3} parent=1 // pred_check
      _
    $region27: #{deepar_forward.3} parent=1 // pred_check_branch
      %37 = sbr.rel (0) target = $region29
    $region28: #{deepar_forward.3} parent=1 // pred_region
      _
    $region29: #{deepar_forward.3} parent=1 // pred_fallthru
      _
    // Predicated region
    $region30: #{deepar_forward.3} parent=1 // pred_check
      _
    $region31: #{deepar_forward.3} parent=1 // pred_check_branch
      %39 = sbr.rel (0) target = $region33
    $region32: #{deepar_forward.3} parent=1 // pred_region
      _
    $region33: #{deepar_forward.3} parent=1 // pred_fallthru
      _
    // Predicated region
    $region34: #{deepar_forward.3} parent=1 // pred_check
      _
    $region35: #{deepar_forward.3} parent=1 // pred_check_branch
      %41 = sbr.rel (0) target = $region37
    $region36: #{deepar_forward.3} parent=1 // pred_region
      _
    $region37: #{deepar_forward.3} parent=1 // pred_fallthru
      _
    // Predicated region
    $region38: #{deepar_forward.3} parent=1 // pred_check
      _
    $region39: #{deepar_forward.3} parent=1 // pred_check_branch
      %43 = sbr.rel (0) target = $region41
    $region40: #{deepar_forward.3} parent=1 // pred_region
      _
    $region41: #{deepar_forward.3} parent=1 // pred_fallthru
      _
    // Predicated region
    $region42: #{deepar_forward.3} parent=1 // pred_check
      _
    $region43: #{deepar_forward.3} parent=1 // pred_check_branch
      %45 = sbr.rel (0) target = $region45
    $region44: #{deepar_forward.3} parent=1 // pred_region
      _
    $region45: #{deepar_forward.3} parent=1 // pred_fallthru
      _
    // Predicated region
    $region46: #{deepar_forward.3} parent=1 // pred_check
      _
    $region47: #{deepar_forward.3} parent=1 // pred_check_branch
      %47 = sbr.rel (0) target = $region49
    $region48: #{deepar_forward.3} parent=1 // pred_region
      _
    $region49: #{deepar_forward.3} parent=1 // pred_fallthru
      _
    // Predicated region
    $region50: #{deepar_forward.3} parent=1 // pred_check
      _
    $region51: #{deepar_forward.3} parent=1 // pred_check_branch
      %49 = sbr.rel (0) target = $region53
    $region52: #{deepar_forward.3} parent=1 // pred_region
      _
    $region53: #{deepar_forward.3} parent=1 // pred_fallthru
      _
    // Predicated region
    $region54: #{deepar_forward.3} parent=1 // pred_check
      _
    $region55: #{deepar_forward.3} parent=1 // pred_check_branch
      %51 = sbr.rel (0) target = $region57
    $region56: #{deepar_forward.3} parent=1 // pred_region
      _
    $region57: #{deepar_forward.3} parent=1 // pred_fallthru
      _
    // Predicated region
    $region58: #{deepar_forward.3} parent=1 // pred_check
      _
    $region59: #{deepar_forward.3} parent=1 // pred_check_branch
      %53 = sbr.rel (0) target = $region61
    $region60: #{deepar_forward.3} parent=1 // pred_region
      _
    $region61: #{deepar_forward.3} parent=1 // pred_fallthru
      _
    // Predicated region
    $region62: #{deepar_forward.3} parent=1 // pred_check
      _
    $region63: #{deepar_forward.3} parent=1 // pred_check_branch
      %55 = sbr.rel (0) target = $region65
    $region64: #{deepar_forward.3} parent=1 // pred_region
      _
    $region65: #{deepar_forward.3} parent=1 // pred_fallthru
      _
    // Predicated region
    $region66: #{deepar_forward.3} parent=1 // pred_check
      _
    $region67: #{deepar_forward.3} parent=1 // pred_check_branch
      %57 = sbr.rel (0) target = $region69
    $region68: #{deepar_forward.3} parent=1 // pred_region
      _
    $region69: #{deepar_forward.3} parent=1 // pred_fallthru
      _
    // Predicated region
    $region70: #{deepar_forward.3} parent=1 // pred_check
      _
    $region71: #{deepar_forward.3} parent=1 // pred_check_branch
      %59 = sbr.rel (0) target = $region73
    $region72: #{deepar_forward.3} parent=1 // pred_region
      _
    $region73: #{deepar_forward.3} parent=1 // pred_fallthru
      _
    %v60 = vld [vmem:[%s0] sm:$0xff]
    %v61 = vld [vmem:[%s1] sm:$0xff]
    %v62 = vld [vmem:[%s2] sm:$0xff]
    %v63 = vld [vmem:[%s3] sm:$0xff]
    %v64 = vld [vmem:[%s11] sm:$0xff]
    %v65 = vld [vmem:[%s11 + $0x8] sm:$0x3]
    %v66 = vld [vmem:[%s12] sm:$0xff]
    %v67 = vld [vmem:[%s12 + $0x8] sm:$0xff]
    %v68 = vld [vmem:[%s12 + $0x10] sm:$0xff]
    %v69 = vld [vmem:[%s12 + $0x18] sm:$0xff]
    %v70 = vld [vmem:[%s13] sm:$0x1]
    %v71 = vld [vmem:[%s14] sm:$0xff]
    %v72 = vld [vmem:[%s14 + $0x8] sm:$0xff]
    %v73 = vld [vmem:[%s14 + $0x10] sm:$0xff]
    %v74 = vld [vmem:[%s14 + $0x18] sm:$0xff]
    %v75 = vld [vmem:[%s14 + $0x20] sm:$0xff]
    %v76 = vld [vmem:[%s14 + $0x28] sm:$0xff]
    %v77 = vld [vmem:[%s14 + $0x30] sm:$0xff]
    %v78 = vld [vmem:[%s14 + $0x38] sm:$0xff]
    %v79 = vld [vmem:[%s15] sm:$0x1]
    %v80 = vld [vmem:[%s16] sm:$0xff]
    %v81 = vld [vmem:[%s16 + $0x8] sm:$0xff]
    %v82 = vld [vmem:[%s16 + $0x10] sm:$0xff]
    %v83 = vld [vmem:[%s16 + $0x18] sm:$0xff]
    %v84 = vld [vmem:[%s17] sm:$0x1]
    %v85 = vld [vmem:[%s8] sm:$0xff]
    %v86 = vld [vmem:[%s6] sm:$0xff]
    %v87 = vld [vmem:[%s4] sm:$0xff]
    %v88 = vld [vmem:[%s9] sm:$0xff]
    %v89 = vld [vmem:[%s10] sm:$0xff]
    %v90 = vmax.f32 %v87, 0.0
    %v91 = vand.u32 2147483647, %v87
    %v92 = vsub.f32 0.0, %v91
    %v93 = vmul.f32 %v92, 1.442695
    %v94 = vpow.pop %v93
    %v95 = vadd.f32 %v94, 1.0
    %v96 = vlog2.pop %v95
    %v97 = vmul.f32 %v96, 0.6931472
    %v98 = vadd.f32 %v90, %v97
    %v99 = vadd.f32 %v98, 2.0
    %v100 = vrcp.pop %v99
    %v101 = vmul.f32 -2.0, %v100
    %v102 = vmul.f32 %v101, %v88
    %v103 = vmul.f32 %v102, 1.442695
    %v104 = vpow.pop %v103
    %v105 = vsub.f32 %v104, 1.0
    %v106 = vmul.f32 %v99, %v105
    %v107 = vrsqrt.pop %v106
    %v108 = vmul.f32 %v106, %v107
    %vm109 = vcmp.eq.f32.partialorder %v106, inf
    %v110 = vsel %vm109, %v106, %v108
    %vm111 = vcmp.eq.f32.partialorder %v106, 0.0
    %v112 = vand.u32 %v106, 2147483648
    %v113 = vsel %vm111, %v112, %v110
    %115 = vrot.lane.b32.xlu0 %v113, 2
    %v116 = vpop.permute.xlu0 %115
    %v118 = vmul.f32 %v98, %v116
    %120 = vrot.lane.b32.xlu0 %v89, 2
    %v121 = vpop.permute.xlu0 %120
    %v123 = vmul.f32 %v118, %v121
    %125 = vrot.lane.b32.xlu0 %v123, 127
    %v126 = vpop.permute.xlu0 %125
    %v128 = vadd.f32 %v87, %v126
    %130 = vrot.lane.b32.xlu0 %v85, 1
    %v131 = vpop.permute.xlu0 %130
    %v133 = vmul.f32 %v128, %v131
    %v134 = vld [vmem:[%s5] sm:$0xff]
    %s135 = scalar_lea.vmem %s7, 8
    %v136 = vld [vmem:[%s135] sm:$0xff]
    %138 = vrot.lane.b32.xlu0 %v134, 117
    %v139 = vpop.permute.xlu0 %138
    %141 = vrot.lane.b32.xlu0 %v134, 119
    %v142 = vpop.permute.xlu0 %141
    %144 = vrot.lane.b32.xlu0 %v134, 122
    %v145 = vpop.permute.xlu0 %144
    %148 = vrot.lane.b32.xlu0 %v86, 3
    %v149 = vpop.permute.xlu0 %148
    %152 = vrot.lane.b32.xlu0 %v136, 8
    %v153 = vpop.permute.xlu0 %152
    %vm155 = vcmask 7168
    %v156 = vsel %vm155, %v139, %v142
    %vm157 = vcmask 15360
    %v158 = vsel %vm157, %v156, %v145
    %vm159 = vcmask 23552
    %v160 = vsel %vm159, %v158, %v149
    %vm161 = vcmask 64512
    %v162 = vsel %vm161, %v160, %v153
    %vm163 = vcmask 261120
    %v165 = vsel %vm163, %v60, 0
    %167 = vmatprep.subr.mxu0 0.0
    %168 = vmatpush1.msra.mxu0 0.0
    %169 = vmatprep.subr.mxu0 0.0
    %170 = vmatpush1.msra.mxu0 0.0
    %171 = vmatprep.subr.mxu0 0.0
    %172 = vmatpush1.msra.mxu0 0.0
    %173 = vmatprep.subr.mxu0 0.0
    %174 = vmatpush1.msra.mxu0 0.0
    %175 = vmatprep.subr.mxu0 0.0
    %176 = vmatpush1.msra.mxu0 0.0
    %177 = vmatprep.subr.mxu0 0.0
    %178 = vmatpush1.msra.mxu0 0.0
    %179 = vmatprep.subr.mxu0 0.0
    %180 = vmatpush1.msra.mxu0 0.0
    %181 = vmatprep.subr.mxu0 0.0
    %182 = vmatpush1.msra.mxu0 0.0
    %183 = vmatprep.subr.mxu0 0.0
    %184 = vmatpush1.msra.mxu0 0.0
    %185 = vmatprep.subr.mxu0 0.0
    %186 = vmatpush1.msra.mxu0 0.0
    %187 = vmatprep.subr.mxu0 0.0
    %188 = vmatpush1.msra.mxu0 0.0
    %189 = vmatprep.subr.mxu0 0.0
    %190 = vmatpush1.msra.mxu0 0.0
    %191 = vmatprep.subr.mxu0 0.0
    %192 = vmatpush1.msra.mxu0 %v69
    %193 = vmatprep.subr.mxu0 0.0
    %194 = vmatpush1.msra.mxu0 %v68
    %195 = vmatprep.subr.mxu0 0.0
    %196 = vmatpush1.msra.mxu0 %v67
    %197 = vmatprep.subr.mxu0 0.0
    %198 = vmatpush1.msra.mxu0 %v66
    %199 = vmatprep.subr.mxu0 0.0
    %200 = vmatpush2.msra.mxu0 0.0
    %201 = vmatprep.subr.mxu0 0.0
    %202 = vmatpush2.msra.mxu0 0.0
    %203 = vmatprep.subr.mxu0 0.0
    %204 = vmatpush2.msra.mxu0 0.0
    %205 = vmatprep.subr.mxu0 0.0
    %206 = vmatpush2.msra.mxu0 0.0
    %207 = vmatprep.subr.mxu0 0.0
    %208 = vmatpush2.msra.mxu0 0.0
    %209 = vmatprep.subr.mxu0 0.0
    %210 = vmatpush2.msra.mxu0 0.0
    %211 = vmatprep.subr.mxu0 0.0
    %212 = vmatpush2.msra.mxu0 0.0
    %213 = vmatprep.subr.mxu0 0.0
    %214 = vmatpush2.msra.mxu0 0.0
    %215 = vmatprep.subr.mxu0 0.0
    %216 = vmatpush2.msra.mxu0 0.0
    %217 = vmatprep.subr.mxu0 0.0
    %218 = vmatpush2.msra.mxu0 0.0
    %219 = vmatprep.subr.mxu0 0.0
    %220 = vmatpush2.msra.mxu0 0.0
    %221 = vmatprep.subr.mxu0 0.0
    %222 = vmatpush2.msra.mxu0 0.0
    %223 = vmatprep.subr.mxu0 0.0
    %224 = vmatpush2.msra.mxu0 0.0
    %225 = vmatprep.subr.mxu0 0.0
    %226 = vmatpush2.msra.mxu0 0.0
    %227 = vmatprep.subr.mxu0 0.0
    %228 = vmatpush2.msra.mxu0 0.0
    %229 = vmatprep.subr.mxu0 0.0
    %230 = vmatpush2.msra.mxu0 0.0
    %231 = vmatprep.mubr.f32.mxu0 0.0
    %232 = vmatmul.mubr.f32.gmra.mxu0 %v165
    %v233 = vpop.f32.mrf.mxu0
    %v234 = vadd.f32 0.0, %v233
    %v235 = vpop.f32.mrf.mxu0
    %236 = vdwg.mxu0
    %vm237 = vcmask 80896
    %v239 = vsel %vm237, %v162, 0
    %vm241 = vcmask 1041408
    %v243 = vsel %vm241, %v65, 0
    %245 = vmatprep.subr.mxu0 0.0
    %246 = vmatpush1.msra.mxu0 0.0
    %247 = vmatprep.subr.mxu0 0.0
    %248 = vmatpush1.msra.mxu0 0.0
    %249 = vmatprep.subr.mxu0 0.0
    %250 = vmatpush1.msra.mxu0 0.0
    %251 = vmatprep.subr.mxu0 0.0
    %252 = vmatpush1.msra.mxu0 0.0
    %253 = vmatprep.subr.mxu0 0.0
    %254 = vmatpush1.msra.mxu0 0.0
    %255 = vmatprep.subr.mxu0 0.0
    %256 = vmatpush1.msra.mxu0 0.0
    %257 = vmatprep.subr.mxu0 0.0
    %258 = vmatpush1.msra.mxu0 0.0
    %259 = vmatprep.subr.mxu0 0.0
    %260 = vmatpush1.msra.mxu0 0.0
    %261 = vmatprep.subr.mxu0 0.0
    %262 = vmatpush1.msra.mxu0 0.0
    %263 = vmatprep.subr.mxu0 0.0
    %264 = vmatpush1.msra.mxu0 0.0
    %265 = vmatprep.subr.mxu0 0.0
    %266 = vmatpush1.msra.mxu0 0.0
    %267 = vmatprep.subr.mxu0 0.0
    %268 = vmatpush1.msra.mxu0 0.0
    %269 = vmatprep.subr.mxu0 0.0
    %270 = vmatpush1.msra.mxu0 0.0
    %271 = vmatprep.subr.mxu0 0.0
    %272 = vmatpush1.msra.mxu0 0.0
    %273 = vmatprep.subr.mxu0 0.0
    %274 = vmatpush1.msra.mxu0 %v243
    %275 = vmatprep.subr.mxu0 0.0
    %276 = vmatpush1.msra.mxu0 %v64
    %277 = vmatprep.subr.mxu0 0.0
    %278 = vmatpush2.msra.mxu0 0.0
    %279 = vmatprep.subr.mxu0 0.0
    %280 = vmatpush2.msra.mxu0 0.0
    %281 = vmatprep.subr.mxu0 0.0
    %282 = vmatpush2.msra.mxu0 0.0
    %283 = vmatprep.subr.mxu0 0.0
    %284 = vmatpush2.msra.mxu0 0.0
    %285 = vmatprep.subr.mxu0 0.0
    %286 = vmatpush2.msra.mxu0 0.0
    %287 = vmatprep.subr.mxu0 0.0
    %288 = vmatpush2.msra.mxu0 0.0
    %289 = vmatprep.subr.mxu0 0.0
    %290 = vmatpush2.msra.mxu0 0.0
    %291 = vmatprep.subr.mxu0 0.0
    %292 = vmatpush2.msra.mxu0 0.0
    %293 = vmatprep.subr.mxu0 0.0
    %294 = vmatpush2.msra.mxu0 0.0
    %295 = vmatprep.subr.mxu0 0.0
    %296 = vmatpush2.msra.mxu0 0.0
    %297 = vmatprep.subr.mxu0 0.0
    %298 = vmatpush2.msra.mxu0 0.0
    %299 = vmatprep.subr.mxu0 0.0
    %300 = vmatpush2.msra.mxu0 0.0
    %301 = vmatprep.subr.mxu0 0.0
    %302 = vmatpush2.msra.mxu0 0.0
    %303 = vmatprep.subr.mxu0 0.0
    %304 = vmatpush2.msra.mxu0 0.0
    %305 = vmatprep.subr.mxu0 0.0
    %306 = vmatpush2.msra.mxu0 0.0
    %307 = vmatprep.subr.mxu0 0.0
    %308 = vmatpush2.msra.mxu0 0.0
    %309 = vmatprep.mubr.f32.mxu0 0.0
    %310 = vmatmul.mubr.f32.gmra.mxu0 %v239
    %v311 = vpop.f32.mrf.mxu0
    %v312 = vadd.f32 %v234, %v311
    %v313 = vpop.f32.mrf.mxu0
    %314 = vdwg.mxu0
    %v316 = vlaneseq
    %v317 = vshrl.u32 %v316, 7
    %v318 = vsub.s32 0, %v317
    %v319 = vrot.slane %v70, %v318
    %v321 = vadd.f32 %v312, %v319
    %v322 = vxor.u32 %v321, 2147483648
    %v323 = vmul.f32 %v322, 1.442695
    %v324 = vpow.pop %v323
    %v325 = vadd.f32 %v324, 1.0
    %v326 = vrcp.pop %v325
    %v327 = vmul.f32 1.0, %v326
    %v328 = vtanh.pop %v321
    %330 = vrot.lane.b32.xlu0 %v61, 32
    %v331 = vpop.permute.xlu0 %330
    %v333 = vmul.f32 %v327, %v331
    %335 = vrot.lane.b32.xlu0 %v328, 64
    %v336 = vpop.permute.xlu0 %335
    %v338 = vmul.f32 %v327, %v336
    %340 = vrot.lane.b32.xlu0 %v338, 32
    %v341 = vpop.permute.xlu0 %340
    %v343 = vadd.f32 %v333, %v341
    %v344 = vtanh.pop %v343
    %346 = vrot.lane.b32.xlu0 %v344, 64
    %v347 = vpop.permute.xlu0 %346
    %v349 = vmul.f32 %v327, %v347
    %351 = vrot.lane.b32.xlu0 %v349, 32
    %v352 = vpop.permute.xlu0 %351
    %355 = vrot.lane.b32.xlu0 %v62, 32
    %v356 = vpop.permute.xlu0 %355
    %v358 = vsel %vm163, %v352, %v356
    %v360 = vlaneseq
    %v361 = vshrl.u32 %v360, 7
    %v362 = vsub.s32 0, %v361
    %v363 = vrot.slane %v79, %v362
    %vm365 = vcmask 523264
    %v367 = vsel %vm365, %v358, 0
    %369 = vmatprep.subr.mxu0 0.0
    %370 = vmatpush1.msra.mxu0 0.0
    %371 = vmatprep.subr.mxu0 0.0
    %372 = vmatpush1.msra.mxu0 0.0
    %373 = vmatprep.subr.mxu0 0.0
    %374 = vmatpush1.msra.mxu0 0.0
    %375 = vmatprep.subr.mxu0 0.0
    %376 = vmatpush1.msra.mxu0 0.0
    %377 = vmatprep.subr.mxu0 0.0
    %378 = vmatpush1.msra.mxu0 0.0
    %379 = vmatprep.subr.mxu0 0.0
    %380 = vmatpush1.msra.mxu0 0.0
    %381 = vmatprep.subr.mxu0 0.0
    %382 = vmatpush1.msra.mxu0 0.0
    %383 = vmatprep.subr.mxu0 0.0
    %384 = vmatpush1.msra.mxu0 0.0
    %385 = vmatprep.subr.mxu0 0.0
    %386 = vmatpush1.msra.mxu0 %v78
    %387 = vmatprep.subr.mxu0 0.0
    %388 = vmatpush1.msra.mxu0 %v77
    %389 = vmatprep.subr.mxu0 0.0
    %390 = vmatpush1.msra.mxu0 %v76
    %391 = vmatprep.subr.mxu0 0.0
    %392 = vmatpush1.msra.mxu0 %v75
    %393 = vmatprep.subr.mxu0 0.0
    %394 = vmatpush1.msra.mxu0 %v74
    %395 = vmatprep.subr.mxu0 0.0
    %396 = vmatpush1.msra.mxu0 %v73
    %397 = vmatprep.subr.mxu0 0.0
    %398 = vmatpush1.msra.mxu0 %v72
    %399 = vmatprep.subr.mxu0 0.0
    %400 = vmatpush1.msra.mxu0 %v71
    %401 = vmatprep.subr.mxu0 0.0
    %402 = vmatpush2.msra.mxu0 0.0
    %403 = vmatprep.subr.mxu0 0.0
    %404 = vmatpush2.msra.mxu0 0.0
    %405 = vmatprep.subr.mxu0 0.0
    %406 = vmatpush2.msra.mxu0 0.0
    %407 = vmatprep.subr.mxu0 0.0
    %408 = vmatpush2.msra.mxu0 0.0
    %409 = vmatprep.subr.mxu0 0.0
    %410 = vmatpush2.msra.mxu0 0.0
    %411 = vmatprep.subr.mxu0 0.0
    %412 = vmatpush2.msra.mxu0 0.0
    %413 = vmatprep.subr.mxu0 0.0
    %414 = vmatpush2.msra.mxu0 0.0
    %415 = vmatprep.subr.mxu0 0.0
    %416 = vmatpush2.msra.mxu0 0.0
    %417 = vmatprep.subr.mxu0 0.0
    %418 = vmatpush2.msra.mxu0 0.0
    %419 = vmatprep.subr.mxu0 0.0
    %420 = vmatpush2.msra.mxu0 0.0
    %421 = vmatprep.subr.mxu0 0.0
    %422 = vmatpush2.msra.mxu0 0.0
    %423 = vmatprep.subr.mxu0 0.0
    %424 = vmatpush2.msra.mxu0 0.0
    %425 = vmatprep.subr.mxu0 0.0
    %426 = vmatpush2.msra.mxu0 0.0
    %427 = vmatprep.subr.mxu0 0.0
    %428 = vmatpush2.msra.mxu0 0.0
    %429 = vmatprep.subr.mxu0 0.0
    %430 = vmatpush2.msra.mxu0 0.0
    %431 = vmatprep.subr.mxu0 0.0
    %432 = vmatpush2.msra.mxu0 0.0
    %433 = vmatprep.mubr.f32.mxu0 0.0
    %434 = vmatmul.mubr.f32.gmra.mxu0 %v367
    %v435 = vpop.f32.mrf.mxu0
    %v436 = vadd.f32 %v363, %v435
    %v437 = vpop.f32.mrf.mxu0
    %438 = vdwg.mxu0
    %v439 = vxor.u32 %v436, 2147483648
    %v440 = vmul.f32 %v439, 1.442695
    %v441 = vpow.pop %v440
    %v442 = vadd.f32 %v441, 1.0
    %v443 = vrcp.pop %v442
    %v444 = vmul.f32 1.0, %v443
    %v445 = vtanh.pop %v436
    %447 = vrot.lane.b32.xlu0 %v63, 32
    %v448 = vpop.permute.xlu0 %447
    %v450 = vmul.f32 %v444, %v448
    %452 = vrot.lane.b32.xlu0 %v445, 64
    %v453 = vpop.permute.xlu0 %452
    %v455 = vmul.f32 %v444, %v453
    %457 = vrot.lane.b32.xlu0 %v455, 32
    %v458 = vpop.permute.xlu0 %457
    %v460 = vadd.f32 %v450, %v458
    %v461 = vtanh.pop %v460
    %463 = vrot.lane.b32.xlu0 %v461, 64
    %v464 = vpop.permute.xlu0 %463
    %v466 = vmul.f32 %v444, %v464
    %v468 = vlaneseq
    %v469 = vshrl.u32 %v468, 7
    %v470 = vsub.s32 0, %v469
    %v471 = vrot.slane %v84, %v470
    %474 = vrot.lane.b32.xlu0 %v466, 32
    %v475 = vpop.permute.xlu0 %474
    %v476 = vsel %vm163, %v475, 0
    %478 = vmatprep.subr.mxu0 0.0
    %479 = vmatpush1.msra.mxu0 0.0
    %480 = vmatprep.subr.mxu0 0.0
    %481 = vmatpush1.msra.mxu0 0.0
    %482 = vmatprep.subr.mxu0 0.0
    %483 = vmatpush1.msra.mxu0 0.0
    %484 = vmatprep.subr.mxu0 0.0
    %485 = vmatpush1.msra.mxu0 0.0
    %486 = vmatprep.subr.mxu0 0.0
    %487 = vmatpush1.msra.mxu0 0.0
    %488 = vmatprep.subr.mxu0 0.0
    %489 = vmatpush1.msra.mxu0 0.0
    %490 = vmatprep.subr.mxu0 0.0
    %491 = vmatpush1.msra.mxu0 0.0
    %492 = vmatprep.subr.mxu0 0.0
    %493 = vmatpush1.msra.mxu0 0.0
    %494 = vmatprep.subr.mxu0 0.0
    %495 = vmatpush1.msra.mxu0 0.0
    %496 = vmatprep.subr.mxu0 0.0
    %497 = vmatpush1.msra.mxu0 0.0
    %498 = vmatprep.subr.mxu0 0.0
    %499 = vmatpush1.msra.mxu0 0.0
    %500 = vmatprep.subr.mxu0 0.0
    %501 = vmatpush1.msra.mxu0 0.0
    %502 = vmatprep.subr.mxu0 0.0
    %503 = vmatpush1.msra.mxu0 %v83
    %504 = vmatprep.subr.mxu0 0.0
    %505 = vmatpush1.msra.mxu0 %v82
    %506 = vmatprep.subr.mxu0 0.0
    %507 = vmatpush1.msra.mxu0 %v81
    %508 = vmatprep.subr.mxu0 0.0
    %509 = vmatpush1.msra.mxu0 %v80
    %510 = vmatprep.subr.mxu0 0.0
    %511 = vmatpush2.msra.mxu0 0.0
    %512 = vmatprep.subr.mxu0 0.0
    %513 = vmatpush2.msra.mxu0 0.0
    %514 = vmatprep.subr.mxu0 0.0
    %515 = vmatpush2.msra.mxu0 0.0
    %516 = vmatprep.subr.mxu0 0.0
    %517 = vmatpush2.msra.mxu0 0.0
    %518 = vmatprep.subr.mxu0 0.0
    %519 = vmatpush2.msra.mxu0 0.0
    %520 = vmatprep.subr.mxu0 0.0
    %521 = vmatpush2.msra.mxu0 0.0
    %522 = vmatprep.subr.mxu0 0.0
    %523 = vmatpush2.msra.mxu0 0.0
    %524 = vmatprep.subr.mxu0 0.0
    %525 = vmatpush2.msra.mxu0 0.0
    %526 = vmatprep.subr.mxu0 0.0
    %527 = vmatpush2.msra.mxu0 0.0
    %528 = vmatprep.subr.mxu0 0.0
    %529 = vmatpush2.msra.mxu0 0.0
    %530 = vmatprep.subr.mxu0 0.0
    %531 = vmatpush2.msra.mxu0 0.0
    %532 = vmatprep.subr.mxu0 0.0
    %533 = vmatpush2.msra.mxu0 0.0
    %534 = vmatprep.subr.mxu0 0.0
    %535 = vmatpush2.msra.mxu0 0.0
    %536 = vmatprep.subr.mxu0 0.0
    %537 = vmatpush2.msra.mxu0 0.0
    %538 = vmatprep.subr.mxu0 0.0
    %539 = vmatpush2.msra.mxu0 0.0
    %540 = vmatprep.subr.mxu0 0.0
    %541 = vmatpush2.msra.mxu0 0.0
    %542 = vmatprep.mubr.f32.mxu0 0.0
    %543 = vmatmul.mubr.f32.gmra.mxu0 %v476
    %v544 = vpop.f32.mrf.mxu0
    %v545 = vadd.f32 %v471, %v544
    %v546 = vpop.f32.mrf.mxu0
    %547 = vdwg.mxu0
    %v548 = vmax.f32 %v545, 0.0
    %v549 = vand.u32 2147483647, %v545
    %v550 = vsub.f32 0.0, %v549
    %v551 = vmul.f32 %v550, 1.442695
    %v552 = vpow.pop %v551
    %v553 = vadd.f32 %v552, 1.0
    %v554 = vlog2.pop %v553
    %v555 = vmul.f32 %v554, 0.6931472
    %v556 = vadd.f32 %v548, %v555
    %v557 = vadd.f32 %v556, 2.0
    %v558 = vrcp.pop %v557
    %v559 = vmul.f32 -2.0, %v558
    %561 = vrot.lane.b32.xlu0 %v88, 127
    %v562 = vpop.permute.xlu0 %561
    %v564 = vmul.f32 %v559, %v562
    %v565 = vmul.f32 %v564, 1.442695
    %v566 = vpow.pop %v565
    %v567 = vsub.f32 %v566, 1.0
    %v568 = vmul.f32 %v557, %v567
    %v569 = vrsqrt.pop %v568
    %v570 = vmul.f32 %v568, %v569
    %vm571 = vcmp.eq.f32.partialorder %v568, inf
    %v572 = vsel %vm571, %v568, %v570
    %vm573 = vcmp.eq.f32.partialorder %v568, 0.0
    %v574 = vand.u32 %v568, 2147483648
    %v575 = vsel %vm573, %v574, %v572
    %577 = vrot.lane.b32.xlu0 %v575, 2
    %v578 = vpop.permute.xlu0 %577
    %v580 = vmul.f32 %v556, %v578
    %581 = vrot.lane.b32.xlu0 %v89, 1
    %v582 = vpop.permute.xlu0 %581
    %v584 = vmul.f32 %v580, %v582
    %586 = vrot.lane.b32.xlu0 %v584, 127
    %v587 = vpop.permute.xlu0 %586
    %v589 = vadd.f32 %v545, %v587
    %v590 = vmul.f32 %v589, %v131
    %s591 = scalar_lea.vmem %s7, 16
    %v592 = vld [vmem:[%s591] sm:$0xff]
    %594 = vrot.lane.b32.xlu0 %v128, 127
    %v595 = vpop.permute.xlu0 %594
    %597 = vrot.lane.b32.xlu0 %v134, 118
    %v598 = vpop.permute.xlu0 %597
    %600 = vrot.lane.b32.xlu0 %v134, 121
    %v601 = vpop.permute.xlu0 %600
    %604 = vrot.lane.b32.xlu0 %v592, 8
    %v605 = vpop.permute.xlu0 %604
    %v607 = vsel %vm155, %v595, %v598
    %v608 = vsel %vm157, %v607, %v601
    %v609 = vsel %vm159, %v608, %v149
    %v610 = vsel %vm161, %v609, %v605
    %v611 = vsel %vm163, %v352, 0
    %613 = vmatprep.subr.mxu0 0.0
    %614 = vmatpush1.msra.mxu0 0.0
    %615 = vmatprep.subr.mxu0 0.0
    %616 = vmatpush1.msra.mxu0 0.0
    %617 = vmatprep.subr.mxu0 0.0
    %618 = vmatpush1.msra.mxu0 0.0
    %619 = vmatprep.subr.mxu0 0.0
    %620 = vmatpush1.msra.mxu0 0.0
    %621 = vmatprep.subr.mxu0 0.0
    %622 = vmatpush1.msra.mxu0 0.0
    %623 = vmatprep.subr.mxu0 0.0
    %624 = vmatpush1.msra.mxu0 0.0
    %625 = vmatprep.subr.mxu0 0.0
    %626 = vmatpush1.msra.mxu0 0.0
    %627 = vmatprep.subr.mxu0 0.0
    %628 = vmatpush1.msra.mxu0 0.0
    %629 = vmatprep.subr.mxu0 0.0
    %630 = vmatpush1.msra.mxu0 0.0
    %631 = vmatprep.subr.mxu0 0.0
    %632 = vmatpush1.msra.mxu0 0.0
    %633 = vmatprep.subr.mxu0 0.0
    %634 = vmatpush1.msra.mxu0 0.0
    %635 = vmatprep.subr.mxu0 0.0
    %636 = vmatpush1.msra.mxu0 0.0
    %637 = vmatprep.subr.mxu0 0.0
    %638 = vmatpush1.msra.mxu0 %v69
    %639 = vmatprep.subr.mxu0 0.0
    %640 = vmatpush1.msra.mxu0 %v68
    %641 = vmatprep.subr.mxu0 0.0
    %642 = vmatpush1.msra.mxu0 %v67
    %643 = vmatprep.subr.mxu0 0.0
    %644 = vmatpush1.msra.mxu0 %v66
    %645 = vmatprep.subr.mxu0 0.0
    %646 = vmatpush2.msra.mxu0 0.0
    %647 = vmatprep.subr.mxu0 0.0
    %648 = vmatpush2.msra.mxu0 0.0
    %649 = vmatprep.subr.mxu0 0.0
    %650 = vmatpush2.msra.mxu0 0.0
    %651 = vmatprep.subr.mxu0 0.0
    %652 = vmatpush2.msra.mxu0 0.0
    %653 = vmatprep.subr.mxu0 0.0
    %654 = vmatpush2.msra.mxu0 0.0
    %655 = vmatprep.subr.mxu0 0.0
    %656 = vmatpush2.msra.mxu0 0.0
    %657 = vmatprep.subr.mxu0 0.0
    %658 = vmatpush2.msra.mxu0 0.0
    %659 = vmatprep.subr.mxu0 0.0
    %660 = vmatpush2.msra.mxu0 0.0
    %661 = vmatprep.subr.mxu0 0.0
    %662 = vmatpush2.msra.mxu0 0.0
    %663 = vmatprep.subr.mxu0 0.0
    %664 = vmatpush2.msra.mxu0 0.0
    %665 = vmatprep.subr.mxu0 0.0
    %666 = vmatpush2.msra.mxu0 0.0
    %667 = vmatprep.subr.mxu0 0.0
    %668 = vmatpush2.msra.mxu0 0.0
    %669 = vmatprep.subr.mxu0 0.0
    %670 = vmatpush2.msra.mxu0 0.0
    %671 = vmatprep.subr.mxu0 0.0
    %672 = vmatpush2.msra.mxu0 0.0
    %673 = vmatprep.subr.mxu0 0.0
    %674 = vmatpush2.msra.mxu0 0.0
    %675 = vmatprep.subr.mxu0 0.0
    %676 = vmatpush2.msra.mxu0 0.0
    %677 = vmatprep.mubr.f32.mxu0 0.0
    %678 = vmatmul.mubr.f32.gmra.mxu0 %v611
    %v679 = vpop.f32.mrf.mxu0
    %v680 = vadd.f32 0.0, %v679
    %v681 = vpop.f32.mrf.mxu0
    %682 = vdwg.mxu0
    %v684 = vsel %vm237, %v610, 0
    %686 = vmatprep.subr.mxu0 0.0
    %687 = vmatpush1.msra.mxu0 0.0
    %688 = vmatprep.subr.mxu0 0.0
    %689 = vmatpush1.msra.mxu0 0.0
    %690 = vmatprep.subr.mxu0 0.0
    %691 = vmatpush1.msra.mxu0 0.0
    %692 = vmatprep.subr.mxu0 0.0
    %693 = vmatpush1.msra.mxu0 0.0
    %694 = vmatprep.subr.mxu0 0.0
    %695 = vmatpush1.msra.mxu0 0.0
    %696 = vmatprep.subr.mxu0 0.0
    %697 = vmatpush1.msra.mxu0 0.0
    %698 = vmatprep.subr.mxu0 0.0
    %699 = vmatpush1.msra.mxu0 0.0
    %700 = vmatprep.subr.mxu0 0.0
    %701 = vmatpush1.msra.mxu0 0.0
    %702 = vmatprep.subr.mxu0 0.0
    %703 = vmatpush1.msra.mxu0 0.0
    %704 = vmatprep.subr.mxu0 0.0
    %705 = vmatpush1.msra.mxu0 0.0
    %706 = vmatprep.subr.mxu0 0.0
    %707 = vmatpush1.msra.mxu0 0.0
    %708 = vmatprep.subr.mxu0 0.0
    %709 = vmatpush1.msra.mxu0 0.0
    %710 = vmatprep.subr.mxu0 0.0
    %711 = vmatpush1.msra.mxu0 0.0
    %712 = vmatprep.subr.mxu0 0.0
    %713 = vmatpush1.msra.mxu0 0.0
    %714 = vmatprep.subr.mxu0 0.0
    %715 = vmatpush1.msra.mxu0 %v243
    %716 = vmatprep.subr.mxu0 0.0
    %717 = vmatpush1.msra.mxu0 %v64
    %718 = vmatprep.subr.mxu0 0.0
    %719 = vmatpush2.msra.mxu0 0.0
    %720 = vmatprep.subr.mxu0 0.0
    %721 = vmatpush2.msra.mxu0 0.0
    %722 = vmatprep.subr.mxu0 0.0
    %723 = vmatpush2.msra.mxu0 0.0
    %724 = vmatprep.subr.mxu0 0.0
    %725 = vmatpush2.msra.mxu0 0.0
    %726 = vmatprep.subr.mxu0 0.0
    %727 = vmatpush2.msra.mxu0 0.0
    %728 = vmatprep.subr.mxu0 0.0
    %729 = vmatpush2.msra.mxu0 0.0
    %730 = vmatprep.subr.mxu0 0.0
    %731 = vmatpush2.msra.mxu0 0.0
    %732 = vmatprep.subr.mxu0 0.0
    %733 = vmatpush2.msra.mxu0 0.0
    %734 = vmatprep.subr.mxu0 0.0
    %735 = vmatpush2.msra.mxu0 0.0
    %736 = vmatprep.subr.mxu0 0.0
    %737 = vmatpush2.msra.mxu0 0.0
    %738 = vmatprep.subr.mxu0 0.0
    %739 = vmatpush2.msra.mxu0 0.0
    %740 = vmatprep.subr.mxu0 0.0
    %741 = vmatpush2.msra.mxu0 0.0
    %742 = vmatprep.subr.mxu0 0.0
    %743 = vmatpush2.msra.mxu0 0.0
    %744 = vmatprep.subr.mxu0 0.0
    %745 = vmatpush2.msra.mxu0 0.0
    %746 = vmatprep.subr.mxu0 0.0
    %747 = vmatpush2.msra.mxu0 0.0
    %748 = vmatprep.subr.mxu0 0.0
    %749 = vmatpush2.msra.mxu0 0.0
    %750 = vmatprep.mubr.f32.mxu0 0.0
    %751 = vmatmul.mubr.f32.gmra.mxu0 %v684
    %v752 = vpop.f32.mrf.mxu0
    %v753 = vadd.f32 %v680, %v752
    %v754 = vpop.f32.mrf.mxu0
    %755 = vdwg.mxu0
    %v756 = vadd.f32 %v753, %v319
    %v757 = vxor.u32 %v756, 2147483648
    %v758 = vmul.f32 %v757, 1.442695
    %v759 = vpow.pop %v758
    %v760 = vadd.f32 %v759, 1.0
    %v761 = vrcp.pop %v760
    %v762 = vmul.f32 1.0, %v761
    %v763 = vtanh.pop %v756
    %v764 = vmul.f32 %v762, %v343
    %766 = vrot.lane.b32.xlu0 %v763, 64
    %v767 = vpop.permute.xlu0 %766
    %v769 = vmul.f32 %v762, %v767
    %771 = vrot.lane.b32.xlu0 %v769, 32
    %v772 = vpop.permute.xlu0 %771
    %v774 = vadd.f32 %v764, %v772
    %v775 = vtanh.pop %v774
    %777 = vrot.lane.b32.xlu0 %v775, 64
    %v778 = vpop.permute.xlu0 %777
    %v780 = vmul.f32 %v762, %v778
    %782 = vrot.lane.b32.xlu0 %v780, 32
    %v783 = vpop.permute.xlu0 %782
    %785 = vrot.lane.b32.xlu0 %v466, 64
    %v786 = vpop.permute.xlu0 %785
    %v788 = vsel %vm163, %v783, %v786
    %v790 = vsel %vm365, %v788, 0
    %792 = vmatprep.subr.mxu0 0.0
    %793 = vmatpush1.msra.mxu0 0.0
    %794 = vmatprep.subr.mxu0 0.0
    %795 = vmatpush1.msra.mxu0 0.0
    %796 = vmatprep.subr.mxu0 0.0
    %797 = vmatpush1.msra.mxu0 0.0
    %798 = vmatprep.subr.mxu0 0.0
    %799 = vmatpush1.msra.mxu0 0.0
    %800 = vmatprep.subr.mxu0 0.0
    %801 = vmatpush1.msra.mxu0 0.0
    %802 = vmatprep.subr.mxu0 0.0
    %803 = vmatpush1.msra.mxu0 0.0
    %804 = vmatprep.subr.mxu0 0.0
    %805 = vmatpush1.msra.mxu0 0.0
    %806 = vmatprep.subr.mxu0 0.0
    %807 = vmatpush1.msra.mxu0 0.0
    %808 = vmatprep.subr.mxu0 0.0
    %809 = vmatpush1.msra.mxu0 %v78
    %810 = vmatprep.subr.mxu0 0.0
    %811 = vmatpush1.msra.mxu0 %v77
    %812 = vmatprep.subr.mxu0 0.0
    %813 = vmatpush1.msra.mxu0 %v76
    %814 = vmatprep.subr.mxu0 0.0
    %815 = vmatpush1.msra.mxu0 %v75
    %816 = vmatprep.subr.mxu0 0.0
    %817 = vmatpush1.msra.mxu0 %v74
    %818 = vmatprep.subr.mxu0 0.0
    %819 = vmatpush1.msra.mxu0 %v73
    %820 = vmatprep.subr.mxu0 0.0
    %821 = vmatpush1.msra.mxu0 %v72
    %822 = vmatprep.subr.mxu0 0.0
    %823 = vmatpush1.msra.mxu0 %v71
    %824 = vmatprep.subr.mxu0 0.0
    %825 = vmatpush2.msra.mxu0 0.0
    %826 = vmatprep.subr.mxu0 0.0
    %827 = vmatpush2.msra.mxu0 0.0
    %828 = vmatprep.subr.mxu0 0.0
    %829 = vmatpush2.msra.mxu0 0.0
    %830 = vmatprep.subr.mxu0 0.0
    %831 = vmatpush2.msra.mxu0 0.0
    %832 = vmatprep.subr.mxu0 0.0
    %833 = vmatpush2.msra.mxu0 0.0
    %834 = vmatprep.subr.mxu0 0.0
    %835 = vmatpush2.msra.mxu0 0.0
    %836 = vmatprep.subr.mxu0 0.0
    %837 = vmatpush2.msra.mxu0 0.0
    %838 = vmatprep.subr.mxu0 0.0
    %839 = vmatpush2.msra.mxu0 0.0
    %840 = vmatprep.subr.mxu0 0.0
    %841 = vmatpush2.msra.mxu0 0.0
    %842 = vmatprep.subr.mxu0 0.0
    %843 = vmatpush2.msra.mxu0 0.0
    %844 = vmatprep.subr.mxu0 0.0
    %845 = vmatpush2.msra.mxu0 0.0
    %846 = vmatprep.subr.mxu0 0.0
    %847 = vmatpush2.msra.mxu0 0.0
    %848 = vmatprep.subr.mxu0 0.0
    %849 = vmatpush2.msra.mxu0 0.0
    %850 = vmatprep.subr.mxu0 0.0
    %851 = vmatpush2.msra.mxu0 0.0
    %852 = vmatprep.subr.mxu0 0.0
    %853 = vmatpush2.msra.mxu0 0.0
    %854 = vmatprep.subr.mxu0 0.0
    %855 = vmatpush2.msra.mxu0 0.0
    %856 = vmatprep.mubr.f32.mxu0 0.0
    %857 = vmatmul.mubr.f32.gmra.mxu0 %v790
    %v858 = vpop.f32.mrf.mxu0
    %v859 = vadd.f32 %v363, %v858
    %v860 = vpop.f32.mrf.mxu0
    %861 = vdwg.mxu0
    %v862 = vxor.u32 %v859, 2147483648
    %v863 = vmul.f32 %v862, 1.442695
    %v864 = vpow.pop %v863
    %v865 = vadd.f32 %v864, 1.0
    %v866 = vrcp.pop %v865
    %v867 = vmul.f32 1.0, %v866
    %v868 = vtanh.pop %v859
    %v869 = vmul.f32 %v867, %v460
    %871 = vrot.lane.b32.xlu0 %v868, 64
    %v872 = vpop.permute.xlu0 %871
    %v874 = vmul.f32 %v867, %v872
    %876 = vrot.lane.b32.xlu0 %v874, 32
    %v877 = vpop.permute.xlu0 %876
    %v879 = vadd.f32 %v869, %v877
    %v880 = vtanh.pop %v879
    %882 = vrot.lane.b32.xlu0 %v880, 64
    %v883 = vpop.permute.xlu0 %882
    %v885 = vmul.f32 %v867, %v883
    %887 = vrot.lane.b32.xlu0 %v885, 32
    %v888 = vpop.permute.xlu0 %887
    %v889 = vsel %vm163, %v888, 0
    %891 = vmatprep.subr.mxu0 0.0
    %892 = vmatpush1.msra.mxu0 0.0
    %893 = vmatprep.subr.mxu0 0.0
    %894 = vmatpush1.msra.mxu0 0.0
    %895 = vmatprep.subr.mxu0 0.0
    %896 = vmatpush1.msra.mxu0 0.0
    %897 = vmatprep.subr.mxu0 0.0
    %898 = vmatpush1.msra.mxu0 0.0
    %899 = vmatprep.subr.mxu0 0.0
    %900 = vmatpush1.msra.mxu0 0.0
    %901 = vmatprep.subr.mxu0 0.0
    %902 = vmatpush1.msra.mxu0 0.0
    %903 = vmatprep.subr.mxu0 0.0
    %904 = vmatpush1.msra.mxu0 0.0
    %905 = vmatprep.subr.mxu0 0.0
    %906 = vmatpush1.msra.mxu0 0.0
    %907 = vmatprep.subr.mxu0 0.0
    %908 = vmatpush1.msra.mxu0 0.0
    %909 = vmatprep.subr.mxu0 0.0
    %910 = vmatpush1.msra.mxu0 0.0
    %911 = vmatprep.subr.mxu0 0.0
    %912 = vmatpush1.msra.mxu0 0.0
    %913 = vmatprep.subr.mxu0 0.0
    %914 = vmatpush1.msra.mxu0 0.0
    %915 = vmatprep.subr.mxu0 0.0
    %916 = vmatpush1.msra.mxu0 %v83
    %917 = vmatprep.subr.mxu0 0.0
    %918 = vmatpush1.msra.mxu0 %v82
    %919 = vmatprep.subr.mxu0 0.0
    %920 = vmatpush1.msra.mxu0 %v81
    %921 = vmatprep.subr.mxu0 0.0
    %922 = vmatpush1.msra.mxu0 %v80
    %923 = vmatprep.subr.mxu0 0.0
    %924 = vmatpush2.msra.mxu0 0.0
    %925 = vmatprep.subr.mxu0 0.0
    %926 = vmatpush2.msra.mxu0 0.0
    %927 = vmatprep.subr.mxu0 0.0
    %928 = vmatpush2.msra.mxu0 0.0
    %929 = vmatprep.subr.mxu0 0.0
    %930 = vmatpush2.msra.mxu0 0.0
    %931 = vmatprep.subr.mxu0 0.0
    %932 = vmatpush2.msra.mxu0 0.0
    %933 = vmatprep.subr.mxu0 0.0
    %934 = vmatpush2.msra.mxu0 0.0
    %935 = vmatprep.subr.mxu0 0.0
    %936 = vmatpush2.msra.mxu0 0.0
    %937 = vmatprep.subr.mxu0 0.0
    %938 = vmatpush2.msra.mxu0 0.0
    %939 = vmatprep.subr.mxu0 0.0
    %940 = vmatpush2.msra.mxu0 0.0
    %941 = vmatprep.subr.mxu0 0.0
    %942 = vmatpush2.msra.mxu0 0.0
    %943 = vmatprep.subr.mxu0 0.0
    %944 = vmatpush2.msra.mxu0 0.0
    %945 = vmatprep.subr.mxu0 0.0
    %946 = vmatpush2.msra.mxu0 0.0
    %947 = vmatprep.subr.mxu0 0.0
    %948 = vmatpush2.msra.mxu0 0.0
    %949 = vmatprep.subr.mxu0 0.0
    %950 = vmatpush2.msra.mxu0 0.0
    %951 = vmatprep.subr.mxu0 0.0
    %952 = vmatpush2.msra.mxu0 0.0
    %953 = vmatprep.subr.mxu0 0.0
    %954 = vmatpush2.msra.mxu0 0.0
    %955 = vmatprep.mubr.f32.mxu0 0.0
    %956 = vmatmul.mubr.f32.gmra.mxu0 %v889
    %v957 = vpop.f32.mrf.mxu0
    %v958 = vadd.f32 %v471, %v957
    %v959 = vpop.f32.mrf.mxu0
    %960 = vdwg.mxu0
    %v961 = vmax.f32 %v958, 0.0
    %v962 = vand.u32 2147483647, %v958
    %v963 = vsub.f32 0.0, %v962
    %v964 = vmul.f32 %v963, 1.442695
    %v965 = vpow.pop %v964
    %v966 = vadd.f32 %v965, 1.0
    %v967 = vlog2.pop %v966
    %v968 = vmul.f32 %v967, 0.6931472
    %v969 = vadd.f32 %v961, %v968
    %v970 = vadd.f32 %v969, 2.0
    %v971 = vrcp.pop %v970
    %v972 = vmul.f32 -2.0, %v971
    %973 = vrot.lane.b32.xlu0 %v88, 126
    %v974 = vpop.permute.xlu0 %973
    %v976 = vmul.f32 %v972, %v974
    %v977 = vmul.f32 %v976, 1.442695
    %v978 = vpow.pop %v977
    %v979 = vsub.f32 %v978, 1.0
    %v980 = vmul.f32 %v970, %v979
    %v981 = vrsqrt.pop %v980
    %v982 = vmul.f32 %v980, %v981
    %vm983 = vcmp.eq.f32.partialorder %v980, inf
    %v984 = vsel %vm983, %v980, %v982
    %vm985 = vcmp.eq.f32.partialorder %v980, 0.0
    %v986 = vand.u32 %v980, 2147483648
    %v987 = vsel %vm985, %v986, %v984
    %989 = vrot.lane.b32.xlu0 %v987, 2
    %v990 = vpop.permute.xlu0 %989
    %v992 = vmul.f32 %v969, %v990
    %v993 = vmul.f32 %v992, %v89
    %995 = vrot.lane.b32.xlu0 %v993, 127
    %v996 = vpop.permute.xlu0 %995
    %v998 = vadd.f32 %v958, %v996
    %v999 = vmul.f32 %v998, %v131
    %s1000 = scalar_lea.vmem %s7, 24
    %v1001 = vld [vmem:[%s1000] sm:$0xff]
    %1003 = vrot.lane.b32.xlu0 %v589, 127
    %v1004 = vpop.permute.xlu0 %1003
    %1006 = vrot.lane.b32.xlu0 %v134, 120
    %v1007 = vpop.permute.xlu0 %1006
    %1010 = vrot.lane.b32.xlu0 %v1001, 8
    %v1011 = vpop.permute.xlu0 %1010
    %v1013 = vsel %vm155, %v1004, %v128
    %v1014 = vsel %vm157, %v1013, %v1007
    %v1015 = vsel %vm159, %v1014, %v149
    %v1016 = vsel %vm161, %v1015, %v1011
    %v1017 = vsel %vm163, %v783, 0
    %1019 = vmatprep.subr.mxu0 0.0
    %1020 = vmatpush1.msra.mxu0 0.0
    %1021 = vmatprep.subr.mxu0 0.0
    %1022 = vmatpush1.msra.mxu0 0.0
    %1023 = vmatprep.subr.mxu0 0.0
    %1024 = vmatpush1.msra.mxu0 0.0
    %1025 = vmatprep.subr.mxu0 0.0
    %1026 = vmatpush1.msra.mxu0 0.0
    %1027 = vmatprep.subr.mxu0 0.0
    %1028 = vmatpush1.msra.mxu0 0.0
    %1029 = vmatprep.subr.mxu0 0.0
    %1030 = vmatpush1.msra.mxu0 0.0
    %1031 = vmatprep.subr.mxu0 0.0
    %1032 = vmatpush1.msra.mxu0 0.0
    %1033 = vmatprep.subr.mxu0 0.0
    %1034 = vmatpush1.msra.mxu0 0.0
    %1035 = vmatprep.subr.mxu0 0.0
    %1036 = vmatpush1.msra.mxu0 0.0
    %1037 = vmatprep.subr.mxu0 0.0
    %1038 = vmatpush1.msra.mxu0 0.0
    %1039 = vmatprep.subr.mxu0 0.0
    %1040 = vmatpush1.msra.mxu0 0.0
    %1041 = vmatprep.subr.mxu0 0.0
    %1042 = vmatpush1.msra.mxu0 0.0
    %1043 = vmatprep.subr.mxu0 0.0
    %1044 = vmatpush1.msra.mxu0 %v69
    %1045 = vmatprep.subr.mxu0 0.0
    %1046 = vmatpush1.msra.mxu0 %v68
    %1047 = vmatprep.subr.mxu0 0.0
    %1048 = vmatpush1.msra.mxu0 %v67
    %1049 = vmatprep.subr.mxu0 0.0
    %1050 = vmatpush1.msra.mxu0 %v66
    %1051 = vmatprep.subr.mxu0 0.0
    %1052 = vmatpush2.msra.mxu0 0.0
    %1053 = vmatprep.subr.mxu0 0.0
    %1054 = vmatpush2.msra.mxu0 0.0
    %1055 = vmatprep.subr.mxu0 0.0
    %1056 = vmatpush2.msra.mxu0 0.0
    %1057 = vmatprep.subr.mxu0 0.0
    %1058 = vmatpush2.msra.mxu0 0.0
    %1059 = vmatprep.subr.mxu0 0.0
    %1060 = vmatpush2.msra.mxu0 0.0
    %1061 = vmatprep.subr.mxu0 0.0
    %1062 = vmatpush2.msra.mxu0 0.0
    %1063 = vmatprep.subr.mxu0 0.0
    %1064 = vmatpush2.msra.mxu0 0.0
    %1065 = vmatprep.subr.mxu0 0.0
    %1066 = vmatpush2.msra.mxu0 0.0
    %1067 = vmatprep.subr.mxu0 0.0
    %1068 = vmatpush2.msra.mxu0 0.0
    %1069 = vmatprep.subr.mxu0 0.0
    %1070 = vmatpush2.msra.mxu0 0.0
    %1071 = vmatprep.subr.mxu0 0.0
    %1072 = vmatpush2.msra.mxu0 0.0
    %1073 = vmatprep.subr.mxu0 0.0
    %1074 = vmatpush2.msra.mxu0 0.0
    %1075 = vmatprep.subr.mxu0 0.0
    %1076 = vmatpush2.msra.mxu0 0.0
    %1077 = vmatprep.subr.mxu0 0.0
    %1078 = vmatpush2.msra.mxu0 0.0
    %1079 = vmatprep.subr.mxu0 0.0
    %1080 = vmatpush2.msra.mxu0 0.0
    %1081 = vmatprep.subr.mxu0 0.0
    %1082 = vmatpush2.msra.mxu0 0.0
    %1083 = vmatprep.mubr.f32.mxu0 0.0
    %1084 = vmatmul.mubr.f32.gmra.mxu0 %v1017
    %v1085 = vpop.f32.mrf.mxu0
    %v1086 = vadd.f32 0.0, %v1085
    %v1087 = vpop.f32.mrf.mxu0
    %1088 = vdwg.mxu0
    %v1090 = vsel %vm237, %v1016, 0
    %1092 = vmatprep.subr.mxu0 0.0
    %1093 = vmatpush1.msra.mxu0 0.0
    %1094 = vmatprep.subr.mxu0 0.0
    %1095 = vmatpush1.msra.mxu0 0.0
    %1096 = vmatprep.subr.mxu0 0.0
    %1097 = vmatpush1.msra.mxu0 0.0
    %1098 = vmatprep.subr.mxu0 0.0
    %1099 = vmatpush1.msra.mxu0 0.0
    %1100 = vmatprep.subr.mxu0 0.0
    %1101 = vmatpush1.msra.mxu0 0.0
    %1102 = vmatprep.subr.mxu0 0.0
    %1103 = vmatpush1.msra.mxu0 0.0
    %1104 = vmatprep.subr.mxu0 0.0
    %1105 = vmatpush1.msra.mxu0 0.0
    %1106 = vmatprep.subr.mxu0 0.0
    %1107 = vmatpush1.msra.mxu0 0.0
    %1108 = vmatprep.subr.mxu0 0.0
    %1109 = vmatpush1.msra.mxu0 0.0
    %1110 = vmatprep.subr.mxu0 0.0
    %1111 = vmatpush1.msra.mxu0 0.0
    %1112 = vmatprep.subr.mxu0 0.0
    %1113 = vmatpush1.msra.mxu0 0.0
    %1114 = vmatprep.subr.mxu0 0.0
    %1115 = vmatpush1.msra.mxu0 0.0
    %1116 = vmatprep.subr.mxu0 0.0
    %1117 = vmatpush1.msra.mxu0 0.0
    %1118 = vmatprep.subr.mxu0 0.0
    %1119 = vmatpush1.msra.mxu0 0.0
    %1120 = vmatprep.subr.mxu0 0.0
    %1121 = vmatpush1.msra.mxu0 %v243
    %1122 = vmatprep.subr.mxu0 0.0
    %1123 = vmatpush1.msra.mxu0 %v64
    %1124 = vmatprep.subr.mxu0 0.0
    %1125 = vmatpush2.msra.mxu0 0.0
    %1126 = vmatprep.subr.mxu0 0.0
    %1127 = vmatpush2.msra.mxu0 0.0
    %1128 = vmatprep.subr.mxu0 0.0
    %1129 = vmatpush2.msra.mxu0 0.0
    %1130 = vmatprep.subr.mxu0 0.0
    %1131 = vmatpush2.msra.mxu0 0.0
    %1132 = vmatprep.subr.mxu0 0.0
    %1133 = vmatpush2.msra.mxu0 0.0
    %1134 = vmatprep.subr.mxu0 0.0
    %1135 = vmatpush2.msra.mxu0 0.0
    %1136 = vmatprep.subr.mxu0 0.0
    %1137 = vmatpush2.msra.mxu0 0.0
    %1138 = vmatprep.subr.mxu0 0.0
    %1139 = vmatpush2.msra.mxu0 0.0
    %1140 = vmatprep.subr.mxu0 0.0
    %1141 = vmatpush2.msra.mxu0 0.0
    %1142 = vmatprep.subr.mxu0 0.0
    %1143 = vmatpush2.msra.mxu0 0.0
    %1144 = vmatprep.subr.mxu0 0.0
    %1145 = vmatpush2.msra.mxu0 0.0
    %1146 = vmatprep.subr.mxu0 0.0
    %1147 = vmatpush2.msra.mxu0 0.0
    %1148 = vmatprep.subr.mxu0 0.0
    %1149 = vmatpush2.msra.mxu0 0.0
    %1150 = vmatprep.subr.mxu0 0.0
    %1151 = vmatpush2.msra.mxu0 0.0
    %1152 = vmatprep.subr.mxu0 0.0
    %1153 = vmatpush2.msra.mxu0 0.0
    %1154 = vmatprep.subr.mxu0 0.0
    %1155 = vmatpush2.msra.mxu0 0.0
    %1156 = vmatprep.mubr.f32.mxu0 0.0
    %1157 = vmatmul.mubr.f32.gmra.mxu0 %v1090
    %v1158 = vpop.f32.mrf.mxu0
    %v1159 = vadd.f32 %v1086, %v1158
    %v1160 = vpop.f32.mrf.mxu0
    %1161 = vdwg.mxu0
    %v1162 = vadd.f32 %v1159, %v319
    %v1163 = vxor.u32 %v1162, 2147483648
    %v1164 = vmul.f32 %v1163, 1.442695
    %v1165 = vpow.pop %v1164
    %v1166 = vadd.f32 %v1165, 1.0
    %v1167 = vrcp.pop %v1166
    %v1168 = vmul.f32 1.0, %v1167
    %v1169 = vtanh.pop %v1162
    %v1170 = vmul.f32 %v1168, %v774
    %1172 = vrot.lane.b32.xlu0 %v1169, 64
    %v1173 = vpop.permute.xlu0 %1172
    %v1175 = vmul.f32 %v1168, %v1173
    %1177 = vrot.lane.b32.xlu0 %v1175, 32
    %v1178 = vpop.permute.xlu0 %1177
    %v1180 = vadd.f32 %v1170, %v1178
    %v1181 = vtanh.pop %v1180
    %1183 = vrot.lane.b32.xlu0 %v1181, 64
    %v1184 = vpop.permute.xlu0 %1183
    %v1186 = vmul.f32 %v1168, %v1184
    %1188 = vrot.lane.b32.xlu0 %v1186, 32
    %v1189 = vpop.permute.xlu0 %1188
    %1191 = vrot.lane.b32.xlu0 %v885, 64
    %v1192 = vpop.permute.xlu0 %1191
    %v1194 = vsel %vm163, %v1189, %v1192
    %v1196 = vsel %vm365, %v1194, 0
    %1198 = vmatprep.subr.mxu0 0.0
    %1199 = vmatpush1.msra.mxu0 0.0
    %1200 = vmatprep.subr.mxu0 0.0
    %1201 = vmatpush1.msra.mxu0 0.0
    %1202 = vmatprep.subr.mxu0 0.0
    %1203 = vmatpush1.msra.mxu0 0.0
    %1204 = vmatprep.subr.mxu0 0.0
    %1205 = vmatpush1.msra.mxu0 0.0
    %1206 = vmatprep.subr.mxu0 0.0
    %1207 = vmatpush1.msra.mxu0 0.0
    %1208 = vmatprep.subr.mxu0 0.0
    %1209 = vmatpush1.msra.mxu0 0.0
    %1210 = vmatprep.subr.mxu0 0.0
    %1211 = vmatpush1.msra.mxu0 0.0
    %1212 = vmatprep.subr.mxu0 0.0
    %1213 = vmatpush1.msra.mxu0 0.0
    %1214 = vmatprep.subr.mxu0 0.0
    %1215 = vmatpush1.msra.mxu0 %v78
    %1216 = vmatprep.subr.mxu0 0.0
    %1217 = vmatpush1.msra.mxu0 %v77
    %1218 = vmatprep.subr.mxu0 0.0
    %1219 = vmatpush1.msra.mxu0 %v76
    %1220 = vmatprep.subr.mxu0 0.0
    %1221 = vmatpush1.msra.mxu0 %v75
    %1222 = vmatprep.subr.mxu0 0.0
    %1223 = vmatpush1.msra.mxu0 %v74
    %1224 = vmatprep.subr.mxu0 0.0
    %1225 = vmatpush1.msra.mxu0 %v73
    %1226 = vmatprep.subr.mxu0 0.0
    %1227 = vmatpush1.msra.mxu0 %v72
    %1228 = vmatprep.subr.mxu0 0.0
    %1229 = vmatpush1.msra.mxu0 %v71
    %1230 = vmatprep.subr.mxu0 0.0
    %1231 = vmatpush2.msra.mxu0 0.0
    %1232 = vmatprep.subr.mxu0 0.0
    %1233 = vmatpush2.msra.mxu0 0.0
    %1234 = vmatprep.subr.mxu0 0.0
    %1235 = vmatpush2.msra.mxu0 0.0
    %1236 = vmatprep.subr.mxu0 0.0
    %1237 = vmatpush2.msra.mxu0 0.0
    %1238 = vmatprep.subr.mxu0 0.0
    %1239 = vmatpush2.msra.mxu0 0.0
    %1240 = vmatprep.subr.mxu0 0.0
    %1241 = vmatpush2.msra.mxu0 0.0
    %1242 = vmatprep.subr.mxu0 0.0
    %1243 = vmatpush2.msra.mxu0 0.0
    %1244 = vmatprep.subr.mxu0 0.0
    %1245 = vmatpush2.msra.mxu0 0.0
    %1246 = vmatprep.subr.mxu0 0.0
    %1247 = vmatpush2.msra.mxu0 0.0
    %1248 = vmatprep.subr.mxu0 0.0
    %1249 = vmatpush2.msra.mxu0 0.0
    %1250 = vmatprep.subr.mxu0 0.0
    %1251 = vmatpush2.msra.mxu0 0.0
    %1252 = vmatprep.subr.mxu0 0.0
    %1253 = vmatpush2.msra.mxu0 0.0
    %1254 = vmatprep.subr.mxu0 0.0
    %1255 = vmatpush2.msra.mxu0 0.0
    %1256 = vmatprep.subr.mxu0 0.0
    %1257 = vmatpush2.msra.mxu0 0.0
    %1258 = vmatprep.subr.mxu0 0.0
    %1259 = vmatpush2.msra.mxu0 0.0
    %1260 = vmatprep.subr.mxu0 0.0
    %1261 = vmatpush2.msra.mxu0 0.0
    %1262 = vmatprep.mubr.f32.mxu0 0.0
    %1263 = vmatmul.mubr.f32.gmra.mxu0 %v1196
    %v1264 = vpop.f32.mrf.mxu0
    %v1265 = vadd.f32 %v363, %v1264
    %v1266 = vpop.f32.mrf.mxu0
    %1267 = vdwg.mxu0
    %v1268 = vxor.u32 %v1265, 2147483648
    %v1269 = vmul.f32 %v1268, 1.442695
    %v1270 = vpow.pop %v1269
    %v1271 = vadd.f32 %v1270, 1.0
    %v1272 = vrcp.pop %v1271
    %v1273 = vmul.f32 1.0, %v1272
    %v1274 = vtanh.pop %v1265
    %v1275 = vmul.f32 %v1273, %v879
    %1277 = vrot.lane.b32.xlu0 %v1274, 64
    %v1278 = vpop.permute.xlu0 %1277
    %v1280 = vmul.f32 %v1273, %v1278
    %1282 = vrot.lane.b32.xlu0 %v1280, 32
    %v1283 = vpop.permute.xlu0 %1282
    %v1285 = vadd.f32 %v1275, %v1283
    %v1286 = vtanh.pop %v1285
    %1288 = vrot.lane.b32.xlu0 %v1286, 64
    %v1289 = vpop.permute.xlu0 %1288
    %v1291 = vmul.f32 %v1273, %v1289
    %1293 = vrot.lane.b32.xlu0 %v1291, 32
    %v1294 = vpop.permute.xlu0 %1293
    %v1295 = vsel %vm163, %v1294, 0
    %1297 = vmatprep.subr.mxu0 0.0
    %1298 = vmatpush1.msra.mxu0 0.0
    %1299 = vmatprep.subr.mxu0 0.0
    %1300 = vmatpush1.msra.mxu0 0.0
    %1301 = vmatprep.subr.mxu0 0.0
    %1302 = vmatpush1.msra.mxu0 0.0
    %1303 = vmatprep.subr.mxu0 0.0
    %1304 = vmatpush1.msra.mxu0 0.0
    %1305 = vmatprep.subr.mxu0 0.0
    %1306 = vmatpush1.msra.mxu0 0.0
    %1307 = vmatprep.subr.mxu0 0.0
    %1308 = vmatpush1.msra.mxu0 0.0
    %1309 = vmatprep.subr.mxu0 0.0
    %1310 = vmatpush1.msra.mxu0 0.0
    %1311 = vmatprep.subr.mxu0 0.0
    %1312 = vmatpush1.msra.mxu0 0.0
    %1313 = vmatprep.subr.mxu0 0.0
    %1314 = vmatpush1.msra.mxu0 0.0
    %1315 = vmatprep.subr.mxu0 0.0
    %1316 = vmatpush1.msra.mxu0 0.0
    %1317 = vmatprep.subr.mxu0 0.0
    %1318 = vmatpush1.msra.mxu0 0.0
    %1319 = vmatprep.subr.mxu0 0.0
    %1320 = vmatpush1.msra.mxu0 0.0
    %1321 = vmatprep.subr.mxu0 0.0
    %1322 = vmatpush1.msra.mxu0 %v83
    %1323 = vmatprep.subr.mxu0 0.0
    %1324 = vmatpush1.msra.mxu0 %v82
    %1325 = vmatprep.subr.mxu0 0.0
    %1326 = vmatpush1.msra.mxu0 %v81
    %1327 = vmatprep.subr.mxu0 0.0
    %1328 = vmatpush1.msra.mxu0 %v80
    %1329 = vmatprep.subr.mxu0 0.0
    %1330 = vmatpush2.msra.mxu0 0.0
    %1331 = vmatprep.subr.mxu0 0.0
    %1332 = vmatpush2.msra.mxu0 0.0
    %1333 = vmatprep.subr.mxu0 0.0
    %1334 = vmatpush2.msra.mxu0 0.0
    %1335 = vmatprep.subr.mxu0 0.0
    %1336 = vmatpush2.msra.mxu0 0.0
    %1337 = vmatprep.subr.mxu0 0.0
    %1338 = vmatpush2.msra.mxu0 0.0
    %1339 = vmatprep.subr.mxu0 0.0
    %1340 = vmatpush2.msra.mxu0 0.0
    %1341 = vmatprep.subr.mxu0 0.0
    %1342 = vmatpush2.msra.mxu0 0.0
    %1343 = vmatprep.subr.mxu0 0.0
    %1344 = vmatpush2.msra.mxu0 0.0
    %1345 = vmatprep.subr.mxu0 0.0
    %1346 = vmatpush2.msra.mxu0 0.0
    %1347 = vmatprep.subr.mxu0 0.0
    %1348 = vmatpush2.msra.mxu0 0.0
    %1349 = vmatprep.subr.mxu0 0.0
    %1350 = vmatpush2.msra.mxu0 0.0
    %1351 = vmatprep.subr.mxu0 0.0
    %1352 = vmatpush2.msra.mxu0 0.0
    %1353 = vmatprep.subr.mxu0 0.0
    %1354 = vmatpush2.msra.mxu0 0.0
    %1355 = vmatprep.subr.mxu0 0.0
    %1356 = vmatpush2.msra.mxu0 0.0
    %1357 = vmatprep.subr.mxu0 0.0
    %1358 = vmatpush2.msra.mxu0 0.0
    %1359 = vmatprep.subr.mxu0 0.0
    %1360 = vmatpush2.msra.mxu0 0.0
    %1361 = vmatprep.mubr.f32.mxu0 0.0
    %1362 = vmatmul.mubr.f32.gmra.mxu0 %v1295
    %v1363 = vpop.f32.mrf.mxu0
    %v1364 = vadd.f32 %v471, %v1363
    %v1365 = vpop.f32.mrf.mxu0
    %1366 = vdwg.mxu0
    %v1367 = vmax.f32 %v1364, 0.0
    %v1368 = vand.u32 2147483647, %v1364
    %v1369 = vsub.f32 0.0, %v1368
    %v1370 = vmul.f32 %v1369, 1.442695
    %v1371 = vpow.pop %v1370
    %v1372 = vadd.f32 %v1371, 1.0
    %v1373 = vlog2.pop %v1372
    %v1374 = vmul.f32 %v1373, 0.6931472
    %v1375 = vadd.f32 %v1367, %v1374
    %v1376 = vadd.f32 %v1375, 2.0
    %v1377 = vrcp.pop %v1376
    %v1378 = vmul.f32 -2.0, %v1377
    %1379 = vrot.lane.b32.xlu0 %v88, 125
    %v1380 = vpop.permute.xlu0 %1379
    %v1382 = vmul.f32 %v1378, %v1380
    %v1383 = vmul.f32 %v1382, 1.442695
    %v1384 = vpow.pop %v1383
    %v1385 = vsub.f32 %v1384, 1.0
    %v1386 = vmul.f32 %v1376, %v1385
    %v1387 = vrsqrt.pop %v1386
    %v1388 = vmul.f32 %v1386, %v1387
    %vm1389 = vcmp.eq.f32.partialorder %v1386, inf
    %v1390 = vsel %vm1389, %v1386, %v1388
    %vm1391 = vcmp.eq.f32.partialorder %v1386, 0.0
    %v1392 = vand.u32 %v1386, 2147483648
    %v1393 = vsel %vm1391, %v1392, %v1390
    %1395 = vrot.lane.b32.xlu0 %v1393, 2
    %v1396 = vpop.permute.xlu0 %1395
    %v1398 = vmul.f32 %v1375, %v1396
    %1399 = vrot.lane.b32.xlu0 %v89, 127
    %v1400 = vpop.permute.xlu0 %1399
    %v1402 = vmul.f32 %v1398, %v1400
    %1404 = vrot.lane.b32.xlu0 %v1402, 127
    %v1405 = vpop.permute.xlu0 %1404
    %v1407 = vadd.f32 %v1364, %v1405
    %v1408 = vmul.f32 %v1407, %v131
    %1410 = vrot.lane.b32.xlu0 %v133, 127
    %v1411 = vpop.permute.xlu0 %1410
    %1414 = vrot.lane.b32.xlu0 %v999, 1
    %v1415 = vpop.permute.xlu0 %1414
    %1418 = vrot.lane.b32.xlu0 %v1408, 2
    %v1419 = vpop.permute.xlu0 %1418
    %v1421 = vsel %vm155, %v1411, %v590
    %v1422 = vsel %vm157, %v1421, %v1415
    %v1423 = vsel %vm159, %v1422, %v1419
    %vm1424 = vcmask 31744
    %1425 = vst.msk [vmem:[#allocation2] sm:$0xff] %vm1424, %v1423
    // Predicated region
    $region74: #{deepar_forward.3} parent=1 // pred_check
      _
    $region75: #{deepar_forward.3} parent=1 // pred_check_branch
      %1427 = sbr.rel (0) target = $region77
    $region76: #{deepar_forward.3} parent=1 // pred_region
      %s1429 = ssub.s32 128, 128
      %1430 = vsyncadd [#allocation3], %s1429
      %s1432 = sshll.u32 [#allocation2], 4
      %s1433 = int_to_ptr.vmem [resolvable:$true] %s1432
      %1435 = dma.vmem_to_hbm [thread:$0]  %s1433, 128, %s18, [#allocation3]
    $region77: #{deepar_forward.3} parent=1 // pred_fallthru
      _
    // Predicated region
    $region78: #{deepar_forward.3} parent=1 // pred_check
      _
    $region79: #{deepar_forward.3} parent=1 // pred_check_branch
      %1437 = sbr.rel (0) target = $region81
    $region80: #{deepar_forward.3} parent=1 // pred_region
      %1438 = dma.done [#allocation3], 128
    $region81: #{deepar_forward.3} parent=1 // pred_fallthru
      _
    %1439 = vsyncpa [#allocation3], 1

// kernel: deepar_forward.2
$region0: #{deepar_forward.2}
  #allocation0 [shape = 'u32[]', space=smem, size = 0x4, offset = 0x4, fixed_abs, tag = 'smem constant byte address 0x4 - core index']
  #allocation1 [shape = 'u32[144,128]{1,0:T(1,128)}', space=vmem, size = 0x12000, scoped, tag = 'internal scratch']
  %s0 = inlined_call_operand.vmem [shape: f32[16,10], index: 0, kind: input, shape index: {}]
  %s1 = inlined_call_operand.vmem [shape: f32[10,128], index: 1, kind: input, shape index: {}]
  %s2 = inlined_call_operand.vmem [shape: f32[32,128], index: 2, kind: input, shape index: {}]
  %s3 = inlined_call_operand.vmem [shape: f32[1,128], index: 3, kind: input, shape index: {}]
  %s4 = inlined_call_operand.vmem [shape: f32[64,128], index: 4, kind: input, shape index: {}]
  %s5 = inlined_call_operand.vmem [shape: f32[1,128], index: 5, kind: input, shape index: {}]
  %s6 = inlined_call_operand.vmem [shape: f32[32,3], index: 6, kind: input, shape index: {}]
  %s7 = inlined_call_operand.vmem [shape: f32[1,3], index: 7, kind: input, shape index: {}]
  %s8 = inlined_call_operand.vmem [shape: f32[2,3], index: 8, kind: output, shape index: {0}]
  %s9 = inlined_call_operand.vmem [shape: f32[2,32], index: 9, kind: output, shape index: {1}]
  %s10 = inlined_call_operand.vmem [shape: f32[2,32], index: 10, kind: output, shape index: {2}]
  %s11 = inlined_call_operand.vmem [shape: f32[2,32], index: 11, kind: output, shape index: {3}]
  %s12 = inlined_call_operand.vmem [shape: f32[2,32], index: 12, kind: output, shape index: {4}]
  %13 = xla_tuple %s8, %s9, %s10, %s11, %s12
  %s14 = sld [smem:[#allocation0]]
  $region74: #{deepar_forward.2} parent=0
    _
  %s16 = ssub.s32 1, %s14
  %s17 = scalar_select 0, %s16, %s14
  // Predicated region
  $region2: #{deepar_forward.2} parent=0 // pred_check
    _
  $region3: #{deepar_forward.2} parent=0 // pred_check_branch
    %19 = sbr.rel (0) target = $region5
  $region4: #{deepar_forward.2} parent=0 // pred_region
    _
  $region5: #{deepar_forward.2} parent=0 // pred_fallthru
    _
  // Predicated region
  $region6: #{deepar_forward.2} parent=0 // pred_check
    _
  $region7: #{deepar_forward.2} parent=0 // pred_check_branch
    %21 = sbr.rel (0) target = $region9
  $region8: #{deepar_forward.2} parent=0 // pred_region
    _
  $region9: #{deepar_forward.2} parent=0 // pred_fallthru
    _
  // Predicated region
  $region10: #{deepar_forward.2} parent=0 // pred_check
    _
  $region11: #{deepar_forward.2} parent=0 // pred_check_branch
    %23 = sbr.rel (0) target = $region13
  $region12: #{deepar_forward.2} parent=0 // pred_region
    _
  $region13: #{deepar_forward.2} parent=0 // pred_fallthru
    _
  // Predicated region
  $region14: #{deepar_forward.2} parent=0 // pred_check
    _
  $region15: #{deepar_forward.2} parent=0 // pred_check_branch
    %25 = sbr.rel (0) target = $region17
  $region16: #{deepar_forward.2} parent=0 // pred_region
    _
  $region17: #{deepar_forward.2} parent=0 // pred_fallthru
    _
  // Predicated region
  $region18: #{deepar_forward.2} parent=0 // pred_check
    _
  $region19: #{deepar_forward.2} parent=0 // pred_check_branch
    %27 = sbr.rel (0) target = $region21
  $region20: #{deepar_forward.2} parent=0 // pred_region
    _
  $region21: #{deepar_forward.2} parent=0 // pred_fallthru
    _
  // Predicated region
  $region22: #{deepar_forward.2} parent=0 // pred_check
    _
  $region23: #{deepar_forward.2} parent=0 // pred_check_branch
    %29 = sbr.rel (0) target = $region25
  $region24: #{deepar_forward.2} parent=0 // pred_region
    _
  $region25: #{deepar_forward.2} parent=0 // pred_fallthru
    _
  // Predicated region
  $region26: #{deepar_forward.2} parent=0 // pred_check
    _
  $region27: #{deepar_forward.2} parent=0 // pred_check_branch
    %31 = sbr.rel (0) target = $region29
  $region28: #{deepar_forward.2} parent=0 // pred_region
    _
  $region29: #{deepar_forward.2} parent=0 // pred_fallthru
    _
  // Predicated region
  $region30: #{deepar_forward.2} parent=0 // pred_check
    _
  $region31: #{deepar_forward.2} parent=0 // pred_check_branch
    %33 = sbr.rel (0) target = $region33
  $region32: #{deepar_forward.2} parent=0 // pred_region
    _
  $region33: #{deepar_forward.2} parent=0 // pred_fallthru
    _
  %v34 = vld [vmem:[%s0] sm:$0xff]
  %v35 = vld [vmem:[%s0 + $0x8] sm:$0xff]
  %v36 = vld [vmem:[%s1] sm:$0xff]
  %v37 = vld [vmem:[%s1 + $0x8] sm:$0x3]
  %v38 = vld [vmem:[%s3] sm:$0x1]
  %v40 = vlaneseq
  %v41 = vshrl.u32 %v40, 7
  %v42 = vsub.s32 0, %v41
  %v43 = vrot.slane %v38, %v42
  %vm45 = vcmask 80896
  %v47 = vsel %vm45, %v34, 0
  %v50 = vsel %vm45, %v35, 0
  %vm52 = vcmask 1041408
  %v54 = vsel %vm52, %v37, 0
  %56 = vmatprep.subr.mxu0 0.0
  %57 = vmatpush1.msra.mxu0 0.0
  %58 = vmatprep.subr.mxu0 0.0
  %59 = vmatpush1.msra.mxu0 0.0
  %60 = vmatprep.subr.mxu0 0.0
  %61 = vmatpush1.msra.mxu0 0.0
  %62 = vmatprep.subr.mxu0 0.0
  %63 = vmatpush1.msra.mxu0 0.0
  %64 = vmatprep.subr.mxu0 0.0
  %65 = vmatpush1.msra.mxu0 0.0
  %66 = vmatprep.subr.mxu0 0.0
  %67 = vmatpush1.msra.mxu0 0.0
  %68 = vmatprep.subr.mxu0 0.0
  %69 = vmatpush1.msra.mxu0 0.0
  %70 = vmatprep.subr.mxu0 0.0
  %71 = vmatpush1.msra.mxu0 0.0
  %72 = vmatprep.subr.mxu0 0.0
  %73 = vmatpush1.msra.mxu0 0.0
  %74 = vmatprep.subr.mxu0 0.0
  %75 = vmatpush1.msra.mxu0 0.0
  %76 = vmatprep.subr.mxu0 0.0
  %77 = vmatpush1.msra.mxu0 0.0
  %78 = vmatprep.subr.mxu0 0.0
  %79 = vmatpush1.msra.mxu0 0.0
  %80 = vmatprep.subr.mxu0 0.0
  %81 = vmatpush1.msra.mxu0 0.0
  %82 = vmatprep.subr.mxu0 0.0
  %83 = vmatpush1.msra.mxu0 0.0
  %84 = vmatprep.subr.mxu0 0.0
  %85 = vmatpush1.msra.mxu0 %v54
  %86 = vmatprep.subr.mxu0 0.0
  %87 = vmatpush1.msra.mxu0 %v36
  %88 = vmatprep.subr.mxu0 0.0
  %89 = vmatpush2.msra.mxu0 0.0
  %90 = vmatprep.subr.mxu0 0.0
  %91 = vmatpush2.msra.mxu0 0.0
  %92 = vmatprep.subr.mxu0 0.0
  %93 = vmatpush2.msra.mxu0 0.0
  %94 = vmatprep.subr.mxu0 0.0
  %95 = vmatpush2.msra.mxu0 0.0
  %96 = vmatprep.subr.mxu0 0.0
  %97 = vmatpush2.msra.mxu0 0.0
  %98 = vmatprep.subr.mxu0 0.0
  %99 = vmatpush2.msra.mxu0 0.0
  %100 = vmatprep.subr.mxu0 0.0
  %101 = vmatpush2.msra.mxu0 0.0
  %102 = vmatprep.subr.mxu0 0.0
  %103 = vmatpush2.msra.mxu0 0.0
  %104 = vmatprep.subr.mxu0 0.0
  %105 = vmatpush2.msra.mxu0 0.0
  %106 = vmatprep.subr.mxu0 0.0
  %107 = vmatpush2.msra.mxu0 0.0
  %108 = vmatprep.subr.mxu0 0.0
  %109 = vmatpush2.msra.mxu0 0.0
  %110 = vmatprep.subr.mxu0 0.0
  %111 = vmatpush2.msra.mxu0 0.0
  %112 = vmatprep.subr.mxu0 0.0
  %113 = vmatpush2.msra.mxu0 0.0
  %114 = vmatprep.subr.mxu0 0.0
  %115 = vmatpush2.msra.mxu0 0.0
  %116 = vmatprep.subr.mxu0 0.0
  %117 = vmatpush2.msra.mxu0 0.0
  %118 = vmatprep.subr.mxu0 0.0
  %119 = vmatpush2.msra.mxu0 0.0
  %120 = vmatprep.mubr.f32.mxu0 0.0
  %121 = vmatmul.mubr.f32.gmra.mxu0 %v47
  %v122 = vpop.f32.mrf.mxu0
  %v123 = vadd.f32 %v43, %v122
  %v124 = vpop.f32.mrf.mxu0
  %125 = vmatprep.mubr.f32.mxu0 0.0
  %126 = vmatmul.mubr.f32.gmra.mxu0 %v50
  %v127 = vpop.f32.mrf.mxu0
  %v128 = vadd.f32 %v43, %v127
  %v129 = vpop.f32.mrf.mxu0
  %130 = vdwg.mxu0
  %v131 = vld [vmem:[%s2] sm:$0xff]
  %v132 = vld [vmem:[%s2 + $0x8] sm:$0xff]
  %v133 = vld [vmem:[%s2 + $0x10] sm:$0xff]
  %v134 = vld [vmem:[%s2 + $0x18] sm:$0xff]
  %v135 = vld [vmem:[%s4] sm:$0xff]
  %v136 = vld [vmem:[%s4 + $0x8] sm:$0xff]
  %v137 = vld [vmem:[%s4 + $0x10] sm:$0xff]
  %v138 = vld [vmem:[%s4 + $0x18] sm:$0xff]
  %v139 = vld [vmem:[%s4 + $0x20] sm:$0xff]
  %v140 = vld [vmem:[%s4 + $0x28] sm:$0xff]
  %v141 = vld [vmem:[%s4 + $0x30] sm:$0xff]
  %v142 = vld [vmem:[%s4 + $0x38] sm:$0xff]
  %v143 = vld [vmem:[%s5] sm:$0x1]
  %vm144 = vcmask 261120
  %v146 = vsel %vm144, 0.0, 0
  %148 = vmatprep.subr.mxu0 0.0
  %149 = vmatpush1.msra.mxu0 0.0
  %150 = vmatprep.subr.mxu0 0.0
  %151 = vmatpush1.msra.mxu0 0.0
  %152 = vmatprep.subr.mxu0 0.0
  %153 = vmatpush1.msra.mxu0 0.0
  %154 = vmatprep.subr.mxu0 0.0
  %155 = vmatpush1.msra.mxu0 0.0
  %156 = vmatprep.subr.mxu0 0.0
  %157 = vmatpush1.msra.mxu0 0.0
  %158 = vmatprep.subr.mxu0 0.0
  %159 = vmatpush1.msra.mxu0 0.0
  %160 = vmatprep.subr.mxu0 0.0
  %161 = vmatpush1.msra.mxu0 0.0
  %162 = vmatprep.subr.mxu0 0.0
  %163 = vmatpush1.msra.mxu0 0.0
  %164 = vmatprep.subr.mxu0 0.0
  %165 = vmatpush1.msra.mxu0 0.0
  %166 = vmatprep.subr.mxu0 0.0
  %167 = vmatpush1.msra.mxu0 0.0
  %168 = vmatprep.subr.mxu0 0.0
  %169 = vmatpush1.msra.mxu0 0.0
  %170 = vmatprep.subr.mxu0 0.0
  %171 = vmatpush1.msra.mxu0 0.0
  %172 = vmatprep.subr.mxu0 0.0
  %173 = vmatpush1.msra.mxu0 %v134
  %174 = vmatprep.subr.mxu0 0.0
  %175 = vmatpush1.msra.mxu0 %v133
  %176 = vmatprep.subr.mxu0 0.0
  %177 = vmatpush1.msra.mxu0 %v132
  %178 = vmatprep.subr.mxu0 0.0
  %179 = vmatpush1.msra.mxu0 %v131
  %180 = vmatprep.subr.mxu0 0.0
  %181 = vmatpush2.msra.mxu0 0.0
  %182 = vmatprep.subr.mxu0 0.0
  %183 = vmatpush2.msra.mxu0 0.0
  %184 = vmatprep.subr.mxu0 0.0
  %185 = vmatpush2.msra.mxu0 0.0
  %186 = vmatprep.subr.mxu0 0.0
  %187 = vmatpush2.msra.mxu0 0.0
  %188 = vmatprep.subr.mxu0 0.0
  %189 = vmatpush2.msra.mxu0 0.0
  %190 = vmatprep.subr.mxu0 0.0
  %191 = vmatpush2.msra.mxu0 0.0
  %192 = vmatprep.subr.mxu0 0.0
  %193 = vmatpush2.msra.mxu0 0.0
  %194 = vmatprep.subr.mxu0 0.0
  %195 = vmatpush2.msra.mxu0 0.0
  %196 = vmatprep.subr.mxu0 0.0
  %197 = vmatpush2.msra.mxu0 0.0
  %198 = vmatprep.subr.mxu0 0.0
  %199 = vmatpush2.msra.mxu0 0.0
  %200 = vmatprep.subr.mxu0 0.0
  %201 = vmatpush2.msra.mxu0 0.0
  %202 = vmatprep.subr.mxu0 0.0
  %203 = vmatpush2.msra.mxu0 0.0
  %204 = vmatprep.subr.mxu0 0.0
  %205 = vmatpush2.msra.mxu0 0.0
  %206 = vmatprep.subr.mxu0 0.0
  %207 = vmatpush2.msra.mxu0 0.0
  %208 = vmatprep.subr.mxu0 0.0
  %209 = vmatpush2.msra.mxu0 0.0
  %210 = vmatprep.subr.mxu0 0.0
  %211 = vmatpush2.msra.mxu0 0.0
  %212 = vmatprep.mubr.f32.mxu0 0.0
  %213 = vmatmul.mubr.f32.gmra.mxu0 %v146
  %v214 = vpop.f32.mrf.mxu0
  %v215 = vadd.f32 0.0, %v214
  %v216 = vpop.f32.mrf.mxu0
  %217 = vdwg.mxu0
  %v218 = vadd.f32 %v123, %v215
  %v219 = vxor.u32 %v218, 2147483648
  %v220 = vmul.f32 %v219, 1.442695
  %v221 = vpow.pop %v220
  %v222 = vadd.f32 %v221, 1.0
  %v223 = vrcp.pop %v222
  %v224 = vmul.f32 1.0, %v223
  %v225 = vtanh.pop %v218
  %v226 = vmul.f32 %v224, 0.0
  %228 = vrot.lane.b32.xlu0 %v225, 64
  %v229 = vpop.permute.xlu0 %228
  %v231 = vmul.f32 %v224, %v229
  %233 = vrot.lane.b32.xlu0 %v231, 32
  %v234 = vpop.permute.xlu0 %233
  %v236 = vadd.f32 %v226, %v234
  %v237 = vtanh.pop %v236
  %239 = vrot.lane.b32.xlu0 %v237, 64
  %v240 = vpop.permute.xlu0 %239
  %v242 = vmul.f32 %v224, %v240
  %244 = vrot.lane.b32.xlu0 %v242, 32
  %v245 = vpop.permute.xlu0 %244
  %v247 = vsel %vm144, %v245, 0.0
  %v249 = vlaneseq
  %v250 = vshrl.u32 %v249, 7
  %v251 = vsub.s32 0, %v250
  %v252 = vrot.slane %v143, %v251
  %vm254 = vcmask 523264
  %v256 = vsel %vm254, %v247, 0
  %258 = vmatprep.subr.mxu0 0.0
  %259 = vmatpush1.msra.mxu0 0.0
  %260 = vmatprep.subr.mxu0 0.0
  %261 = vmatpush1.msra.mxu0 0.0
  %262 = vmatprep.subr.mxu0 0.0
  %263 = vmatpush1.msra.mxu0 0.0
  %264 = vmatprep.subr.mxu0 0.0
  %265 = vmatpush1.msra.mxu0 0.0
  %266 = vmatprep.subr.mxu0 0.0
  %267 = vmatpush1.msra.mxu0 0.0
  %268 = vmatprep.subr.mxu0 0.0
  %269 = vmatpush1.msra.mxu0 0.0
  %270 = vmatprep.subr.mxu0 0.0
  %271 = vmatpush1.msra.mxu0 0.0
  %272 = vmatprep.subr.mxu0 0.0
  %273 = vmatpush1.msra.mxu0 0.0
  %274 = vmatprep.subr.mxu0 0.0
  %275 = vmatpush1.msra.mxu0 %v142
  %276 = vmatprep.subr.mxu0 0.0
  %277 = vmatpush1.msra.mxu0 %v141
  %278 = vmatprep.subr.mxu0 0.0
  %279 = vmatpush1.msra.mxu0 %v140
  %280 = vmatprep.subr.mxu0 0.0
  %281 = vmatpush1.msra.mxu0 %v139
  %282 = vmatprep.subr.mxu0 0.0
  %283 = vmatpush1.msra.mxu0 %v138
  %284 = vmatprep.subr.mxu0 0.0
  %285 = vmatpush1.msra.mxu0 %v137
  %286 = vmatprep.subr.mxu0 0.0
  %287 = vmatpush1.msra.mxu0 %v136
  %288 = vmatprep.subr.mxu0 0.0
  %289 = vmatpush1.msra.mxu0 %v135
  %290 = vmatprep.subr.mxu0 0.0
  %291 = vmatpush2.msra.mxu0 0.0
  %292 = vmatprep.subr.mxu0 0.0
  %293 = vmatpush2.msra.mxu0 0.0
  %294 = vmatprep.subr.mxu0 0.0
  %295 = vmatpush2.msra.mxu0 0.0
  %296 = vmatprep.subr.mxu0 0.0
  %297 = vmatpush2.msra.mxu0 0.0
  %298 = vmatprep.subr.mxu0 0.0
  %299 = vmatpush2.msra.mxu0 0.0
  %300 = vmatprep.subr.mxu0 0.0
  %301 = vmatpush2.msra.mxu0 0.0
  %302 = vmatprep.subr.mxu0 0.0
  %303 = vmatpush2.msra.mxu0 0.0
  %304 = vmatprep.subr.mxu0 0.0
  %305 = vmatpush2.msra.mxu0 0.0
  %306 = vmatprep.subr.mxu0 0.0
  %307 = vmatpush2.msra.mxu0 0.0
  %308 = vmatprep.subr.mxu0 0.0
  %309 = vmatpush2.msra.mxu0 0.0
  %310 = vmatprep.subr.mxu0 0.0
  %311 = vmatpush2.msra.mxu0 0.0
  %312 = vmatprep.subr.mxu0 0.0
  %313 = vmatpush2.msra.mxu0 0.0
  %314 = vmatprep.subr.mxu0 0.0
  %315 = vmatpush2.msra.mxu0 0.0
  %316 = vmatprep.subr.mxu0 0.0
  %317 = vmatpush2.msra.mxu0 0.0
  %318 = vmatprep.subr.mxu0 0.0
  %319 = vmatpush2.msra.mxu0 0.0
  %320 = vmatprep.subr.mxu0 0.0
  %321 = vmatpush2.msra.mxu0 0.0
  %322 = vmatprep.mubr.f32.mxu0 0.0
  %323 = vmatmul.mubr.f32.gmra.mxu0 %v256
  %v324 = vpop.f32.mrf.mxu0
  %v325 = vadd.f32 %v252, %v324
  %v326 = vpop.f32.mrf.mxu0
  %327 = vdwg.mxu0
  %v328 = vxor.u32 %v325, 2147483648
  %v329 = vmul.f32 %v328, 1.442695
  %v330 = vpow.pop %v329
  %v331 = vadd.f32 %v330, 1.0
  %v332 = vrcp.pop %v331
  %v333 = vmul.f32 1.0, %v332
  %v334 = vtanh.pop %v325
  %v335 = vmul.f32 %v333, 0.0
  %337 = vrot.lane.b32.xlu0 %v334, 64
  %v338 = vpop.permute.xlu0 %337
  %v340 = vmul.f32 %v333, %v338
  %342 = vrot.lane.b32.xlu0 %v340, 32
  %v343 = vpop.permute.xlu0 %342
  %v345 = vadd.f32 %v335, %v343
  %v346 = vtanh.pop %v345
  %348 = vrot.lane.b32.xlu0 %v346, 64
  %v349 = vpop.permute.xlu0 %348
  %v351 = vmul.f32 %v333, %v349
  %v352 = vsel %vm144, %v245, 0
  %354 = vmatprep.subr.mxu0 0.0
  %355 = vmatpush1.msra.mxu0 0.0
  %356 = vmatprep.subr.mxu0 0.0
  %357 = vmatpush1.msra.mxu0 0.0
  %358 = vmatprep.subr.mxu0 0.0
  %359 = vmatpush1.msra.mxu0 0.0
  %360 = vmatprep.subr.mxu0 0.0
  %361 = vmatpush1.msra.mxu0 0.0
  %362 = vmatprep.subr.mxu0 0.0
  %363 = vmatpush1.msra.mxu0 0.0
  %364 = vmatprep.subr.mxu0 0.0
  %365 = vmatpush1.msra.mxu0 0.0
  %366 = vmatprep.subr.mxu0 0.0
  %367 = vmatpush1.msra.mxu0 0.0
  %368 = vmatprep.subr.mxu0 0.0
  %369 = vmatpush1.msra.mxu0 0.0
  %370 = vmatprep.subr.mxu0 0.0
  %371 = vmatpush1.msra.mxu0 0.0
  %372 = vmatprep.subr.mxu0 0.0
  %373 = vmatpush1.msra.mxu0 0.0
  %374 = vmatprep.subr.mxu0 0.0
  %375 = vmatpush1.msra.mxu0 0.0
  %376 = vmatprep.subr.mxu0 0.0
  %377 = vmatpush1.msra.mxu0 0.0
  %378 = vmatprep.subr.mxu0 0.0
  %379 = vmatpush1.msra.mxu0 %v134
  %380 = vmatprep.subr.mxu0 0.0
  %381 = vmatpush1.msra.mxu0 %v133
  %382 = vmatprep.subr.mxu0 0.0
  %383 = vmatpush1.msra.mxu0 %v132
  %384 = vmatprep.subr.mxu0 0.0
  %385 = vmatpush1.msra.mxu0 %v131
  %386 = vmatprep.subr.mxu0 0.0
  %387 = vmatpush2.msra.mxu0 0.0
  %388 = vmatprep.subr.mxu0 0.0
  %389 = vmatpush2.msra.mxu0 0.0
  %390 = vmatprep.subr.mxu0 0.0
  %391 = vmatpush2.msra.mxu0 0.0
  %392 = vmatprep.subr.mxu0 0.0
  %393 = vmatpush2.msra.mxu0 0.0
  %394 = vmatprep.subr.mxu0 0.0
  %395 = vmatpush2.msra.mxu0 0.0
  %396 = vmatprep.subr.mxu0 0.0
  %397 = vmatpush2.msra.mxu0 0.0
  %398 = vmatprep.subr.mxu0 0.0
  %399 = vmatpush2.msra.mxu0 0.0
  %400 = vmatprep.subr.mxu0 0.0
  %401 = vmatpush2.msra.mxu0 0.0
  %402 = vmatprep.subr.mxu0 0.0
  %403 = vmatpush2.msra.mxu0 0.0
  %404 = vmatprep.subr.mxu0 0.0
  %405 = vmatpush2.msra.mxu0 0.0
  %406 = vmatprep.subr.mxu0 0.0
  %407 = vmatpush2.msra.mxu0 0.0
  %408 = vmatprep.subr.mxu0 0.0
  %409 = vmatpush2.msra.mxu0 0.0
  %410 = vmatprep.subr.mxu0 0.0
  %411 = vmatpush2.msra.mxu0 0.0
  %412 = vmatprep.subr.mxu0 0.0
  %413 = vmatpush2.msra.mxu0 0.0
  %414 = vmatprep.subr.mxu0 0.0
  %415 = vmatpush2.msra.mxu0 0.0
  %416 = vmatprep.subr.mxu0 0.0
  %417 = vmatpush2.msra.mxu0 0.0
  %418 = vmatprep.mubr.f32.mxu0 0.0
  %419 = vmatmul.mubr.f32.gmra.mxu0 %v352
  %v420 = vpop.f32.mrf.mxu0
  %v421 = vadd.f32 0.0, %v420
  %v422 = vpop.f32.mrf.mxu0
  %423 = vdwg.mxu0
  %v425 = vrot.slane %v421, 6
  %v427 = vadd.f32 %v123, %v425
  %v428 = vxor.u32 %v427, 2147483648
  %v429 = vmul.f32 %v428, 1.442695
  %v430 = vpow.pop %v429
  %v431 = vadd.f32 %v430, 1.0
  %v432 = vrcp.pop %v431
  %v433 = vmul.f32 1.0, %v432
  %v434 = vtanh.pop %v427
  %v436 = vrot.slane %v236, 6
  %v438 = vmul.f32 %v433, %v436
  %440 = vrot.lane.b32.xlu0 %v434, 64
  %v441 = vpop.permute.xlu0 %440
  %v443 = vmul.f32 %v433, %v441
  %445 = vrot.lane.b32.xlu0 %v443, 32
  %v446 = vpop.permute.xlu0 %445
  %v448 = vadd.f32 %v438, %v446
  %v449 = vtanh.pop %v448
  %451 = vrot.lane.b32.xlu0 %v449, 64
  %v452 = vpop.permute.xlu0 %451
  %v454 = vmul.f32 %v433, %v452
  %456 = vrot.lane.b32.xlu0 %v454, 32
  %v457 = vpop.permute.xlu0 %456
  %v460 = vrot.slane %v351, 6
  %461 = vrot.lane.b32.xlu0 %v460, 64
  %v462 = vpop.permute.xlu0 %461
  %v464 = vsel %vm144, %v457, %v462
  %v466 = vrot.slane %v464, 2
  %v467 = vsel %vm254, %v466, 0
  %469 = vmatprep.subr.mxu0 0.0
  %470 = vmatpush1.msra.mxu0 0.0
  %471 = vmatprep.subr.mxu0 0.0
  %472 = vmatpush1.msra.mxu0 0.0
  %473 = vmatprep.subr.mxu0 0.0
  %474 = vmatpush1.msra.mxu0 0.0
  %475 = vmatprep.subr.mxu0 0.0
  %476 = vmatpush1.msra.mxu0 0.0
  %477 = vmatprep.subr.mxu0 0.0
  %478 = vmatpush1.msra.mxu0 0.0
  %479 = vmatprep.subr.mxu0 0.0
  %480 = vmatpush1.msra.mxu0 0.0
  %481 = vmatprep.subr.mxu0 0.0
  %482 = vmatpush1.msra.mxu0 0.0
  %483 = vmatprep.subr.mxu0 0.0
  %484 = vmatpush1.msra.mxu0 0.0
  %485 = vmatprep.subr.mxu0 0.0
  %486 = vmatpush1.msra.mxu0 %v142
  %487 = vmatprep.subr.mxu0 0.0
  %488 = vmatpush1.msra.mxu0 %v141
  %489 = vmatprep.subr.mxu0 0.0
  %490 = vmatpush1.msra.mxu0 %v140
  %491 = vmatprep.subr.mxu0 0.0
  %492 = vmatpush1.msra.mxu0 %v139
  %493 = vmatprep.subr.mxu0 0.0
  %494 = vmatpush1.msra.mxu0 %v138
  %495 = vmatprep.subr.mxu0 0.0
  %496 = vmatpush1.msra.mxu0 %v137
  %497 = vmatprep.subr.mxu0 0.0
  %498 = vmatpush1.msra.mxu0 %v136
  %499 = vmatprep.subr.mxu0 0.0
  %500 = vmatpush1.msra.mxu0 %v135
  %501 = vmatprep.subr.mxu0 0.0
  %502 = vmatpush2.msra.mxu0 0.0
  %503 = vmatprep.subr.mxu0 0.0
  %504 = vmatpush2.msra.mxu0 0.0
  %505 = vmatprep.subr.mxu0 0.0
  %506 = vmatpush2.msra.mxu0 0.0
  %507 = vmatprep.subr.mxu0 0.0
  %508 = vmatpush2.msra.mxu0 0.0
  %509 = vmatprep.subr.mxu0 0.0
  %510 = vmatpush2.msra.mxu0 0.0
  %511 = vmatprep.subr.mxu0 0.0
  %512 = vmatpush2.msra.mxu0 0.0
  %513 = vmatprep.subr.mxu0 0.0
  %514 = vmatpush2.msra.mxu0 0.0
  %515 = vmatprep.subr.mxu0 0.0
  %516 = vmatpush2.msra.mxu0 0.0
  %517 = vmatprep.subr.mxu0 0.0
  %518 = vmatpush2.msra.mxu0 0.0
  %519 = vmatprep.subr.mxu0 0.0
  %520 = vmatpush2.msra.mxu0 0.0
  %521 = vmatprep.subr.mxu0 0.0
  %522 = vmatpush2.msra.mxu0 0.0
  %523 = vmatprep.subr.mxu0 0.0
  %524 = vmatpush2.msra.mxu0 0.0
  %525 = vmatprep.subr.mxu0 0.0
  %526 = vmatpush2.msra.mxu0 0.0
  %527 = vmatprep.subr.mxu0 0.0
  %528 = vmatpush2.msra.mxu0 0.0
  %529 = vmatprep.subr.mxu0 0.0
  %530 = vmatpush2.msra.mxu0 0.0
  %531 = vmatprep.subr.mxu0 0.0
  %532 = vmatpush2.msra.mxu0 0.0
  %533 = vmatprep.mubr.f32.mxu0 0.0
  %534 = vmatmul.mubr.f32.gmra.mxu0 %v467
  %v535 = vpop.f32.mrf.mxu0
  %v536 = vadd.f32 %v252, %v535
  %v537 = vpop.f32.mrf.mxu0
  %538 = vdwg.mxu0
  %v539 = vxor.u32 %v536, 2147483648
  %v540 = vmul.f32 %v539, 1.442695
  %v541 = vpow.pop %v540
  %v542 = vadd.f32 %v541, 1.0
  %v543 = vrcp.pop %v542
  %v544 = vmul.f32 1.0, %v543
  %v545 = vtanh.pop %v536
  %v546 = vmul.f32 %v544, %v345
  %548 = vrot.lane.b32.xlu0 %v545, 64
  %v549 = vpop.permute.xlu0 %548
  %v551 = vmul.f32 %v544, %v549
  %553 = vrot.lane.b32.xlu0 %v551, 32
  %v554 = vpop.permute.xlu0 %553
  %v556 = vadd.f32 %v546, %v554
  %v557 = vtanh.pop %v556
  %559 = vrot.lane.b32.xlu0 %v557, 64
  %v560 = vpop.permute.xlu0 %559
  %v562 = vmul.f32 %v544, %v560
  %v563 = vrot.slane %v454, 2
  %564 = vrot.lane.b32.xlu0 %v563, 32
  %v565 = vpop.permute.xlu0 %564
  %v566 = vsel %vm144, %v565, 0
  %568 = vmatprep.subr.mxu0 0.0
  %569 = vmatpush1.msra.mxu0 0.0
  %570 = vmatprep.subr.mxu0 0.0
  %571 = vmatpush1.msra.mxu0 0.0
  %572 = vmatprep.subr.mxu0 0.0
  %573 = vmatpush1.msra.mxu0 0.0
  %574 = vmatprep.subr.mxu0 0.0
  %575 = vmatpush1.msra.mxu0 0.0
  %576 = vmatprep.subr.mxu0 0.0
  %577 = vmatpush1.msra.mxu0 0.0
  %578 = vmatprep.subr.mxu0 0.0
  %579 = vmatpush1.msra.mxu0 0.0
  %580 = vmatprep.subr.mxu0 0.0
  %581 = vmatpush1.msra.mxu0 0.0
  %582 = vmatprep.subr.mxu0 0.0
  %583 = vmatpush1.msra.mxu0 0.0
  %584 = vmatprep.subr.mxu0 0.0
  %585 = vmatpush1.msra.mxu0 0.0
  %586 = vmatprep.subr.mxu0 0.0
  %587 = vmatpush1.msra.mxu0 0.0
  %588 = vmatprep.subr.mxu0 0.0
  %589 = vmatpush1.msra.mxu0 0.0
  %590 = vmatprep.subr.mxu0 0.0
  %591 = vmatpush1.msra.mxu0 0.0
  %592 = vmatprep.subr.mxu0 0.0
  %593 = vmatpush1.msra.mxu0 %v134
  %594 = vmatprep.subr.mxu0 0.0
  %595 = vmatpush1.msra.mxu0 %v133
  %596 = vmatprep.subr.mxu0 0.0
  %597 = vmatpush1.msra.mxu0 %v132
  %598 = vmatprep.subr.mxu0 0.0
  %599 = vmatpush1.msra.mxu0 %v131
  %600 = vmatprep.subr.mxu0 0.0
  %601 = vmatpush2.msra.mxu0 0.0
  %602 = vmatprep.subr.mxu0 0.0
  %603 = vmatpush2.msra.mxu0 0.0
  %604 = vmatprep.subr.mxu0 0.0
  %605 = vmatpush2.msra.mxu0 0.0
  %606 = vmatprep.subr.mxu0 0.0
  %607 = vmatpush2.msra.mxu0 0.0
  %608 = vmatprep.subr.mxu0 0.0
  %609 = vmatpush2.msra.mxu0 0.0
  %610 = vmatprep.subr.mxu0 0.0
  %611 = vmatpush2.msra.mxu0 0.0
  %612 = vmatprep.subr.mxu0 0.0
  %613 = vmatpush2.msra.mxu0 0.0
  %614 = vmatprep.subr.mxu0 0.0
  %615 = vmatpush2.msra.mxu0 0.0
  %616 = vmatprep.subr.mxu0 0.0
  %617 = vmatpush2.msra.mxu0 0.0
  %618 = vmatprep.subr.mxu0 0.0
  %619 = vmatpush2.msra.mxu0 0.0
  %620 = vmatprep.subr.mxu0 0.0
  %621 = vmatpush2.msra.mxu0 0.0
  %622 = vmatprep.subr.mxu0 0.0
  %623 = vmatpush2.msra.mxu0 0.0
  %624 = vmatprep.subr.mxu0 0.0
  %625 = vmatpush2.msra.mxu0 0.0
  %626 = vmatprep.subr.mxu0 0.0
  %627 = vmatpush2.msra.mxu0 0.0
  %628 = vmatprep.subr.mxu0 0.0
  %629 = vmatpush2.msra.mxu0 0.0
  %630 = vmatprep.subr.mxu0 0.0
  %631 = vmatpush2.msra.mxu0 0.0
  %632 = vmatprep.mubr.f32.mxu0 0.0
  %633 = vmatmul.mubr.f32.gmra.mxu0 %v566
  %v634 = vpop.f32.mrf.mxu0
  %v635 = vadd.f32 0.0, %v634
  %v636 = vpop.f32.mrf.mxu0
  %637 = vdwg.mxu0
  %v639 = vrot.slane %v635, 4
  %v641 = vadd.f32 %v123, %v639
  %v642 = vxor.u32 %v641, 2147483648
  %v643 = vmul.f32 %v642, 1.442695
  %v644 = vpow.pop %v643
  %v645 = vadd.f32 %v644, 1.0
  %v646 = vrcp.pop %v645
  %v647 = vmul.f32 1.0, %v646
  %v648 = vtanh.pop %v641
  %v650 = vrot.slane %v448, 6
  %v652 = vmul.f32 %v647, %v650
  %654 = vrot.lane.b32.xlu0 %v648, 64
  %v655 = vpop.permute.xlu0 %654
  %v657 = vmul.f32 %v647, %v655
  %659 = vrot.lane.b32.xlu0 %v657, 32
  %v660 = vpop.permute.xlu0 %659
  %v662 = vadd.f32 %v652, %v660
  %v663 = vtanh.pop %v662
  %665 = vrot.lane.b32.xlu0 %v663, 64
  %v666 = vpop.permute.xlu0 %665
  %v668 = vmul.f32 %v647, %v666
  %670 = vrot.lane.b32.xlu0 %v668, 32
  %v671 = vpop.permute.xlu0 %670
  %v674 = vrot.slane %v562, 4
  %675 = vrot.lane.b32.xlu0 %v674, 64
  %v676 = vpop.permute.xlu0 %675
  %v678 = vsel %vm144, %v671, %v676
  %v680 = vrot.slane %v678, 4
  %v681 = vsel %vm254, %v680, 0
  %683 = vmatprep.subr.mxu0 0.0
  %684 = vmatpush1.msra.mxu0 0.0
  %685 = vmatprep.subr.mxu0 0.0
  %686 = vmatpush1.msra.mxu0 0.0
  %687 = vmatprep.subr.mxu0 0.0
  %688 = vmatpush1.msra.mxu0 0.0
  %689 = vmatprep.subr.mxu0 0.0
  %690 = vmatpush1.msra.mxu0 0.0
  %691 = vmatprep.subr.mxu0 0.0
  %692 = vmatpush1.msra.mxu0 0.0
  %693 = vmatprep.subr.mxu0 0.0
  %694 = vmatpush1.msra.mxu0 0.0
  %695 = vmatprep.subr.mxu0 0.0
  %696 = vmatpush1.msra.mxu0 0.0
  %697 = vmatprep.subr.mxu0 0.0
  %698 = vmatpush1.msra.mxu0 0.0
  %699 = vmatprep.subr.mxu0 0.0
  %700 = vmatpush1.msra.mxu0 %v142
  %701 = vmatprep.subr.mxu0 0.0
  %702 = vmatpush1.msra.mxu0 %v141
  %703 = vmatprep.subr.mxu0 0.0
  %704 = vmatpush1.msra.mxu0 %v140
  %705 = vmatprep.subr.mxu0 0.0
  %706 = vmatpush1.msra.mxu0 %v139
  %707 = vmatprep.subr.mxu0 0.0
  %708 = vmatpush1.msra.mxu0 %v138
  %709 = vmatprep.subr.mxu0 0.0
  %710 = vmatpush1.msra.mxu0 %v137
  %711 = vmatprep.subr.mxu0 0.0
  %712 = vmatpush1.msra.mxu0 %v136
  %713 = vmatprep.subr.mxu0 0.0
  %714 = vmatpush1.msra.mxu0 %v135
  %715 = vmatprep.subr.mxu0 0.0
  %716 = vmatpush2.msra.mxu0 0.0
  %717 = vmatprep.subr.mxu0 0.0
  %718 = vmatpush2.msra.mxu0 0.0
  %719 = vmatprep.subr.mxu0 0.0
  %720 = vmatpush2.msra.mxu0 0.0
  %721 = vmatprep.subr.mxu0 0.0
  %722 = vmatpush2.msra.mxu0 0.0
  %723 = vmatprep.subr.mxu0 0.0
  %724 = vmatpush2.msra.mxu0 0.0
  %725 = vmatprep.subr.mxu0 0.0
  %726 = vmatpush2.msra.mxu0 0.0
  %727 = vmatprep.subr.mxu0 0.0
  %728 = vmatpush2.msra.mxu0 0.0
  %729 = vmatprep.subr.mxu0 0.0
  %730 = vmatpush2.msra.mxu0 0.0
  %731 = vmatprep.subr.mxu0 0.0
  %732 = vmatpush2.msra.mxu0 0.0
  %733 = vmatprep.subr.mxu0 0.0
  %734 = vmatpush2.msra.mxu0 0.0
  %735 = vmatprep.subr.mxu0 0.0
  %736 = vmatpush2.msra.mxu0 0.0
  %737 = vmatprep.subr.mxu0 0.0
  %738 = vmatpush2.msra.mxu0 0.0
  %739 = vmatprep.subr.mxu0 0.0
  %740 = vmatpush2.msra.mxu0 0.0
  %741 = vmatprep.subr.mxu0 0.0
  %742 = vmatpush2.msra.mxu0 0.0
  %743 = vmatprep.subr.mxu0 0.0
  %744 = vmatpush2.msra.mxu0 0.0
  %745 = vmatprep.subr.mxu0 0.0
  %746 = vmatpush2.msra.mxu0 0.0
  %747 = vmatprep.mubr.f32.mxu0 0.0
  %748 = vmatmul.mubr.f32.gmra.mxu0 %v681
  %v749 = vpop.f32.mrf.mxu0
  %v750 = vadd.f32 %v252, %v749
  %v751 = vpop.f32.mrf.mxu0
  %752 = vdwg.mxu0
  %v753 = vxor.u32 %v750, 2147483648
  %v754 = vmul.f32 %v753, 1.442695
  %v755 = vpow.pop %v754
  %v756 = vadd.f32 %v755, 1.0
  %v757 = vrcp.pop %v756
  %v758 = vmul.f32 1.0, %v757
  %v759 = vtanh.pop %v750
  %v760 = vmul.f32 %v758, %v556
  %762 = vrot.lane.b32.xlu0 %v759, 64
  %v763 = vpop.permute.xlu0 %762
  %v765 = vmul.f32 %v758, %v763
  %767 = vrot.lane.b32.xlu0 %v765, 32
  %v768 = vpop.permute.xlu0 %767
  %v770 = vadd.f32 %v760, %v768
  %v771 = vtanh.pop %v770
  %773 = vrot.lane.b32.xlu0 %v771, 64
  %v774 = vpop.permute.xlu0 %773
  %v776 = vmul.f32 %v758, %v774
  %v777 = vrot.slane %v668, 4
  %778 = vrot.lane.b32.xlu0 %v777, 32
  %v779 = vpop.permute.xlu0 %778
  %v780 = vsel %vm144, %v779, 0
  %782 = vmatprep.subr.mxu0 0.0
  %783 = vmatpush1.msra.mxu0 0.0
  %784 = vmatprep.subr.mxu0 0.0
  %785 = vmatpush1.msra.mxu0 0.0
  %786 = vmatprep.subr.mxu0 0.0
  %787 = vmatpush1.msra.mxu0 0.0
  %788 = vmatprep.subr.mxu0 0.0
  %789 = vmatpush1.msra.mxu0 0.0
  %790 = vmatprep.subr.mxu0 0.0
  %791 = vmatpush1.msra.mxu0 0.0
  %792 = vmatprep.subr.mxu0 0.0
  %793 = vmatpush1.msra.mxu0 0.0
  %794 = vmatprep.subr.mxu0 0.0
  %795 = vmatpush1.msra.mxu0 0.0
  %796 = vmatprep.subr.mxu0 0.0
  %797 = vmatpush1.msra.mxu0 0.0
  %798 = vmatprep.subr.mxu0 0.0
  %799 = vmatpush1.msra.mxu0 0.0
  %800 = vmatprep.subr.mxu0 0.0
  %801 = vmatpush1.msra.mxu0 0.0
  %802 = vmatprep.subr.mxu0 0.0
  %803 = vmatpush1.msra.mxu0 0.0
  %804 = vmatprep.subr.mxu0 0.0
  %805 = vmatpush1.msra.mxu0 0.0
  %806 = vmatprep.subr.mxu0 0.0
  %807 = vmatpush1.msra.mxu0 %v134
  %808 = vmatprep.subr.mxu0 0.0
  %809 = vmatpush1.msra.mxu0 %v133
  %810 = vmatprep.subr.mxu0 0.0
  %811 = vmatpush1.msra.mxu0 %v132
  %812 = vmatprep.subr.mxu0 0.0
  %813 = vmatpush1.msra.mxu0 %v131
  %814 = vmatprep.subr.mxu0 0.0
  %815 = vmatpush2.msra.mxu0 0.0
  %816 = vmatprep.subr.mxu0 0.0
  %817 = vmatpush2.msra.mxu0 0.0
  %818 = vmatprep.subr.mxu0 0.0
  %819 = vmatpush2.msra.mxu0 0.0
  %820 = vmatprep.subr.mxu0 0.0
  %821 = vmatpush2.msra.mxu0 0.0
  %822 = vmatprep.subr.mxu0 0.0
  %823 = vmatpush2.msra.mxu0 0.0
  %824 = vmatprep.subr.mxu0 0.0
  %825 = vmatpush2.msra.mxu0 0.0
  %826 = vmatprep.subr.mxu0 0.0
  %827 = vmatpush2.msra.mxu0 0.0
  %828 = vmatprep.subr.mxu0 0.0
  %829 = vmatpush2.msra.mxu0 0.0
  %830 = vmatprep.subr.mxu0 0.0
  %831 = vmatpush2.msra.mxu0 0.0
  %832 = vmatprep.subr.mxu0 0.0
  %833 = vmatpush2.msra.mxu0 0.0
  %834 = vmatprep.subr.mxu0 0.0
  %835 = vmatpush2.msra.mxu0 0.0
  %836 = vmatprep.subr.mxu0 0.0
  %837 = vmatpush2.msra.mxu0 0.0
  %838 = vmatprep.subr.mxu0 0.0
  %839 = vmatpush2.msra.mxu0 0.0
  %840 = vmatprep.subr.mxu0 0.0
  %841 = vmatpush2.msra.mxu0 0.0
  %842 = vmatprep.subr.mxu0 0.0
  %843 = vmatpush2.msra.mxu0 0.0
  %844 = vmatprep.subr.mxu0 0.0
  %845 = vmatpush2.msra.mxu0 0.0
  %846 = vmatprep.mubr.f32.mxu0 0.0
  %847 = vmatmul.mubr.f32.gmra.mxu0 %v780
  %v848 = vpop.f32.mrf.mxu0
  %v849 = vadd.f32 0.0, %v848
  %v850 = vpop.f32.mrf.mxu0
  %851 = vdwg.mxu0
  %v853 = vrot.slane %v849, 2
  %v855 = vadd.f32 %v123, %v853
  %v856 = vxor.u32 %v855, 2147483648
  %v857 = vmul.f32 %v856, 1.442695
  %v858 = vpow.pop %v857
  %v859 = vadd.f32 %v858, 1.0
  %v860 = vrcp.pop %v859
  %v861 = vmul.f32 1.0, %v860
  %v862 = vtanh.pop %v855
  %v864 = vrot.slane %v662, 6
  %v866 = vmul.f32 %v861, %v864
  %868 = vrot.lane.b32.xlu0 %v862, 64
  %v869 = vpop.permute.xlu0 %868
  %v871 = vmul.f32 %v861, %v869
  %873 = vrot.lane.b32.xlu0 %v871, 32
  %v874 = vpop.permute.xlu0 %873
  %v876 = vadd.f32 %v866, %v874
  %v877 = vtanh.pop %v876
  %879 = vrot.lane.b32.xlu0 %v877, 64
  %v880 = vpop.permute.xlu0 %879
  %v882 = vmul.f32 %v861, %v880
  %884 = vrot.lane.b32.xlu0 %v882, 32
  %v885 = vpop.permute.xlu0 %884
  %v888 = vrot.slane %v776, 2
  %889 = vrot.lane.b32.xlu0 %v888, 64
  %v890 = vpop.permute.xlu0 %889
  %v892 = vsel %vm144, %v885, %v890
  %v894 = vrot.slane %v892, 6
  %v895 = vsel %vm254, %v894, 0
  %897 = vmatprep.subr.mxu0 0.0
  %898 = vmatpush1.msra.mxu0 0.0
  %899 = vmatprep.subr.mxu0 0.0
  %900 = vmatpush1.msra.mxu0 0.0
  %901 = vmatprep.subr.mxu0 0.0
  %902 = vmatpush1.msra.mxu0 0.0
  %903 = vmatprep.subr.mxu0 0.0
  %904 = vmatpush1.msra.mxu0 0.0
  %905 = vmatprep.subr.mxu0 0.0
  %906 = vmatpush1.msra.mxu0 0.0
  %907 = vmatprep.subr.mxu0 0.0
  %908 = vmatpush1.msra.mxu0 0.0
  %909 = vmatprep.subr.mxu0 0.0
  %910 = vmatpush1.msra.mxu0 0.0
  %911 = vmatprep.subr.mxu0 0.0
  %912 = vmatpush1.msra.mxu0 0.0
  %913 = vmatprep.subr.mxu0 0.0
  %914 = vmatpush1.msra.mxu0 %v142
  %915 = vmatprep.subr.mxu0 0.0
  %916 = vmatpush1.msra.mxu0 %v141
  %917 = vmatprep.subr.mxu0 0.0
  %918 = vmatpush1.msra.mxu0 %v140
  %919 = vmatprep.subr.mxu0 0.0
  %920 = vmatpush1.msra.mxu0 %v139
  %921 = vmatprep.subr.mxu0 0.0
  %922 = vmatpush1.msra.mxu0 %v138
  %923 = vmatprep.subr.mxu0 0.0
  %924 = vmatpush1.msra.mxu0 %v137
  %925 = vmatprep.subr.mxu0 0.0
  %926 = vmatpush1.msra.mxu0 %v136
  %927 = vmatprep.subr.mxu0 0.0
  %928 = vmatpush1.msra.mxu0 %v135
  %929 = vmatprep.subr.mxu0 0.0
  %930 = vmatpush2.msra.mxu0 0.0
  %931 = vmatprep.subr.mxu0 0.0
  %932 = vmatpush2.msra.mxu0 0.0
  %933 = vmatprep.subr.mxu0 0.0
  %934 = vmatpush2.msra.mxu0 0.0
  %935 = vmatprep.subr.mxu0 0.0
  %936 = vmatpush2.msra.mxu0 0.0
  %937 = vmatprep.subr.mxu0 0.0
  %938 = vmatpush2.msra.mxu0 0.0
  %939 = vmatprep.subr.mxu0 0.0
  %940 = vmatpush2.msra.mxu0 0.0
  %941 = vmatprep.subr.mxu0 0.0
  %942 = vmatpush2.msra.mxu0 0.0
  %943 = vmatprep.subr.mxu0 0.0
  %944 = vmatpush2.msra.mxu0 0.0
  %945 = vmatprep.subr.mxu0 0.0
  %946 = vmatpush2.msra.mxu0 0.0
  %947 = vmatprep.subr.mxu0 0.0
  %948 = vmatpush2.msra.mxu0 0.0
  %949 = vmatprep.subr.mxu0 0.0
  %950 = vmatpush2.msra.mxu0 0.0
  %951 = vmatprep.subr.mxu0 0.0
  %952 = vmatpush2.msra.mxu0 0.0
  %953 = vmatprep.subr.mxu0 0.0
  %954 = vmatpush2.msra.mxu0 0.0
  %955 = vmatprep.subr.mxu0 0.0
  %956 = vmatpush2.msra.mxu0 0.0
  %957 = vmatprep.subr.mxu0 0.0
  %958 = vmatpush2.msra.mxu0 0.0
  %959 = vmatprep.subr.mxu0 0.0
  %960 = vmatpush2.msra.mxu0 0.0
  %961 = vmatprep.mubr.f32.mxu0 0.0
  %962 = vmatmul.mubr.f32.gmra.mxu0 %v895
  %v963 = vpop.f32.mrf.mxu0
  %v964 = vadd.f32 %v252, %v963
  %v965 = vpop.f32.mrf.mxu0
  %966 = vdwg.mxu0
  %v967 = vxor.u32 %v964, 2147483648
  %v968 = vmul.f32 %v967, 1.442695
  %v969 = vpow.pop %v968
  %v970 = vadd.f32 %v969, 1.0
  %v971 = vrcp.pop %v970
  %v972 = vmul.f32 1.0, %v971
  %v973 = vtanh.pop %v964
  %v974 = vmul.f32 %v972, %v770
  %976 = vrot.lane.b32.xlu0 %v973, 64
  %v977 = vpop.permute.xlu0 %976
  %v979 = vmul.f32 %v972, %v977
  %981 = vrot.lane.b32.xlu0 %v979, 32
  %v982 = vpop.permute.xlu0 %981
  %v984 = vadd.f32 %v974, %v982
  %v985 = vtanh.pop %v984
  %987 = vrot.lane.b32.xlu0 %v985, 64
  %v988 = vpop.permute.xlu0 %987
  %v990 = vmul.f32 %v972, %v988
  %v991 = vrot.slane %v882, 6
  %992 = vrot.lane.b32.xlu0 %v991, 32
  %v993 = vpop.permute.xlu0 %992
  %v994 = vsel %vm144, %v993, 0
  %996 = vmatprep.subr.mxu0 0.0
  %997 = vmatpush1.msra.mxu0 0.0
  %998 = vmatprep.subr.mxu0 0.0
  %999 = vmatpush1.msra.mxu0 0.0
  %1000 = vmatprep.subr.mxu0 0.0
  %1001 = vmatpush1.msra.mxu0 0.0
  %1002 = vmatprep.subr.mxu0 0.0
  %1003 = vmatpush1.msra.mxu0 0.0
  %1004 = vmatprep.subr.mxu0 0.0
  %1005 = vmatpush1.msra.mxu0 0.0
  %1006 = vmatprep.subr.mxu0 0.0
  %1007 = vmatpush1.msra.mxu0 0.0
  %1008 = vmatprep.subr.mxu0 0.0
  %1009 = vmatpush1.msra.mxu0 0.0
  %1010 = vmatprep.subr.mxu0 0.0
  %1011 = vmatpush1.msra.mxu0 0.0
  %1012 = vmatprep.subr.mxu0 0.0
  %1013 = vmatpush1.msra.mxu0 0.0
  %1014 = vmatprep.subr.mxu0 0.0
  %1015 = vmatpush1.msra.mxu0 0.0
  %1016 = vmatprep.subr.mxu0 0.0
  %1017 = vmatpush1.msra.mxu0 0.0
  %1018 = vmatprep.subr.mxu0 0.0
  %1019 = vmatpush1.msra.mxu0 0.0
  %1020 = vmatprep.subr.mxu0 0.0
  %1021 = vmatpush1.msra.mxu0 %v134
  %1022 = vmatprep.subr.mxu0 0.0
  %1023 = vmatpush1.msra.mxu0 %v133
  %1024 = vmatprep.subr.mxu0 0.0
  %1025 = vmatpush1.msra.mxu0 %v132
  %1026 = vmatprep.subr.mxu0 0.0
  %1027 = vmatpush1.msra.mxu0 %v131
  %1028 = vmatprep.subr.mxu0 0.0
  %1029 = vmatpush2.msra.mxu0 0.0
  %1030 = vmatprep.subr.mxu0 0.0
  %1031 = vmatpush2.msra.mxu0 0.0
  %1032 = vmatprep.subr.mxu0 0.0
  %1033 = vmatpush2.msra.mxu0 0.0
  %1034 = vmatprep.subr.mxu0 0.0
  %1035 = vmatpush2.msra.mxu0 0.0
  %1036 = vmatprep.subr.mxu0 0.0
  %1037 = vmatpush2.msra.mxu0 0.0
  %1038 = vmatprep.subr.mxu0 0.0
  %1039 = vmatpush2.msra.mxu0 0.0
  %1040 = vmatprep.subr.mxu0 0.0
  %1041 = vmatpush2.msra.mxu0 0.0
  %1042 = vmatprep.subr.mxu0 0.0
  %1043 = vmatpush2.msra.mxu0 0.0
  %1044 = vmatprep.subr.mxu0 0.0
  %1045 = vmatpush2.msra.mxu0 0.0
  %1046 = vmatprep.subr.mxu0 0.0
  %1047 = vmatpush2.msra.mxu0 0.0
  %1048 = vmatprep.subr.mxu0 0.0
  %1049 = vmatpush2.msra.mxu0 0.0
  %1050 = vmatprep.subr.mxu0 0.0
  %1051 = vmatpush2.msra.mxu0 0.0
  %1052 = vmatprep.subr.mxu0 0.0
  %1053 = vmatpush2.msra.mxu0 0.0
  %1054 = vmatprep.subr.mxu0 0.0
  %1055 = vmatpush2.msra.mxu0 0.0
  %1056 = vmatprep.subr.mxu0 0.0
  %1057 = vmatpush2.msra.mxu0 0.0
  %1058 = vmatprep.subr.mxu0 0.0
  %1059 = vmatpush2.msra.mxu0 0.0
  %1060 = vmatprep.mubr.f32.mxu0 0.0
  %1061 = vmatmul.mubr.f32.gmra.mxu0 %v994
  %v1062 = vpop.f32.mrf.mxu0
  %v1063 = vadd.f32 0.0, %v1062
  %v1064 = vpop.f32.mrf.mxu0
  %1065 = vdwg.mxu0
  %v1066 = vadd.f32 %v128, %v1063
  %v1067 = vxor.u32 %v1066, 2147483648
  %v1068 = vmul.f32 %v1067, 1.442695
  %v1069 = vpow.pop %v1068
  %v1070 = vadd.f32 %v1069, 1.0
  %v1071 = vrcp.pop %v1070
  %v1072 = vmul.f32 1.0, %v1071
  %v1073 = vtanh.pop %v1066
  %v1075 = vrot.slane %v876, 6
  %v1077 = vmul.f32 %v1072, %v1075
  %1079 = vrot.lane.b32.xlu0 %v1073, 64
  %v1080 = vpop.permute.xlu0 %1079
  %v1082 = vmul.f32 %v1072, %v1080
  %1084 = vrot.lane.b32.xlu0 %v1082, 32
  %v1085 = vpop.permute.xlu0 %1084
  %v1087 = vadd.f32 %v1077, %v1085
  %v1088 = vtanh.pop %v1087
  %1090 = vrot.lane.b32.xlu0 %v1088, 64
  %v1091 = vpop.permute.xlu0 %1090
  %v1093 = vmul.f32 %v1072, %v1091
  %1095 = vrot.lane.b32.xlu0 %v1093, 32
  %v1096 = vpop.permute.xlu0 %1095
  %1099 = vrot.lane.b32.xlu0 %v990, 64
  %v1100 = vpop.permute.xlu0 %1099
  %v1102 = vsel %vm144, %v1096, %v1100
  %v1104 = vsel %vm254, %v1102, 0
  %1106 = vmatprep.subr.mxu0 0.0
  %1107 = vmatpush1.msra.mxu0 0.0
  %1108 = vmatprep.subr.mxu0 0.0
  %1109 = vmatpush1.msra.mxu0 0.0
  %1110 = vmatprep.subr.mxu0 0.0
  %1111 = vmatpush1.msra.mxu0 0.0
  %1112 = vmatprep.subr.mxu0 0.0
  %1113 = vmatpush1.msra.mxu0 0.0
  %1114 = vmatprep.subr.mxu0 0.0
  %1115 = vmatpush1.msra.mxu0 0.0
  %1116 = vmatprep.subr.mxu0 0.0
  %1117 = vmatpush1.msra.mxu0 0.0
  %1118 = vmatprep.subr.mxu0 0.0
  %1119 = vmatpush1.msra.mxu0 0.0
  %1120 = vmatprep.subr.mxu0 0.0
  %1121 = vmatpush1.msra.mxu0 0.0
  %1122 = vmatprep.subr.mxu0 0.0
  %1123 = vmatpush1.msra.mxu0 %v142
  %1124 = vmatprep.subr.mxu0 0.0
  %1125 = vmatpush1.msra.mxu0 %v141
  %1126 = vmatprep.subr.mxu0 0.0
  %1127 = vmatpush1.msra.mxu0 %v140
  %1128 = vmatprep.subr.mxu0 0.0
  %1129 = vmatpush1.msra.mxu0 %v139
  %1130 = vmatprep.subr.mxu0 0.0
  %1131 = vmatpush1.msra.mxu0 %v138
  %1132 = vmatprep.subr.mxu0 0.0
  %1133 = vmatpush1.msra.mxu0 %v137
  %1134 = vmatprep.subr.mxu0 0.0
  %1135 = vmatpush1.msra.mxu0 %v136
  %1136 = vmatprep.subr.mxu0 0.0
  %1137 = vmatpush1.msra.mxu0 %v135
  %1138 = vmatprep.subr.mxu0 0.0
  %1139 = vmatpush2.msra.mxu0 0.0
  %1140 = vmatprep.subr.mxu0 0.0
  %1141 = vmatpush2.msra.mxu0 0.0
  %1142 = vmatprep.subr.mxu0 0.0
  %1143 = vmatpush2.msra.mxu0 0.0
  %1144 = vmatprep.subr.mxu0 0.0
  %1145 = vmatpush2.msra.mxu0 0.0
  %1146 = vmatprep.subr.mxu0 0.0
  %1147 = vmatpush2.msra.mxu0 0.0
  %1148 = vmatprep.subr.mxu0 0.0
  %1149 = vmatpush2.msra.mxu0 0.0
  %1150 = vmatprep.subr.mxu0 0.0
  %1151 = vmatpush2.msra.mxu0 0.0
  %1152 = vmatprep.subr.mxu0 0.0
  %1153 = vmatpush2.msra.mxu0 0.0
  %1154 = vmatprep.subr.mxu0 0.0
  %1155 = vmatpush2.msra.mxu0 0.0
  %1156 = vmatprep.subr.mxu0 0.0
  %1157 = vmatpush2.msra.mxu0 0.0
  %1158 = vmatprep.subr.mxu0 0.0
  %1159 = vmatpush2.msra.mxu0 0.0
  %1160 = vmatprep.subr.mxu0 0.0
  %1161 = vmatpush2.msra.mxu0 0.0
  %1162 = vmatprep.subr.mxu0 0.0
  %1163 = vmatpush2.msra.mxu0 0.0
  %1164 = vmatprep.subr.mxu0 0.0
  %1165 = vmatpush2.msra.mxu0 0.0
  %1166 = vmatprep.subr.mxu0 0.0
  %1167 = vmatpush2.msra.mxu0 0.0
  %1168 = vmatprep.subr.mxu0 0.0
  %1169 = vmatpush2.msra.mxu0 0.0
  %1170 = vmatprep.mubr.f32.mxu0 0.0
  %1171 = vmatmul.mubr.f32.gmra.mxu0 %v1104
  %v1172 = vpop.f32.mrf.mxu0
  %v1173 = vadd.f32 %v252, %v1172
  %v1174 = vpop.f32.mrf.mxu0
  %1175 = vdwg.mxu0
  %v1176 = vxor.u32 %v1173, 2147483648
  %v1177 = vmul.f32 %v1176, 1.442695
  %v1178 = vpow.pop %v1177
  %v1179 = vadd.f32 %v1178, 1.0
  %v1180 = vrcp.pop %v1179
  %v1181 = vmul.f32 1.0, %v1180
  %v1182 = vtanh.pop %v1173
  %v1183 = vmul.f32 %v1181, %v984
  %1185 = vrot.lane.b32.xlu0 %v1182, 64
  %v1186 = vpop.permute.xlu0 %1185
  %v1188 = vmul.f32 %v1181, %v1186
  %1190 = vrot.lane.b32.xlu0 %v1188, 32
  %v1191 = vpop.permute.xlu0 %1190
  %v1193 = vadd.f32 %v1183, %v1191
  %v1194 = vtanh.pop %v1193
  %1196 = vrot.lane.b32.xlu0 %v1194, 64
  %v1197 = vpop.permute.xlu0 %1196
  %v1199 = vmul.f32 %v1181, %v1197
  %v1200 = vsel %vm144, %v1096, 0
  %1202 = vmatprep.subr.mxu0 0.0
  %1203 = vmatpush1.msra.mxu0 0.0
  %1204 = vmatprep.subr.mxu0 0.0
  %1205 = vmatpush1.msra.mxu0 0.0
  %1206 = vmatprep.subr.mxu0 0.0
  %1207 = vmatpush1.msra.mxu0 0.0
  %1208 = vmatprep.subr.mxu0 0.0
  %1209 = vmatpush1.msra.mxu0 0.0
  %1210 = vmatprep.subr.mxu0 0.0
  %1211 = vmatpush1.msra.mxu0 0.0
  %1212 = vmatprep.subr.mxu0 0.0
  %1213 = vmatpush1.msra.mxu0 0.0
  %1214 = vmatprep.subr.mxu0 0.0
  %1215 = vmatpush1.msra.mxu0 0.0
  %1216 = vmatprep.subr.mxu0 0.0
  %1217 = vmatpush1.msra.mxu0 0.0
  %1218 = vmatprep.subr.mxu0 0.0
  %1219 = vmatpush1.msra.mxu0 0.0
  %1220 = vmatprep.subr.mxu0 0.0
  %1221 = vmatpush1.msra.mxu0 0.0
  %1222 = vmatprep.subr.mxu0 0.0
  %1223 = vmatpush1.msra.mxu0 0.0
  %1224 = vmatprep.subr.mxu0 0.0
  %1225 = vmatpush1.msra.mxu0 0.0
  %1226 = vmatprep.subr.mxu0 0.0
  %1227 = vmatpush1.msra.mxu0 %v134
  %1228 = vmatprep.subr.mxu0 0.0
  %1229 = vmatpush1.msra.mxu0 %v133
  %1230 = vmatprep.subr.mxu0 0.0
  %1231 = vmatpush1.msra.mxu0 %v132
  %1232 = vmatprep.subr.mxu0 0.0
  %1233 = vmatpush1.msra.mxu0 %v131
  %1234 = vmatprep.subr.mxu0 0.0
  %1235 = vmatpush2.msra.mxu0 0.0
  %1236 = vmatprep.subr.mxu0 0.0
  %1237 = vmatpush2.msra.mxu0 0.0
  %1238 = vmatprep.subr.mxu0 0.0
  %1239 = vmatpush2.msra.mxu0 0.0
  %1240 = vmatprep.subr.mxu0 0.0
  %1241 = vmatpush2.msra.mxu0 0.0
  %1242 = vmatprep.subr.mxu0 0.0
  %1243 = vmatpush2.msra.mxu0 0.0
  %1244 = vmatprep.subr.mxu0 0.0
  %1245 = vmatpush2.msra.mxu0 0.0
  %1246 = vmatprep.subr.mxu0 0.0
  %1247 = vmatpush2.msra.mxu0 0.0
  %1248 = vmatprep.subr.mxu0 0.0
  %1249 = vmatpush2.msra.mxu0 0.0
  %1250 = vmatprep.subr.mxu0 0.0
  %1251 = vmatpush2.msra.mxu0 0.0
  %1252 = vmatprep.subr.mxu0 0.0
  %1253 = vmatpush2.msra.mxu0 0.0
  %1254 = vmatprep.subr.mxu0 0.0
  %1255 = vmatpush2.msra.mxu0 0.0
  %1256 = vmatprep.subr.mxu0 0.0
  %1257 = vmatpush2.msra.mxu0 0.0
  %1258 = vmatprep.subr.mxu0 0.0
  %1259 = vmatpush2.msra.mxu0 0.0
  %1260 = vmatprep.subr.mxu0 0.0
  %1261 = vmatpush2.msra.mxu0 0.0
  %1262 = vmatprep.subr.mxu0 0.0
  %1263 = vmatpush2.msra.mxu0 0.0
  %1264 = vmatprep.subr.mxu0 0.0
  %1265 = vmatpush2.msra.mxu0 0.0
  %1266 = vmatprep.mubr.f32.mxu0 0.0
  %1267 = vmatmul.mubr.f32.gmra.mxu0 %v1200
  %v1268 = vpop.f32.mrf.mxu0
  %v1269 = vadd.f32 0.0, %v1268
  %v1270 = vpop.f32.mrf.mxu0
  %1271 = vdwg.mxu0
  %v1273 = vrot.slane %v1269, 6
  %v1275 = vadd.f32 %v128, %v1273
  %v1276 = vxor.u32 %v1275, 2147483648
  %v1277 = vmul.f32 %v1276, 1.442695
  %v1278 = vpow.pop %v1277
  %v1279 = vadd.f32 %v1278, 1.0
  %v1280 = vrcp.pop %v1279
  %v1281 = vmul.f32 1.0, %v1280
  %v1282 = vtanh.pop %v1275
  %v1284 = vrot.slane %v1087, 6
  %v1286 = vmul.f32 %v1281, %v1284
  %1288 = vrot.lane.b32.xlu0 %v1282, 64
  %v1289 = vpop.permute.xlu0 %1288
  %v1291 = vmul.f32 %v1281, %v1289
  %1293 = vrot.lane.b32.xlu0 %v1291, 32
  %v1294 = vpop.permute.xlu0 %1293
  %v1296 = vadd.f32 %v1286, %v1294
  %v1297 = vtanh.pop %v1296
  %1299 = vrot.lane.b32.xlu0 %v1297, 64
  %v1300 = vpop.permute.xlu0 %1299
  %v1302 = vmul.f32 %v1281, %v1300
  %1304 = vrot.lane.b32.xlu0 %v1302, 32
  %v1305 = vpop.permute.xlu0 %1304
  %v1308 = vrot.slane %v1199, 6
  %1309 = vrot.lane.b32.xlu0 %v1308, 64
  %v1310 = vpop.permute.xlu0 %1309
  %v1312 = vsel %vm144, %v1305, %v1310
  %v1314 = vrot.slane %v1312, 2
  %v1315 = vsel %vm254, %v1314, 0
  %1317 = vmatprep.subr.mxu0 0.0
  %1318 = vmatpush1.msra.mxu0 0.0
  %1319 = vmatprep.subr.mxu0 0.0
  %1320 = vmatpush1.msra.mxu0 0.0
  %1321 = vmatprep.subr.mxu0 0.0
  %1322 = vmatpush1.msra.mxu0 0.0
  %1323 = vmatprep.subr.mxu0 0.0
  %1324 = vmatpush1.msra.mxu0 0.0
  %1325 = vmatprep.subr.mxu0 0.0
  %1326 = vmatpush1.msra.mxu0 0.0
  %1327 = vmatprep.subr.mxu0 0.0
  %1328 = vmatpush1.msra.mxu0 0.0
  %1329 = vmatprep.subr.mxu0 0.0
  %1330 = vmatpush1.msra.mxu0 0.0
  %1331 = vmatprep.subr.mxu0 0.0
  %1332 = vmatpush1.msra.mxu0 0.0
  %1333 = vmatprep.subr.mxu0 0.0
  %1334 = vmatpush1.msra.mxu0 %v142
  %1335 = vmatprep.subr.mxu0 0.0
  %1336 = vmatpush1.msra.mxu0 %v141
  %1337 = vmatprep.subr.mxu0 0.0
  %1338 = vmatpush1.msra.mxu0 %v140
  %1339 = vmatprep.subr.mxu0 0.0
  %1340 = vmatpush1.msra.mxu0 %v139
  %1341 = vmatprep.subr.mxu0 0.0
  %1342 = vmatpush1.msra.mxu0 %v138
  %1343 = vmatprep.subr.mxu0 0.0
  %1344 = vmatpush1.msra.mxu0 %v137
  %1345 = vmatprep.subr.mxu0 0.0
  %1346 = vmatpush1.msra.mxu0 %v136
  %1347 = vmatprep.subr.mxu0 0.0
  %1348 = vmatpush1.msra.mxu0 %v135
  %1349 = vmatprep.subr.mxu0 0.0
  %1350 = vmatpush2.msra.mxu0 0.0
  %1351 = vmatprep.subr.mxu0 0.0
  %1352 = vmatpush2.msra.mxu0 0.0
  %1353 = vmatprep.subr.mxu0 0.0
  %1354 = vmatpush2.msra.mxu0 0.0
  %1355 = vmatprep.subr.mxu0 0.0
  %1356 = vmatpush2.msra.mxu0 0.0
  %1357 = vmatprep.subr.mxu0 0.0
  %1358 = vmatpush2.msra.mxu0 0.0
  %1359 = vmatprep.subr.mxu0 0.0
  %1360 = vmatpush2.msra.mxu0 0.0
  %1361 = vmatprep.subr.mxu0 0.0
  %1362 = vmatpush2.msra.mxu0 0.0
  %1363 = vmatprep.subr.mxu0 0.0
  %1364 = vmatpush2.msra.mxu0 0.0
  %1365 = vmatprep.subr.mxu0 0.0
  %1366 = vmatpush2.msra.mxu0 0.0
  %1367 = vmatprep.subr.mxu0 0.0
  %1368 = vmatpush2.msra.mxu0 0.0
  %1369 = vmatprep.subr.mxu0 0.0
  %1370 = vmatpush2.msra.mxu0 0.0
  %1371 = vmatprep.subr.mxu0 0.0
  %1372 = vmatpush2.msra.mxu0 0.0
  %1373 = vmatprep.subr.mxu0 0.0
  %1374 = vmatpush2.msra.mxu0 0.0
  %1375 = vmatprep.subr.mxu0 0.0
  %1376 = vmatpush2.msra.mxu0 0.0
  %1377 = vmatprep.subr.mxu0 0.0
  %1378 = vmatpush2.msra.mxu0 0.0
  %1379 = vmatprep.subr.mxu0 0.0
  %1380 = vmatpush2.msra.mxu0 0.0
  %1381 = vmatprep.mubr.f32.mxu0 0.0
  %1382 = vmatmul.mubr.f32.gmra.mxu0 %v1315
  %v1383 = vpop.f32.mrf.mxu0
  %v1384 = vadd.f32 %v252, %v1383
  %v1385 = vpop.f32.mrf.mxu0
  %1386 = vdwg.mxu0
  %v1387 = vxor.u32 %v1384, 2147483648
  %v1388 = vmul.f32 %v1387, 1.442695
  %v1389 = vpow.pop %v1388
  %v1390 = vadd.f32 %v1389, 1.0
  %v1391 = vrcp.pop %v1390
  %v1392 = vmul.f32 1.0, %v1391
  %v1393 = vtanh.pop %v1384
  %v1394 = vmul.f32 %v1392, %v1193
  %1396 = vrot.lane.b32.xlu0 %v1393, 64
  %v1397 = vpop.permute.xlu0 %1396
  %v1399 = vmul.f32 %v1392, %v1397
  %1401 = vrot.lane.b32.xlu0 %v1399, 32
  %v1402 = vpop.permute.xlu0 %1401
  %v1404 = vadd.f32 %v1394, %v1402
  %v1405 = vtanh.pop %v1404
  %1407 = vrot.lane.b32.xlu0 %v1405, 64
  %v1408 = vpop.permute.xlu0 %1407
  %v1410 = vmul.f32 %v1392, %v1408
  %v1411 = vrot.slane %v1302, 2
  %1412 = vrot.lane.b32.xlu0 %v1411, 32
  %v1413 = vpop.permute.xlu0 %1412
  %v1414 = vsel %vm144, %v1413, 0
  %1416 = vmatprep.subr.mxu0 0.0
  %1417 = vmatpush1.msra.mxu0 0.0
  %1418 = vmatprep.subr.mxu0 0.0
  %1419 = vmatpush1.msra.mxu0 0.0
  %1420 = vmatprep.subr.mxu0 0.0
  %1421 = vmatpush1.msra.mxu0 0.0
  %1422 = vmatprep.subr.mxu0 0.0
  %1423 = vmatpush1.msra.mxu0 0.0
  %1424 = vmatprep.subr.mxu0 0.0
  %1425 = vmatpush1.msra.mxu0 0.0
  %1426 = vmatprep.subr.mxu0 0.0
  %1427 = vmatpush1.msra.mxu0 0.0
  %1428 = vmatprep.subr.mxu0 0.0
  %1429 = vmatpush1.msra.mxu0 0.0
  %1430 = vmatprep.subr.mxu0 0.0
  %1431 = vmatpush1.msra.mxu0 0.0
  %1432 = vmatprep.subr.mxu0 0.0
  %1433 = vmatpush1.msra.mxu0 0.0
  %1434 = vmatprep.subr.mxu0 0.0
  %1435 = vmatpush1.msra.mxu0 0.0
  %1436 = vmatprep.subr.mxu0 0.0
  %1437 = vmatpush1.msra.mxu0 0.0
  %1438 = vmatprep.subr.mxu0 0.0
  %1439 = vmatpush1.msra.mxu0 0.0
  %1440 = vmatprep.subr.mxu0 0.0
  %1441 = vmatpush1.msra.mxu0 %v134
  %1442 = vmatprep.subr.mxu0 0.0
  %1443 = vmatpush1.msra.mxu0 %v133
  %1444 = vmatprep.subr.mxu0 0.0
  %1445 = vmatpush1.msra.mxu0 %v132
  %1446 = vmatprep.subr.mxu0 0.0
  %1447 = vmatpush1.msra.mxu0 %v131
  %1448 = vmatprep.subr.mxu0 0.0
  %1449 = vmatpush2.msra.mxu0 0.0
  %1450 = vmatprep.subr.mxu0 0.0
  %1451 = vmatpush2.msra.mxu0 0.0
  %1452 = vmatprep.subr.mxu0 0.0
  %1453 = vmatpush2.msra.mxu0 0.0
  %1454 = vmatprep.subr.mxu0 0.0
  %1455 = vmatpush2.msra.mxu0 0.0
  %1456 = vmatprep.subr.mxu0 0.0
  %1457 = vmatpush2.msra.mxu0 0.0
  %1458 = vmatprep.subr.mxu0 0.0
  %1459 = vmatpush2.msra.mxu0 0.0
  %1460 = vmatprep.subr.mxu0 0.0
  %1461 = vmatpush2.msra.mxu0 0.0
  %1462 = vmatprep.subr.mxu0 0.0
  %1463 = vmatpush2.msra.mxu0 0.0
  %1464 = vmatprep.subr.mxu0 0.0
  %1465 = vmatpush2.msra.mxu0 0.0
  %1466 = vmatprep.subr.mxu0 0.0
  %1467 = vmatpush2.msra.mxu0 0.0
  %1468 = vmatprep.subr.mxu0 0.0
  %1469 = vmatpush2.msra.mxu0 0.0
  %1470 = vmatprep.subr.mxu0 0.0
  %1471 = vmatpush2.msra.mxu0 0.0
  %1472 = vmatprep.subr.mxu0 0.0
  %1473 = vmatpush2.msra.mxu0 0.0
  %1474 = vmatprep.subr.mxu0 0.0
  %1475 = vmatpush2.msra.mxu0 0.0
  %1476 = vmatprep.subr.mxu0 0.0
  %1477 = vmatpush2.msra.mxu0 0.0
  %1478 = vmatprep.subr.mxu0 0.0
  %1479 = vmatpush2.msra.mxu0 0.0
  %1480 = vmatprep.mubr.f32.mxu0 0.0
  %1481 = vmatmul.mubr.f32.gmra.mxu0 %v1414
  %v1482 = vpop.f32.mrf.mxu0
  %v1483 = vadd.f32 0.0, %v1482
  %v1484 = vpop.f32.mrf.mxu0
  %1485 = vdwg.mxu0
  %v1487 = vrot.slane %v1483, 4
  %v1489 = vadd.f32 %v128, %v1487
  %v1490 = vxor.u32 %v1489, 2147483648
  %v1491 = vmul.f32 %v1490, 1.442695
  %v1492 = vpow.pop %v1491
  %v1493 = vadd.f32 %v1492, 1.0
  %v1494 = vrcp.pop %v1493
  %v1495 = vmul.f32 1.0, %v1494
  %v1496 = vtanh.pop %v1489
  %v1498 = vrot.slane %v1296, 6
  %v1500 = vmul.f32 %v1495, %v1498
  %1502 = vrot.lane.b32.xlu0 %v1496, 64
  %v1503 = vpop.permute.xlu0 %1502
  %v1505 = vmul.f32 %v1495, %v1503
  %1507 = vrot.lane.b32.xlu0 %v1505, 32
  %v1508 = vpop.permute.xlu0 %1507
  %v1510 = vadd.f32 %v1500, %v1508
  %v1511 = vtanh.pop %v1510
  %1513 = vrot.lane.b32.xlu0 %v1511, 64
  %v1514 = vpop.permute.xlu0 %1513
  %v1516 = vmul.f32 %v1495, %v1514
  %1518 = vrot.lane.b32.xlu0 %v1516, 32
  %v1519 = vpop.permute.xlu0 %1518
  %v1522 = vrot.slane %v1410, 4
  %1523 = vrot.lane.b32.xlu0 %v1522, 64
  %v1524 = vpop.permute.xlu0 %1523
  %v1526 = vsel %vm144, %v1519, %v1524
  %v1528 = vrot.slane %v1526, 4
  %v1529 = vsel %vm254, %v1528, 0
  %1531 = vmatprep.subr.mxu0 0.0
  %1532 = vmatpush1.msra.mxu0 0.0
  %1533 = vmatprep.subr.mxu0 0.0
  %1534 = vmatpush1.msra.mxu0 0.0
  %1535 = vmatprep.subr.mxu0 0.0
  %1536 = vmatpush1.msra.mxu0 0.0
  %1537 = vmatprep.subr.mxu0 0.0
  %1538 = vmatpush1.msra.mxu0 0.0
  %1539 = vmatprep.subr.mxu0 0.0
  %1540 = vmatpush1.msra.mxu0 0.0
  %1541 = vmatprep.subr.mxu0 0.0
  %1542 = vmatpush1.msra.mxu0 0.0
  %1543 = vmatprep.subr.mxu0 0.0
  %1544 = vmatpush1.msra.mxu0 0.0
  %1545 = vmatprep.subr.mxu0 0.0
  %1546 = vmatpush1.msra.mxu0 0.0
  %1547 = vmatprep.subr.mxu0 0.0
  %1548 = vmatpush1.msra.mxu0 %v142
  %1549 = vmatprep.subr.mxu0 0.0
  %1550 = vmatpush1.msra.mxu0 %v141
  %1551 = vmatprep.subr.mxu0 0.0
  %1552 = vmatpush1.msra.mxu0 %v140
  %1553 = vmatprep.subr.mxu0 0.0
  %1554 = vmatpush1.msra.mxu0 %v139
  %1555 = vmatprep.subr.mxu0 0.0
  %1556 = vmatpush1.msra.mxu0 %v138
  %1557 = vmatprep.subr.mxu0 0.0
  %1558 = vmatpush1.msra.mxu0 %v137
  %1559 = vmatprep.subr.mxu0 0.0
  %1560 = vmatpush1.msra.mxu0 %v136
  %1561 = vmatprep.subr.mxu0 0.0
  %1562 = vmatpush1.msra.mxu0 %v135
  %1563 = vmatprep.subr.mxu0 0.0
  %1564 = vmatpush2.msra.mxu0 0.0
  %1565 = vmatprep.subr.mxu0 0.0
  %1566 = vmatpush2.msra.mxu0 0.0
  %1567 = vmatprep.subr.mxu0 0.0
  %1568 = vmatpush2.msra.mxu0 0.0
  %1569 = vmatprep.subr.mxu0 0.0
  %1570 = vmatpush2.msra.mxu0 0.0
  %1571 = vmatprep.subr.mxu0 0.0
  %1572 = vmatpush2.msra.mxu0 0.0
  %1573 = vmatprep.subr.mxu0 0.0
  %1574 = vmatpush2.msra.mxu0 0.0
  %1575 = vmatprep.subr.mxu0 0.0
  %1576 = vmatpush2.msra.mxu0 0.0
  %1577 = vmatprep.subr.mxu0 0.0
  %1578 = vmatpush2.msra.mxu0 0.0
  %1579 = vmatprep.subr.mxu0 0.0
  %1580 = vmatpush2.msra.mxu0 0.0
  %1581 = vmatprep.subr.mxu0 0.0
  %1582 = vmatpush2.msra.mxu0 0.0
  %1583 = vmatprep.subr.mxu0 0.0
  %1584 = vmatpush2.msra.mxu0 0.0
  %1585 = vmatprep.subr.mxu0 0.0
  %1586 = vmatpush2.msra.mxu0 0.0
  %1587 = vmatprep.subr.mxu0 0.0
  %1588 = vmatpush2.msra.mxu0 0.0
  %1589 = vmatprep.subr.mxu0 0.0
  %1590 = vmatpush2.msra.mxu0 0.0
  %1591 = vmatprep.subr.mxu0 0.0
  %1592 = vmatpush2.msra.mxu0 0.0
  %1593 = vmatprep.subr.mxu0 0.0
  %1594 = vmatpush2.msra.mxu0 0.0
  %1595 = vmatprep.mubr.f32.mxu0 0.0
  %1596 = vmatmul.mubr.f32.gmra.mxu0 %v1529
  %v1597 = vpop.f32.mrf.mxu0
  %v1598 = vadd.f32 %v252, %v1597
  %v1599 = vpop.f32.mrf.mxu0
  %1600 = vdwg.mxu0
  %v1601 = vxor.u32 %v1598, 2147483648
  %v1602 = vmul.f32 %v1601, 1.442695
  %v1603 = vpow.pop %v1602
  %v1604 = vadd.f32 %v1603, 1.0
  %v1605 = vrcp.pop %v1604
  %v1606 = vmul.f32 1.0, %v1605
  %v1607 = vtanh.pop %v1598
  %v1608 = vmul.f32 %v1606, %v1404
  %1610 = vrot.lane.b32.xlu0 %v1607, 64
  %v1611 = vpop.permute.xlu0 %1610
  %v1613 = vmul.f32 %v1606, %v1611
  %1615 = vrot.lane.b32.xlu0 %v1613, 32
  %v1616 = vpop.permute.xlu0 %1615
  %v1618 = vadd.f32 %v1608, %v1616
  %v1619 = vtanh.pop %v1618
  %1621 = vrot.lane.b32.xlu0 %v1619, 64
  %v1622 = vpop.permute.xlu0 %1621
  %v1624 = vmul.f32 %v1606, %v1622
  %v1625 = vrot.slane %v1516, 4
  %1626 = vrot.lane.b32.xlu0 %v1625, 32
  %v1627 = vpop.permute.xlu0 %1626
  %v1628 = vsel %vm144, %v1627, 0
  %1630 = vmatprep.subr.mxu0 0.0
  %1631 = vmatpush1.msra.mxu0 0.0
  %1632 = vmatprep.subr.mxu0 0.0
  %1633 = vmatpush1.msra.mxu0 0.0
  %1634 = vmatprep.subr.mxu0 0.0
  %1635 = vmatpush1.msra.mxu0 0.0
  %1636 = vmatprep.subr.mxu0 0.0
  %1637 = vmatpush1.msra.mxu0 0.0
  %1638 = vmatprep.subr.mxu0 0.0
  %1639 = vmatpush1.msra.mxu0 0.0
  %1640 = vmatprep.subr.mxu0 0.0
  %1641 = vmatpush1.msra.mxu0 0.0
  %1642 = vmatprep.subr.mxu0 0.0
  %1643 = vmatpush1.msra.mxu0 0.0
  %1644 = vmatprep.subr.mxu0 0.0
  %1645 = vmatpush1.msra.mxu0 0.0
  %1646 = vmatprep.subr.mxu0 0.0
  %1647 = vmatpush1.msra.mxu0 0.0
  %1648 = vmatprep.subr.mxu0 0.0
  %1649 = vmatpush1.msra.mxu0 0.0
  %1650 = vmatprep.subr.mxu0 0.0
  %1651 = vmatpush1.msra.mxu0 0.0
  %1652 = vmatprep.subr.mxu0 0.0
  %1653 = vmatpush1.msra.mxu0 0.0
  %1654 = vmatprep.subr.mxu0 0.0
  %1655 = vmatpush1.msra.mxu0 %v134
  %1656 = vmatprep.subr.mxu0 0.0
  %1657 = vmatpush1.msra.mxu0 %v133
  %1658 = vmatprep.subr.mxu0 0.0
  %1659 = vmatpush1.msra.mxu0 %v132
  %1660 = vmatprep.subr.mxu0 0.0
  %1661 = vmatpush1.msra.mxu0 %v131
  %1662 = vmatprep.subr.mxu0 0.0
  %1663 = vmatpush2.msra.mxu0 0.0
  %1664 = vmatprep.subr.mxu0 0.0
  %1665 = vmatpush2.msra.mxu0 0.0
  %1666 = vmatprep.subr.mxu0 0.0
  %1667 = vmatpush2.msra.mxu0 0.0
  %1668 = vmatprep.subr.mxu0 0.0
  %1669 = vmatpush2.msra.mxu0 0.0
  %1670 = vmatprep.subr.mxu0 0.0
  %1671 = vmatpush2.msra.mxu0 0.0
  %1672 = vmatprep.subr.mxu0 0.0
  %1673 = vmatpush2.msra.mxu0 0.0
  %1674 = vmatprep.subr.mxu0 0.0
  %1675 = vmatpush2.msra.mxu0 0.0
  %1676 = vmatprep.subr.mxu0 0.0
  %1677 = vmatpush2.msra.mxu0 0.0
  %1678 = vmatprep.subr.mxu0 0.0
  %1679 = vmatpush2.msra.mxu0 0.0
  %1680 = vmatprep.subr.mxu0 0.0
  %1681 = vmatpush2.msra.mxu0 0.0
  %1682 = vmatprep.subr.mxu0 0.0
  %1683 = vmatpush2.msra.mxu0 0.0
  %1684 = vmatprep.subr.mxu0 0.0
  %1685 = vmatpush2.msra.mxu0 0.0
  %1686 = vmatprep.subr.mxu0 0.0
  %1687 = vmatpush2.msra.mxu0 0.0
  %1688 = vmatprep.subr.mxu0 0.0
  %1689 = vmatpush2.msra.mxu0 0.0
  %1690 = vmatprep.subr.mxu0 0.0
  %1691 = vmatpush2.msra.mxu0 0.0
  %1692 = vmatprep.subr.mxu0 0.0
  %1693 = vmatpush2.msra.mxu0 0.0
  %1694 = vmatprep.mubr.f32.mxu0 0.0
  %1695 = vmatmul.mubr.f32.gmra.mxu0 %v1628
  %v1696 = vpop.f32.mrf.mxu0
  %v1697 = vadd.f32 0.0, %v1696
  %v1698 = vpop.f32.mrf.mxu0
  %1699 = vdwg.mxu0
  %v1701 = vrot.slane %v1697, 2
  %v1703 = vadd.f32 %v128, %v1701
  %v1704 = vxor.u32 %v1703, 2147483648
  %v1705 = vmul.f32 %v1704, 1.442695
  %v1706 = vpow.pop %v1705
  %v1707 = vadd.f32 %v1706, 1.0
  %v1708 = vrcp.pop %v1707
  %v1709 = vmul.f32 1.0, %v1708
  %v1710 = vtanh.pop %v1703
  %v1712 = vrot.slane %v1510, 6
  %v1714 = vmul.f32 %v1709, %v1712
  %1716 = vrot.lane.b32.xlu0 %v1710, 64
  %v1717 = vpop.permute.xlu0 %1716
  %v1719 = vmul.f32 %v1709, %v1717
  %1721 = vrot.lane.b32.xlu0 %v1719, 32
  %v1722 = vpop.permute.xlu0 %1721
  %v1724 = vadd.f32 %v1714, %v1722
  %v1725 = vtanh.pop %v1724
  %1727 = vrot.lane.b32.xlu0 %v1725, 64
  %v1728 = vpop.permute.xlu0 %1727
  %v1730 = vmul.f32 %v1709, %v1728
  %1732 = vrot.lane.b32.xlu0 %v1730, 32
  %v1733 = vpop.permute.xlu0 %1732
  %v1736 = vrot.slane %v1624, 2
  %1737 = vrot.lane.b32.xlu0 %v1736, 64
  %v1738 = vpop.permute.xlu0 %1737
  %v1740 = vsel %vm144, %v1733, %v1738
  %v1742 = vrot.slane %v1740, 6
  %v1743 = vsel %vm254, %v1742, 0
  %1745 = vmatprep.subr.mxu0 0.0
  %1746 = vmatpush1.msra.mxu0 0.0
  %1747 = vmatprep.subr.mxu0 0.0
  %1748 = vmatpush1.msra.mxu0 0.0
  %1749 = vmatprep.subr.mxu0 0.0
  %1750 = vmatpush1.msra.mxu0 0.0
  %1751 = vmatprep.subr.mxu0 0.0
  %1752 = vmatpush1.msra.mxu0 0.0
  %1753 = vmatprep.subr.mxu0 0.0
  %1754 = vmatpush1.msra.mxu0 0.0
  %1755 = vmatprep.subr.mxu0 0.0
  %1756 = vmatpush1.msra.mxu0 0.0
  %1757 = vmatprep.subr.mxu0 0.0
  %1758 = vmatpush1.msra.mxu0 0.0
  %1759 = vmatprep.subr.mxu0 0.0
  %1760 = vmatpush1.msra.mxu0 0.0
  %1761 = vmatprep.subr.mxu0 0.0
  %1762 = vmatpush1.msra.mxu0 %v142
  %1763 = vmatprep.subr.mxu0 0.0
  %1764 = vmatpush1.msra.mxu0 %v141
  %1765 = vmatprep.subr.mxu0 0.0
  %1766 = vmatpush1.msra.mxu0 %v140
  %1767 = vmatprep.subr.mxu0 0.0
  %1768 = vmatpush1.msra.mxu0 %v139
  %1769 = vmatprep.subr.mxu0 0.0
  %1770 = vmatpush1.msra.mxu0 %v138
  %1771 = vmatprep.subr.mxu0 0.0
  %1772 = vmatpush1.msra.mxu0 %v137
  %1773 = vmatprep.subr.mxu0 0.0
  %1774 = vmatpush1.msra.mxu0 %v136
  %1775 = vmatprep.subr.mxu0 0.0
  %1776 = vmatpush1.msra.mxu0 %v135
  %1777 = vmatprep.subr.mxu0 0.0
  %1778 = vmatpush2.msra.mxu0 0.0
  %1779 = vmatprep.subr.mxu0 0.0
  %1780 = vmatpush2.msra.mxu0 0.0
  %1781 = vmatprep.subr.mxu0 0.0
  %1782 = vmatpush2.msra.mxu0 0.0
  %1783 = vmatprep.subr.mxu0 0.0
  %1784 = vmatpush2.msra.mxu0 0.0
  %1785 = vmatprep.subr.mxu0 0.0
  %1786 = vmatpush2.msra.mxu0 0.0
  %1787 = vmatprep.subr.mxu0 0.0
  %1788 = vmatpush2.msra.mxu0 0.0
  %1789 = vmatprep.subr.mxu0 0.0
  %1790 = vmatpush2.msra.mxu0 0.0
  %1791 = vmatprep.subr.mxu0 0.0
  %1792 = vmatpush2.msra.mxu0 0.0
  %1793 = vmatprep.subr.mxu0 0.0
  %1794 = vmatpush2.msra.mxu0 0.0
  %1795 = vmatprep.subr.mxu0 0.0
  %1796 = vmatpush2.msra.mxu0 0.0
  %1797 = vmatprep.subr.mxu0 0.0
  %1798 = vmatpush2.msra.mxu0 0.0
  %1799 = vmatprep.subr.mxu0 0.0
  %1800 = vmatpush2.msra.mxu0 0.0
  %1801 = vmatprep.subr.mxu0 0.0
  %1802 = vmatpush2.msra.mxu0 0.0
  %1803 = vmatprep.subr.mxu0 0.0
  %1804 = vmatpush2.msra.mxu0 0.0
  %1805 = vmatprep.subr.mxu0 0.0
  %1806 = vmatpush2.msra.mxu0 0.0
  %1807 = vmatprep.subr.mxu0 0.0
  %1808 = vmatpush2.msra.mxu0 0.0
  %1809 = vmatprep.mubr.f32.mxu0 0.0
  %1810 = vmatmul.mubr.f32.gmra.mxu0 %v1743
  %v1811 = vpop.f32.mrf.mxu0
  %v1812 = vadd.f32 %v252, %v1811
  %v1813 = vpop.f32.mrf.mxu0
  %1814 = vdwg.mxu0
  %v1815 = vxor.u32 %v1812, 2147483648
  %v1816 = vmul.f32 %v1815, 1.442695
  %v1817 = vpow.pop %v1816
  %v1818 = vadd.f32 %v1817, 1.0
  %v1819 = vrcp.pop %v1818
  %v1820 = vmul.f32 1.0, %v1819
  %v1821 = vtanh.pop %v1812
  %v1822 = vmul.f32 %v1820, %v1618
  %1824 = vrot.lane.b32.xlu0 %v1821, 64
  %v1825 = vpop.permute.xlu0 %1824
  %v1827 = vmul.f32 %v1820, %v1825
  %1829 = vrot.lane.b32.xlu0 %v1827, 32
  %v1830 = vpop.permute.xlu0 %1829
  %v1832 = vadd.f32 %v1822, %v1830
  %v1833 = vtanh.pop %v1832
  %1835 = vrot.lane.b32.xlu0 %v1833, 64
  %v1836 = vpop.permute.xlu0 %1835
  %v1838 = vmul.f32 %v1820, %v1836
  %v1839 = vld [vmem:[%s6] sm:$0xff]
  %v1840 = vld [vmem:[%s6 + $0x8] sm:$0xff]
  %v1841 = vld [vmem:[%s6 + $0x10] sm:$0xff]
  %v1842 = vld [vmem:[%s6 + $0x18] sm:$0xff]
  %v1843 = vld [vmem:[%s7] sm:$0x1]
  %v1845 = vlaneseq
  %v1846 = vshrl.u32 %v1845, 7
  %v1847 = vsub.s32 0, %v1846
  %v1848 = vrot.slane %v1843, %v1847
  %1851 = vrot.lane.b32.xlu0 %v1838, 32
  %v1852 = vpop.permute.xlu0 %1851
  %v1853 = vsel %vm144, %v1852, 0
  %1855 = vmatprep.subr.mxu0 0.0
  %1856 = vmatpush1.msra.mxu0 0.0
  %1857 = vmatprep.subr.mxu0 0.0
  %1858 = vmatpush1.msra.mxu0 0.0
  %1859 = vmatprep.subr.mxu0 0.0
  %1860 = vmatpush1.msra.mxu0 0.0
  %1861 = vmatprep.subr.mxu0 0.0
  %1862 = vmatpush1.msra.mxu0 0.0
  %1863 = vmatprep.subr.mxu0 0.0
  %1864 = vmatpush1.msra.mxu0 0.0
  %1865 = vmatprep.subr.mxu0 0.0
  %1866 = vmatpush1.msra.mxu0 0.0
  %1867 = vmatprep.subr.mxu0 0.0
  %1868 = vmatpush1.msra.mxu0 0.0
  %1869 = vmatprep.subr.mxu0 0.0
  %1870 = vmatpush1.msra.mxu0 0.0
  %1871 = vmatprep.subr.mxu0 0.0
  %1872 = vmatpush1.msra.mxu0 0.0
  %1873 = vmatprep.subr.mxu0 0.0
  %1874 = vmatpush1.msra.mxu0 0.0
  %1875 = vmatprep.subr.mxu0 0.0
  %1876 = vmatpush1.msra.mxu0 0.0
  %1877 = vmatprep.subr.mxu0 0.0
  %1878 = vmatpush1.msra.mxu0 0.0
  %1879 = vmatprep.subr.mxu0 0.0
  %1880 = vmatpush1.msra.mxu0 %v1842
  %1881 = vmatprep.subr.mxu0 0.0
  %1882 = vmatpush1.msra.mxu0 %v1841
  %1883 = vmatprep.subr.mxu0 0.0
  %1884 = vmatpush1.msra.mxu0 %v1840
  %1885 = vmatprep.subr.mxu0 0.0
  %1886 = vmatpush1.msra.mxu0 %v1839
  %1887 = vmatprep.subr.mxu0 0.0
  %1888 = vmatpush2.msra.mxu0 0.0
  %1889 = vmatprep.subr.mxu0 0.0
  %1890 = vmatpush2.msra.mxu0 0.0
  %1891 = vmatprep.subr.mxu0 0.0
  %1892 = vmatpush2.msra.mxu0 0.0
  %1893 = vmatprep.subr.mxu0 0.0
  %1894 = vmatpush2.msra.mxu0 0.0
  %1895 = vmatprep.subr.mxu0 0.0
  %1896 = vmatpush2.msra.mxu0 0.0
  %1897 = vmatprep.subr.mxu0 0.0
  %1898 = vmatpush2.msra.mxu0 0.0
  %1899 = vmatprep.subr.mxu0 0.0
  %1900 = vmatpush2.msra.mxu0 0.0
  %1901 = vmatprep.subr.mxu0 0.0
  %1902 = vmatpush2.msra.mxu0 0.0
  %1903 = vmatprep.subr.mxu0 0.0
  %1904 = vmatpush2.msra.mxu0 0.0
  %1905 = vmatprep.subr.mxu0 0.0
  %1906 = vmatpush2.msra.mxu0 0.0
  %1907 = vmatprep.subr.mxu0 0.0
  %1908 = vmatpush2.msra.mxu0 0.0
  %1909 = vmatprep.subr.mxu0 0.0
  %1910 = vmatpush2.msra.mxu0 0.0
  %1911 = vmatprep.subr.mxu0 0.0
  %1912 = vmatpush2.msra.mxu0 0.0
  %1913 = vmatprep.subr.mxu0 0.0
  %1914 = vmatpush2.msra.mxu0 0.0
  %1915 = vmatprep.subr.mxu0 0.0
  %1916 = vmatpush2.msra.mxu0 0.0
  %1917 = vmatprep.subr.mxu0 0.0
  %1918 = vmatpush2.msra.mxu0 0.0
  %1919 = vmatprep.mubr.f32.mxu0 0.0
  %1920 = vmatmul.mubr.f32.gmra.mxu0 %v1853
  %v1921 = vpop.f32.mrf.mxu0
  %v1922 = vadd.f32 %v1848, %v1921
  %v1923 = vpop.f32.mrf.mxu0
  %1924 = vdwg.mxu0
  %vm1925 = vcmask 17408
  %1926 = vst.msk [vmem:[%s8] sm:$0x3] %vm1925, %v1922
  %vm1927 = vcmask 261126
  %1928 = vst.msk [vmem:[%s9 - $0x6] sm:$0xc0] %vm1927, %v1733
  %1930 = vrot.lane.b32.xlu0 %v1724, 96
  %v1931 = vpop.permute.xlu0 %1930
  %1933 = vst.msk [vmem:[%s10 - $0x6] sm:$0xc0] %vm1927, %v1931
  %vm1935 = vcmask 254976
  %1936 = vst.msk [vmem:[%s11] sm:$0x3] %vm1935, %v1852
  %1938 = vrot.lane.b32.xlu0 %v1832, 96
  %v1939 = vpop.permute.xlu0 %1938
  %1941 = vst.msk [vmem:[%s12] sm:$0x3] %vm1935, %v1939
  // Predicated region
  $region34: #{deepar_forward.2} parent=0 // pred_check
    _
  $region35: #{deepar_forward.2} parent=0 // pred_check_branch
    %1943 = sbr.rel (0) target = $region37
  $region36: #{deepar_forward.2} parent=0 // pred_region
    _
  $region37: #{deepar_forward.2} parent=0 // pred_fallthru
    _
  // Predicated region
  $region38: #{deepar_forward.2} parent=0 // pred_check
    _
  $region39: #{deepar_forward.2} parent=0 // pred_check_branch
    %1945 = sbr.rel (0) target = $region41
  $region40: #{deepar_forward.2} parent=0 // pred_region
    _
  $region41: #{deepar_forward.2} parent=0 // pred_fallthru
    _
  // Predicated region
  $region42: #{deepar_forward.2} parent=0 // pred_check
    _
  $region43: #{deepar_forward.2} parent=0 // pred_check_branch
    %1947 = sbr.rel (0) target = $region45
  $region44: #{deepar_forward.2} parent=0 // pred_region
    _
  $region45: #{deepar_forward.2} parent=0 // pred_fallthru
    _
  // Predicated region
  $region46: #{deepar_forward.2} parent=0 // pred_check
    _
  $region47: #{deepar_forward.2} parent=0 // pred_check_branch
    %1949 = sbr.rel (0) target = $region49
  $region48: #{deepar_forward.2} parent=0 // pred_region
    _
  $region49: #{deepar_forward.2} parent=0 // pred_fallthru
    _
  // Predicated region
  $region50: #{deepar_forward.2} parent=0 // pred_check
    _
  $region51: #{deepar_forward.2} parent=0 // pred_check_branch
    %1951 = sbr.rel (0) target = $region53
  $region52: #{deepar_forward.2} parent=0 // pred_region
    _
  $region53: #{deepar_forward.2} parent=0 // pred_fallthru
    _
  // Predicated region
  $region54: #{deepar_forward.2} parent=0 // pred_check
    _
  $region55: #{deepar_forward.2} parent=0 // pred_check_branch
    %1953 = sbr.rel (0) target = $region57
  $region56: #{deepar_forward.2} parent=0 // pred_region
    _
  $region57: #{deepar_forward.2} parent=0 // pred_fallthru
    _
  // Predicated region
  $region58: #{deepar_forward.2} parent=0 // pred_check
    _
  $region59: #{deepar_forward.2} parent=0 // pred_check_branch
    %1955 = sbr.rel (0) target = $region61
  $region60: #{deepar_forward.2} parent=0 // pred_region
    _
  $region61: #{deepar_forward.2} parent=0 // pred_fallthru
    _
  // Predicated region
  $region62: #{deepar_forward.2} parent=0 // pred_check
    _
  $region63: #{deepar_forward.2} parent=0 // pred_check_branch
    %1957 = sbr.rel (0) target = $region65
  $region64: #{deepar_forward.2} parent=0 // pred_region
    _
  $region65: #{deepar_forward.2} parent=0 // pred_fallthru
    _
  // Predicated region
  $region66: #{deepar_forward.2} parent=0 // pred_check
    _
  $region67: #{deepar_forward.2} parent=0 // pred_check_branch
    %1959 = sbr.rel (0) target = $region69
  $region68: #{deepar_forward.2} parent=0 // pred_region
    _
  $region69: #{deepar_forward.2} parent=0 // pred_fallthru
    _
  // Predicated region
  $region70: #{deepar_forward.2} parent=0 // pred_check
    _
  $region71: #{deepar_forward.2} parent=0 // pred_check_branch
    %1961 = sbr.rel (0) target = $region73
  $region72: #{deepar_forward.2} parent=0 // pred_region
    _
  $region73: #{deepar_forward.2} parent=0 // pred_fallthru
    _

</llo_original>
